<compile_context>
chip_gen: v7x
topology: tpu7x:2x2x1
jax: 0.10.0
libtpu: 0.0.40
codegen_flags: <defaults>
</compile_context>

<pallas_src>
import functools
import math

import jax
import jax.numpy as jnp
from jax import lax
from jax.experimental import pallas as pl
from jax.experimental.pallas import tpu as pltpu

MM_DTYPE = jnp.bfloat16      # MXU operand dtype (accumulation is always f32)
W_DTYPE = jnp.bfloat16       # weight storage dtype in HBM
ACT_DTYPE = jnp.bfloat16     # inter-kernel activation dtype in HBM
NEG_INF = -1e9
LN_EPS = 1e-5


def _mosaic_params(semantics, blocks):
    """CompilerParams with a vmem limit sized to the actual VMEM blocks.

    blocks: list of (shape, dtype) pairs resident per grid step. Double-buffer
    factor of 2 + 4 MiB margin; clamped to [32 MiB, 64 MiB] so it is >= the
    default scoped limit everywhere and <= v7x physical VMEM.
    """
    need = 2 * sum(math.prod(s) * jnp.dtype(d).itemsize for s, d in blocks)
    need += 4 << 20
    limit = int(min(max(need, 32 << 20), 64 << 20))
    return pltpu.CompilerParams(dimension_semantics=semantics,
                                vmem_limit_bytes=limit)


def _layernorm(y, g, b, eps):
    mu = jnp.mean(y, axis=-1, keepdims=True)
    var = jnp.mean((y - mu) ** 2, axis=-1, keepdims=True)
    return (y - mu) * lax.rsqrt(var + eps) * g + b


# ----------------------------- Pallas kernels ------------------------------


def _attention_core(q, k, v, w_o, length, *, n_heads, causal, scale):
    """Multi-head attention on one batch element + fused Wo projection.

    q, k, v: (Sq, D) / (Sk, D) f32 (post projection+bias); w_o: (D, D) bf16.
    Returns (Sq, D) f32 = concat_heads(attn) @ Wo, computed as a per-head
    accumulation so the concat never materializes.
    Mask is built from `length`:
      causal=False : key-padding (col < length)                 [src mask]
      causal=True  : query-padding & causal ((row<length)&(col<=row)) [trg mask]
    """
    Sq, D = q.shape
    Sk = k.shape[0]
    Dh = D // n_heads

    row = lax.broadcasted_iota(jnp.int32, (Sq, Sk), 0)
    col = lax.broadcasted_iota(jnp.int32, (Sq, Sk), 1)
    if causal:
        valid = (row < length) & (col <= row)
    else:
        valid = col < length
    bias = jnp.where(valid, 0.0, NEG_INF).astype(jnp.float32)

    acc = jnp.zeros((Sq, D), jnp.float32)
    for h in range(n_heads):           # static unroll; no HBM transposes
        sl = slice(h * Dh, (h + 1) * Dh)
        qh = q[:, sl].astype(MM_DTYPE)
        kh = k[:, sl].astype(MM_DTYPE)
        vh = v[:, sl].astype(MM_DTYPE)
        # scores: contract over Dh (both last dims) -> K is never transposed.
        s = lax.dot_general(qh, kh, (((1,), (1,)), ((), ())),
                            preferred_element_type=jnp.float32)
        s = s * scale + bias
        s = s - jnp.max(s, axis=-1, keepdims=True)
        p = jnp.exp(s)
        p = p * pl.reciprocal(jnp.sum(p, axis=-1, keepdims=True), approx=False)
        oh = lax.dot_general(p.astype(MM_DTYPE), vh, (((1,), (0,)), ((), ())),
                             preferred_element_type=jnp.float32)
        # Accumulate this head's Wo contribution (rows h*Dh:(h+1)*Dh of Wo).
        acc = acc + lax.dot_general(oh.astype(MM_DTYPE), w_o[sl, :],
                                    (((1,), (0,)), ((), ())),
                                    preferred_element_type=jnp.float32)
    return acc
    # TODO(synk): for many small heads, replace the static head loop with a
    # batched dot_general over a (H, Sq, Dh) view to avoid sub-128-lane
    # slices; for long sequences (esp. v7x 64 MiB VMEM) add a q-tile grid
    # axis and a flash-style KV-tiled online-softmax loop.


def _self_attn_ln_kernel(lens_ref, x_ref, wqkv_ref, bqkv_ref, wo_ref, bo_ref,
                         g_ref, be_ref, o_ref, *, n_heads, causal, scale, eps):
    """Fused: QKV proj -> MHA -> Wo proj -> +residual -> LayerNorm."""
    n = pl.program_id(0)
    length = lens_ref[n]
    x = x_ref[0]                                   # (S, D) bf16
    D = x.shape[1]

    qkv = jnp.dot(x, wqkv_ref[...], preferred_element_type=jnp.float32)
    qkv = qkv + bqkv_ref[...]                      # (S, 3D) f32
    q = qkv[:, :D]
    k = qkv[:, D:2 * D]
    v = qkv[:, 2 * D:]

    attn = _attention_core(q, k, v, wo_ref[...], length,
                           n_heads=n_heads, causal=causal, scale=scale)
    y = attn + bo_ref[...] + x.astype(jnp.float32)     # Wo bias + residual
    o_ref[0] = _layernorm(y, g_ref[...], be_ref[...], eps).astype(o_ref.dtype)


def _cross_attn_ln_kernel(lens_ref, xq_ref, xkv_ref, wq_ref, bq_ref, wkv_ref,
                          bkv_ref, wo_ref, bo_ref, g_ref, be_ref, o_ref,
                          *, n_heads, scale, eps):
    """Fused: Q proj (decoder) + KV proj (encoder) -> MHA -> Wo -> +res -> LN."""
    n = pl.program_id(0)
    length = lens_ref[n]
    xq = xq_ref[0]                                 # (Sq, D) bf16
    xkv = xkv_ref[0]                               # (Sk, D) bf16
    D = xq.shape[1]

    q = jnp.dot(xq, wq_ref[...], preferred_element_type=jnp.float32) + bq_ref[...]
    kv = jnp.dot(xkv, wkv_ref[...], preferred_element_type=jnp.float32) + bkv_ref[...]
    k = kv[:, :D]
    v = kv[:, D:]

    attn = _attention_core(q, k, v, wo_ref[...], length,
                           n_heads=n_heads, causal=False, scale=scale)
    y = attn + bo_ref[...] + xq.astype(jnp.float32)
    o_ref[0] = _layernorm(y, g_ref[...], be_ref[...], eps).astype(o_ref.dtype)


def _ffn_res_ln_kernel(x_ref, w1_ref, b1_ref, w2_ref, b2_ref, g_ref, be_ref,
                       o_ref, *, eps):
    """Fused FFN: h = relu(x@w1+b1); y = h@w2 + b2 + x; out = layernorm(y)."""
    x = x_ref[...]                                 # (tm, D) bf16
    h = jnp.dot(x, w1_ref[...], preferred_element_type=jnp.float32) + b1_ref[...]
    h = jnp.maximum(h, 0.0)
    y = jnp.dot(h.astype(MM_DTYPE), w2_ref[...],
                preferred_element_type=jnp.float32) + b2_ref[...]
    y = y + x.astype(jnp.float32)
    o_ref[...] = _layernorm(y, g_ref[...], be_ref[...], eps).astype(o_ref.dtype)
    # TODO(synk): for large d_ff on v7x (64 MiB VMEM), tile over d_ff with an
    # accumulator instead of holding (D,F) and (F,D) whole in VMEM.


def _logits_kernel(x_ref, w_ref, b_ref, o_ref):
    o_ref[...] = (jnp.dot(x_ref[...], w_ref[...],
                          preferred_element_type=jnp.float32) + b_ref[...])


# --------------------------- pallas_call wrappers ---------------------------


def fused_self_attention(x, lens, attn_p, gamma, beta, n_heads, causal):
    """x: (N, S, D) bf16 -> (N, S, D) bf16; full attention sub-layer fused."""
    N, S, D = x.shape
    Dh = D // n_heads
    scale = 1.0 / math.sqrt(Dh)
    w_qkv, b_qkv = attn_p["w_qkv"], attn_p["b_qkv"].reshape(1, 3 * D)
    w_o, b_o = attn_p["w_o"], attn_p["b_o"].reshape(1, D)
    g, be = gamma.reshape(1, D), beta.reshape(1, D)
    lens = lens.astype(jnp.int32)

    blocks = [((1, S, D), ACT_DTYPE), ((D, 3 * D), W_DTYPE),
              ((1, 3 * D), jnp.float32), ((D, D), W_DTYPE),
              ((1, D), jnp.float32), ((1, D), jnp.float32),
              ((1, D), jnp.float32), ((1, S, D), ACT_DTYPE),
              ((S, 3 * D), jnp.float32), ((S, S), jnp.float32)]

    grid_spec = pltpu.PrefetchScalarGridSpec(
        num_scalar_prefetch=1,
        grid=(N,),
        in_specs=[
            pl.BlockSpec((1, S, D), lambda n, l: (n, 0, 0)),
            pl.BlockSpec((D, 3 * D), lambda n, l: (0, 0)),
            pl.BlockSpec((1, 3 * D), lambda n, l: (0, 0)),
            pl.BlockSpec((D, D), lambda n, l: (0, 0)),
            pl.BlockSpec((1, D), lambda n, l: (0, 0)),
            pl.BlockSpec((1, D), lambda n, l: (0, 0)),
            pl.BlockSpec((1, D), lambda n, l: (0, 0)),
        ],
        out_specs=pl.BlockSpec((1, S, D), lambda n, l: (n, 0, 0)),
    )
    return pl.pallas_call(
        functools.partial(_self_attn_ln_kernel, n_heads=n_heads, causal=causal,
                          scale=scale, eps=LN_EPS),
        out_shape=jax.ShapeDtypeStruct((N, S, D), ACT_DTYPE),
        grid_spec=grid_spec,
        compiler_params=_mosaic_params(("parallel",), blocks),
    )(lens, x, w_qkv, b_qkv, w_o, b_o, g, be)


def fused_cross_attention(x_q, x_kv, src_lens, attn_p, gamma, beta, n_heads):
    """x_q: (N, Sq, D) decoder states, x_kv: (N, Sk, D) encoder output."""
    N, Sq, D = x_q.shape
    Sk = x_kv.shape[1]
    Dh = D // n_heads
    scale = 1.0 / math.sqrt(Dh)
    w_q, b_q = attn_p["w_q"], attn_p["b_q"].reshape(1, D)
    w_kv, b_kv = attn_p["w_kv"], attn_p["b_kv"].reshape(1, 2 * D)
    w_o, b_o = attn_p["w_o"], attn_p["b_o"].reshape(1, D)
    g, be = gamma.reshape(1, D), beta.reshape(1, D)
    src_lens = src_lens.astype(jnp.int32)

    blocks = [((1, Sq, D), ACT_DTYPE), ((1, Sk, D), ACT_DTYPE),
              ((D, D), W_DTYPE), ((1, D), jnp.float32),
              ((D, 2 * D), W_DTYPE), ((1, 2 * D), jnp.float32),
              ((D, D), W_DTYPE), ((1, D), jnp.float32),
              ((1, D), jnp.float32), ((1, D), jnp.float32),
              ((1, Sq, D), ACT_DTYPE), ((Sk, 2 * D), jnp.float32),
              ((Sq, Sk), jnp.float32)]

    grid_spec = pltpu.PrefetchScalarGridSpec(
        num_scalar_prefetch=1,
        grid=(N,),
        in_specs=[
            pl.BlockSpec((1, Sq, D), lambda n, l: (n, 0, 0)),
            pl.BlockSpec((1, Sk, D), lambda n, l: (n, 0, 0)),
            pl.BlockSpec((D, D), lambda n, l: (0, 0)),
            pl.BlockSpec((1, D), lambda n, l: (0, 0)),
            pl.BlockSpec((D, 2 * D), lambda n, l: (0, 0)),
            pl.BlockSpec((1, 2 * D), lambda n, l: (0, 0)),
            pl.BlockSpec((D, D), lambda n, l: (0, 0)),
            pl.BlockSpec((1, D), lambda n, l: (0, 0)),
            pl.BlockSpec((1, D), lambda n, l: (0, 0)),
            pl.BlockSpec((1, D), lambda n, l: (0, 0)),
        ],
        out_specs=pl.BlockSpec((1, Sq, D), lambda n, l: (n, 0, 0)),
    )
    return pl.pallas_call(
        functools.partial(_cross_attn_ln_kernel, n_heads=n_heads, scale=scale,
                          eps=LN_EPS),
        out_shape=jax.ShapeDtypeStruct((N, Sq, D), ACT_DTYPE),
        grid_spec=grid_spec,
        compiler_params=_mosaic_params(("parallel",), blocks),
    )(src_lens, x_q, x_kv, w_q, b_q, w_kv, b_kv, w_o, b_o, g, be)


def ffn_residual_layernorm(x, w1, b1, w2, b2, gamma, beta, tm=256):
    """Fused FFN + residual + LN over rows of x: (M, D) bf16 -> (M, D) bf16."""
    M, D = x.shape
    F = w1.shape[1]
    tm = min(tm, M)
    grid = (pl.cdiv(M, tm),)
    blocks = [((tm, D), ACT_DTYPE), ((D, F), W_DTYPE), ((1, F), jnp.float32),
              ((F, D), W_DTYPE), ((1, D), jnp.float32), ((1, D), jnp.float32),
              ((1, D), jnp.float32), ((tm, D), ACT_DTYPE),
              ((tm, F), jnp.float32)]
    return pl.pallas_call(
        functools.partial(_ffn_res_ln_kernel, eps=LN_EPS),
        out_shape=jax.ShapeDtypeStruct((M, D), ACT_DTYPE),
        grid=grid,
        in_specs=[
            pl.BlockSpec((tm, D), lambda i: (i, 0)),
            pl.BlockSpec((D, F), lambda i: (0, 0)),
            pl.BlockSpec((1, F), lambda i: (0, 0)),
            pl.BlockSpec((F, D), lambda i: (0, 0)),
            pl.BlockSpec((1, D), lambda i: (0, 0)),
            pl.BlockSpec((1, D), lambda i: (0, 0)),
            pl.BlockSpec((1, D), lambda i: (0, 0)),
        ],
        out_specs=pl.BlockSpec((tm, D), lambda i: (i, 0)),
        compiler_params=_mosaic_params(("parallel",), blocks),
    )(x, w1, b1.reshape(1, F), w2, b2.reshape(1, D),
      gamma.reshape(1, D), beta.reshape(1, D))


def linear_logits(x, w, b, tm=512, tn=512):
    """Vocab projection: x (M, K) bf16 @ w (K, Npad) bf16 + b -> (M, Npad) f32.

    Large M tile so the (padded, lane-dense) vocab weight is streamed from HBM
    as few times as possible; logits kept f32 (numerically sensitive).
    """
    M, K = x.shape
    Npad = w.shape[1]
    tm = min(tm, M)
    tn = min(tn, Npad)
    grid = (pl.cdiv(M, tm), pl.cdiv(Npad, tn))
    blocks = [((tm, K), ACT_DTYPE), ((K, tn), W_DTYPE), ((1, tn), jnp.float32),
              ((tm, tn), jnp.float32)]
    return pl.pallas_call(
        _logits_kernel,
        out_shape=jax.ShapeDtypeStruct((M, Npad), jnp.float32),
        grid=grid,
        in_specs=[
            pl.BlockSpec((tm, K), lambda i, j: (i, 0)),
            pl.BlockSpec((K, tn), lambda i, j: (0, j)),
            pl.BlockSpec((1, tn), lambda i, j: (0, j)),
        ],
        out_specs=pl.BlockSpec((tm, tn), lambda i, j: (i, j)),
        compiler_params=_mosaic_params(("parallel", "parallel"), blocks),
    )(x, w, b.reshape(1, Npad))


# --------------------------- model building blocks --------------------------


def embed(tok_emb, pos_emb, ids):
    D = tok_emb.shape[1]
    S = ids.shape[1]
    x = tok_emb[ids] * math.sqrt(D) + pos_emb[:S][None, :, :]
    return x.astype(ACT_DTYPE)


def encoder_forward(params, src, src_lens):
    N, S = src.shape
    D = params["tok_emb"].shape[1]
    H = params["n_heads"]
    x = embed(params["tok_emb"], params["pos_emb"], src)
    for lp in params["layers"]:
        x = fused_self_attention(x, src_lens, lp["attn"],
                                 lp["ln1_g"], lp["ln1_b"], H, causal=False)
        x = ffn_residual_layernorm(
            x.reshape(N * S, D), lp["ff_w1"], lp["ff_b1"],
            lp["ff_w2"], lp["ff_b2"],
            lp["ln2_g"], lp["ln2_b"]).reshape(N, S, D)
    return x


def decoder_forward(params, trg, enc_src, trg_lens, src_lens):
    N, T = trg.shape
    D = params["tok_emb"].shape[1]
    H = params["n_heads"]
    x = embed(params["tok_emb"], params["pos_emb"], trg)
    for lp in params["layers"]:
        x = fused_self_attention(x, trg_lens, lp["self_attn"],
                                 lp["ln1_g"], lp["ln1_b"], H, causal=True)
        x = fused_cross_attention(x, enc_src, src_lens, lp["cross_attn"],
                                  lp["ln2_g"], lp["ln2_b"], H)
        x = ffn_residual_layernorm(
            x.reshape(N * T, D), lp["ff_w1"], lp["ff_b1"],
            lp["ff_w2"], lp["ff_b2"],
            lp["ln3_g"], lp["ln3_b"]).reshape(N, T, D)
    logits = linear_logits(x.reshape(N * T, D), params["out_w"], params["out_b"])
    logits = logits[:, :params["vocab"]]
    return logits.reshape(N, T, params["vocab"])


def transformer_forward(enc_params, dec_params, src, src_lens, trg, trg_lens):
    """Teacher-forcing forward: logits (N, T, trg_vocab).

    The source/target padding+causal masks of the reference model are built
    in-kernel from src_lens / trg_lens (scalar prefetch), never materialized.
    """
    encoded_src = encoder_forward(enc_params, src, src_lens)
    return decoder_forward(dec_params, trg, encoded_src, trg_lens, src_lens)

# TODO(synk): greedy-search / beam-search decoding (data-dependent Python
# while loops over cur_len) are control-flow driven and are not lowered to
# Pallas; only the teacher-forcing forward path is implemented here.


# ------------------------- deterministic param init -------------------------


def _init_linear(key, din, dout):
    kw, kb = jax.random.split(key)
    lim = 1.0 / math.sqrt(din)
    w = jax.random.uniform(kw, (din, dout), jnp.float32, -lim, lim)
    b = jax.random.uniform(kb, (dout,), jnp.float32, -lim, lim)
    return w, b


def _init_self_attn(key, d_model):
    kq, kk, kv, ko = jax.random.split(key, 4)
    wq, bq = _init_linear(kq, d_model, d_model)
    wk, bk = _init_linear(kk, d_model, d_model)
    wv, bv = _init_linear(kv, d_model, d_model)
    wo, bo = _init_linear(ko, d_model, d_model)
    return {"w_qkv": jnp.concatenate([wq, wk, wv], axis=1).astype(W_DTYPE),
            "b_qkv": jnp.concatenate([bq, bk, bv]),
            "w_o": wo.astype(W_DTYPE), "b_o": bo}


def _init_cross_attn(key, d_model):
    kq, kk, kv, ko = jax.random.split(key, 4)
    wq, bq = _init_linear(kq, d_model, d_model)
    wk, bk = _init_linear(kk, d_model, d_model)
    wv, bv = _init_linear(kv, d_model, d_model)
    wo, bo = _init_linear(ko, d_model, d_model)
    return {"w_q": wq.astype(W_DTYPE), "b_q": bq,
            "w_kv": jnp.concatenate([wk, wv], axis=1).astype(W_DTYPE),
            "b_kv": jnp.concatenate([bk, bv]),
            "w_o": wo.astype(W_DTYPE), "b_o": bo}


def init_encoder(key, vocab, max_len, d_model, n_heads, d_ff, n_layers):
    keys = jax.random.split(key, 2 + n_layers)
    params = {
        "tok_emb": jax.random.normal(keys[0], (vocab, d_model), jnp.float32) * 0.02,
        "pos_emb": jax.random.normal(keys[1], (max_len, d_model), jnp.float32) * 0.02,
        "n_heads": n_heads,
        "layers": [],
    }
    for li in range(n_layers):
        k0, k1, k2 = jax.random.split(keys[2 + li], 3)
        w1, b1 = _init_linear(k1, d_model, d_ff)
        w2, b2 = _init_linear(k2, d_ff, d_model)
        params["layers"].append({
            "attn": _init_self_attn(k0, d_model),
            "ff_w1": w1.astype(W_DTYPE), "ff_b1": b1,
            "ff_w2": w2.astype(W_DTYPE), "ff_b2": b2,
            "ln1_g": jnp.ones((d_model,), jnp.float32),
            "ln1_b": jnp.zeros((d_model,), jnp.float32),
            "ln2_g": jnp.ones((d_model,), jnp.float32),
            "ln2_b": jnp.zeros((d_model,), jnp.float32),
        })
    return params


def init_decoder(key, vocab, max_len, d_model, n_heads, d_ff, n_layers):
    keys = jax.random.split(key, 3 + n_layers)
    out_w, out_b = _init_linear(keys[2], d_model, vocab)
    vocab_pad = ((vocab + 127) // 128) * 128          # lane-dense vocab dim
    out_w = jnp.pad(out_w, ((0, 0), (0, vocab_pad - vocab)))
    out_b = jnp.pad(out_b, ((0, vocab_pad - vocab),))
    params = {
        "tok_emb": jax.random.normal(keys[0], (vocab, d_model), jnp.float32) * 0.02,
        "pos_emb": jax.random.normal(keys[1], (max_len, d_model), jnp.float32) * 0.02,
        "out_w": out_w.astype(W_DTYPE), "out_b": out_b, "vocab": vocab,
        "n_heads": n_heads,
        "layers": [],
    }
    for li in range(n_layers):
        k0, k1, k2, k3 = jax.random.split(keys[3 + li], 4)
        w1, b1 = _init_linear(k2, d_model, d_ff)
        w2, b2 = _init_linear(k3, d_ff, d_model)
        params["layers"].append({
            "self_attn": _init_self_attn(k0, d_model),
            "cross_attn": _init_cross_attn(k1, d_model),
            "ff_w1": w1.astype(W_DTYPE), "ff_b1": b1,
            "ff_w2": w2.astype(W_DTYPE), "ff_b2": b2,
            "ln1_g": jnp.ones((d_model,), jnp.float32),
            "ln1_b": jnp.zeros((d_model,), jnp.float32),
            "ln2_g": jnp.ones((d_model,), jnp.float32),
            "ln2_b": jnp.zeros((d_model,), jnp.float32),
            "ln3_g": jnp.ones((d_model,), jnp.float32),
            "ln3_b": jnp.zeros((d_model,), jnp.float32),
        })
    return params


# ----------------------------------- main ------------------------------------

if __name__ == "__main__":
    # Small but lane-filling shapes (D = 128 lanes, Dh = 64) so the kernels
    # exercise real vreg/MXU tiles instead of pure per-call overhead.
    N, S, T = 2, 32, 32
    D_MODEL, N_HEADS, D_FF, N_LAYERS = 128, 2, 256, 2
    SRC_VOCAB, TRG_VOCAB = 32, 32
    SRC_PAD_IDX, TRG_PAD_IDX, TRG_SOS, TRG_EOS = 0, 0, 1, 2
    MAX_LEN = 64

    key = jax.random.PRNGKey(0)
    k_enc, k_dec, k_src, k_trg = jax.random.split(key, 4)

    enc_params = init_encoder(k_enc, SRC_VOCAB, MAX_LEN, D_MODEL, N_HEADS, D_FF, N_LAYERS)
    dec_params = init_decoder(k_dec, TRG_VOCAB, MAX_LEN, D_MODEL, N_HEADS, D_FF, N_LAYERS)

    # Deterministic example batch (N, S) / (N, T) LongTensor-like int32 ids.
    src_lens = jnp.array([32, 20], dtype=jnp.int32)
    trg_lens = jnp.array([32, 24], dtype=jnp.int32)
    src = jax.random.randint(k_src, (N, S), 3, SRC_VOCAB, dtype=jnp.int32)
    trg = jax.random.randint(k_trg, (N, T), 3, TRG_VOCAB, dtype=jnp.int32)
    # Pad beyond lengths, prepend SOS to target like a real batch would have.
    src = jnp.where(jnp.arange(S)[None, :] < src_lens[:, None], src, SRC_PAD_IDX)
    trg = trg.at[:, 0].set(TRG_SOS)
    trg = jnp.where(jnp.arange(T)[None, :] < trg_lens[:, None], trg, TRG_PAD_IDX)

    fwd = jax.jit(functools.partial(transformer_forward, enc_params, dec_params))
    logits = fwd(src, src_lens, trg, trg_lens)
    jax.block_until_ready(logits)

    assert logits.shape == (N, T, TRG_VOCAB), logits.shape
    assert jnp.all(jnp.isfinite(logits))
    print("KERNEL_OK")
</pallas_src>

<mosaic_0001>
module attributes {stable_mosaic.version = 11 : i64} {
  func.func @_self_attn_ln_kernel(%arg0: i32, %arg1: memref<2xi32, #tpu.memory_space<smem>>, %arg2: memref<1x32x128xbf16, #tpu.memory_space<vmem>>, %arg3: memref<128x384xbf16, #tpu.memory_space<vmem>>, %arg4: memref<1x384xf32, #tpu.memory_space<vmem>>, %arg5: memref<128x128xbf16, #tpu.memory_space<vmem>>, %arg6: memref<1x128xf32, #tpu.memory_space<vmem>>, %arg7: memref<1x128xf32, #tpu.memory_space<vmem>>, %arg8: memref<1x128xf32, #tpu.memory_space<vmem>>, %arg9: memref<1x32x128xbf16, #tpu.memory_space<vmem>>) attributes {dimension_semantics = [#tpu.dimension_semantics<parallel>], iteration_bounds = array<i64: 2>, scalar_prefetch = 1 : i64, scratch_operands = 0 : i64, tpu.core_type = #tpu.core_type<tc>, window_params = [{transform_indices = @transform_0, window_bounds = array<i64: 1, 32, 128>}, {pipeline_mode = #tpu.pipeline_mode<synchronous>, transform_indices = @transform_1, window_bounds = array<i64: 128, 384>}, {pipeline_mode = #tpu.pipeline_mode<synchronous>, transform_indices = @transform_2, window_bounds = array<i64: 1, 384>}, {pipeline_mode = #tpu.pipeline_mode<synchronous>, transform_indices = @transform_3, window_bounds = array<i64: 128, 128>}, {pipeline_mode = #tpu.pipeline_mode<synchronous>, transform_indices = @transform_4, window_bounds = array<i64: 1, 128>}, {pipeline_mode = #tpu.pipeline_mode<synchronous>, transform_indices = @transform_5, window_bounds = array<i64: 1, 128>}, {pipeline_mode = #tpu.pipeline_mode<synchronous>, transform_indices = @transform_6, window_bounds = array<i64: 1, 128>}, {transform_indices = @transform_7, window_bounds = array<i64: 1, 32, 128>}]} {
    %0 = arith.index_cast %arg0 : i32 to index
    %1 = memref.load %arg1[%0] : memref<2xi32, #tpu.memory_space<smem>>
    %c0 = arith.constant 0 : index
    %c0_0 = arith.constant 0 : index
    %c0_1 = arith.constant 0 : index
    %2 = vector.load %arg2[%c0, %c0_0, %c0_1] : memref<1x32x128xbf16, #tpu.memory_space<vmem>>, vector<1x32x128xbf16>
    %3 = vector.shape_cast %2 : vector<1x32x128xbf16> to vector<32x128xbf16>
    %c0_2 = arith.constant 0 : index
    %c0_3 = arith.constant 0 : index
    %4 = vector.load %arg3[%c0_2, %c0_3] : memref<128x384xbf16, #tpu.memory_space<vmem>>, vector<128x384xbf16>
    %cst = arith.constant dense<0.000000e+00> : vector<32x384xf32>
    %5 = tpu.matmul %3, %4, %cst {dimension_numbers = #tpu.dot_dimension_numbers<[1], [0], [0], [1], [0, 0, 1, 1], [], []>} : vector<32x128xbf16>, vector<128x384xbf16>, vector<32x384xf32> -> vector<32x384xf32>
    %c0_4 = arith.constant 0 : index
    %c0_5 = arith.constant 0 : index
    %6 = vector.load %arg4[%c0_4, %c0_5] : memref<1x384xf32, #tpu.memory_space<vmem>>, vector<1x384xf32>
    %7 = vector.broadcast %6 : vector<1x384xf32> to vector<32x384xf32>
    %8 = arith.addf %5, %7 : vector<32x384xf32>
    %9 = vector.extract_strided_slice %8 {offsets = [0, 0], sizes = [32, 128], strides = [1, 1]} : vector<32x384xf32> to vector<32x128xf32>
    %10 = vector.extract_strided_slice %8 {offsets = [0, 128], sizes = [32, 128], strides = [1, 1]} : vector<32x384xf32> to vector<32x128xf32>
    %11 = vector.extract_strided_slice %8 {offsets = [0, 256], sizes = [32, 128], strides = [1, 1]} : vector<32x384xf32> to vector<32x128xf32>
    %c0_6 = arith.constant 0 : index
    %c0_7 = arith.constant 0 : index
    %12 = vector.load %arg5[%c0_6, %c0_7] : memref<128x128xbf16, #tpu.memory_space<vmem>>, vector<128x128xbf16>
    %13 = tpu.iota {dimensions = array<i32: 0>} : vector<32x32xi32>
    %14 = tpu.iota {dimensions = array<i32: 1>} : vector<32x32xi32>
    %15 = vector.broadcast %1 : i32 to vector<32x32xi32>
    %16 = arith.cmpi slt, %13, %15 : vector<32x32xi32>
    %17 = arith.cmpi sle, %14, %13 : vector<32x32xi32>
    %18 = arith.andi %16, %17 : vector<32x32xi1>
    %cst_8 = arith.constant 0.000000e+00 : f32
    %cst_9 = arith.constant -1.000000e+09 : f32
    %19 = vector.broadcast %cst_8 : f32 to vector<32x32xf32>
    %20 = vector.broadcast %cst_9 : f32 to vector<32x32xf32>
    %21 = arith.select %18, %19, %20 : vector<32x32xi1>, vector<32x32xf32>
    %cst_10 = arith.constant 0.000000e+00 : f32
    %22 = vector.broadcast %cst_10 : f32 to vector<32x128xf32>
    %23 = vector.extract_strided_slice %9 {offsets = [0, 0], sizes = [32, 64], strides = [1, 1]} : vector<32x128xf32> to vector<32x64xf32>
    %24 = arith.truncf %23 : vector<32x64xf32> to vector<32x64xbf16>
    %25 = vector.extract_strided_slice %10 {offsets = [0, 0], sizes = [32, 64], strides = [1, 1]} : vector<32x128xf32> to vector<32x64xf32>
    %26 = arith.truncf %25 : vector<32x64xf32> to vector<32x64xbf16>
    %27 = vector.extract_strided_slice %11 {offsets = [0, 0], sizes = [32, 64], strides = [1, 1]} : vector<32x128xf32> to vector<32x64xf32>
    %28 = arith.truncf %27 : vector<32x64xf32> to vector<32x64xbf16>
    %cst_11 = arith.constant dense<0.000000e+00> : vector<32x32xf32>
    %29 = tpu.matmul %24, %26, %cst_11 {dimension_numbers = #tpu.dot_dimension_numbers<[1], [1], [0], [0], [0, 0, 1, 0], [], []>} : vector<32x64xbf16>, vector<32x64xbf16>, vector<32x32xf32> -> vector<32x32xf32>
    %cst_12 = arith.constant 1.250000e-01 : f32
    %30 = vector.broadcast %cst_12 : f32 to vector<32x32xf32>
    %31 = arith.mulf %29, %30 : vector<32x32xf32>
    %32 = arith.addf %31, %21 : vector<32x32xf32>
    %cst_13 = arith.constant dense<0xFF800000> : vector<32xf32>
    %33 = vector.multi_reduction <maximumf>, %32, %cst_13 [1] : vector<32x32xf32> to vector<32xf32>
    %34 = vector.shape_cast %33 : vector<32xf32> to vector<32x1xf32>
    %35 = vector.broadcast %34 : vector<32x1xf32> to vector<32x32xf32>
    %36 = arith.subf %32, %35 : vector<32x32xf32>
    %37 = math.exp %36 : vector<32x32xf32>
    %cst_14 = arith.constant dense<0.000000e+00> : vector<32xf32>
    %38 = vector.multi_reduction <add>, %37, %cst_14 [1] : vector<32x32xf32> to vector<32xf32>
    %39 = vector.shape_cast %38 : vector<32xf32> to vector<32x1xf32>
    %40 = tpu.reciprocal %39 : vector<32x1xf32> -> vector<32x1xf32>
    %41 = vector.broadcast %40 : vector<32x1xf32> to vector<32x32xf32>
    %42 = arith.mulf %37, %41 : vector<32x32xf32>
    %43 = arith.truncf %42 : vector<32x32xf32> to vector<32x32xbf16>
    %cst_15 = arith.constant dense<0.000000e+00> : vector<32x64xf32>
    %44 = tpu.matmul %43, %28, %cst_15 {dimension_numbers = #tpu.dot_dimension_numbers<[1], [0], [0], [1], [0, 0, 1, 1], [], []>} : vector<32x32xbf16>, vector<32x64xbf16>, vector<32x64xf32> -> vector<32x64xf32>
    %45 = arith.truncf %44 : vector<32x64xf32> to vector<32x64xbf16>
    %46 = vector.extract_strided_slice %12 {offsets = [0, 0], sizes = [64, 128], strides = [1, 1]} : vector<128x128xbf16> to vector<64x128xbf16>
    %cst_16 = arith.constant dense<0.000000e+00> : vector<32x128xf32>
    %47 = tpu.matmul %45, %46, %cst_16 {dimension_numbers = #tpu.dot_dimension_numbers<[1], [0], [0], [1], [0, 0, 1, 1], [], []>} : vector<32x64xbf16>, vector<64x128xbf16>, vector<32x128xf32> -> vector<32x128xf32>
    %48 = arith.addf %22, %47 : vector<32x128xf32>
    %49 = vector.extract_strided_slice %9 {offsets = [0, 64], sizes = [32, 64], strides = [1, 1]} : vector<32x128xf32> to vector<32x64xf32>
    %50 = arith.truncf %49 : vector<32x64xf32> to vector<32x64xbf16>
    %51 = vector.extract_strided_slice %10 {offsets = [0, 64], sizes = [32, 64], strides = [1, 1]} : vector<32x128xf32> to vector<32x64xf32>
    %52 = arith.truncf %51 : vector<32x64xf32> to vector<32x64xbf16>
    %53 = vector.extract_strided_slice %11 {offsets = [0, 64], sizes = [32, 64], strides = [1, 1]} : vector<32x128xf32> to vector<32x64xf32>
    %54 = arith.truncf %53 : vector<32x64xf32> to vector<32x64xbf16>
    %cst_17 = arith.constant dense<0.000000e+00> : vector<32x32xf32>
    %55 = tpu.matmul %50, %52, %cst_17 {dimension_numbers = #tpu.dot_dimension_numbers<[1], [1], [0], [0], [0, 0, 1, 0], [], []>} : vector<32x64xbf16>, vector<32x64xbf16>, vector<32x32xf32> -> vector<32x32xf32>
    %cst_18 = arith.constant 1.250000e-01 : f32
    %56 = vector.broadcast %cst_18 : f32 to vector<32x32xf32>
    %57 = arith.mulf %55, %56 : vector<32x32xf32>
    %58 = arith.addf %57, %21 : vector<32x32xf32>
    %cst_19 = arith.constant dense<0xFF800000> : vector<32xf32>
    %59 = vector.multi_reduction <maximumf>, %58, %cst_19 [1] : vector<32x32xf32> to vector<32xf32>
    %60 = vector.shape_cast %59 : vector<32xf32> to vector<32x1xf32>
    %61 = vector.broadcast %60 : vector<32x1xf32> to vector<32x32xf32>
    %62 = arith.subf %58, %61 : vector<32x32xf32>
    %63 = math.exp %62 : vector<32x32xf32>
    %cst_20 = arith.constant dense<0.000000e+00> : vector<32xf32>
    %64 = vector.multi_reduction <add>, %63, %cst_20 [1] : vector<32x32xf32> to vector<32xf32>
    %65 = vector.shape_cast %64 : vector<32xf32> to vector<32x1xf32>
    %66 = tpu.reciprocal %65 : vector<32x1xf32> -> vector<32x1xf32>
    %67 = vector.broadcast %66 : vector<32x1xf32> to vector<32x32xf32>
    %68 = arith.mulf %63, %67 : vector<32x32xf32>
    %69 = arith.truncf %68 : vector<32x32xf32> to vector<32x32xbf16>
    %cst_21 = arith.constant dense<0.000000e+00> : vector<32x64xf32>
    %70 = tpu.matmul %69, %54, %cst_21 {dimension_numbers = #tpu.dot_dimension_numbers<[1], [0], [0], [1], [0, 0, 1, 1], [], []>} : vector<32x32xbf16>, vector<32x64xbf16>, vector<32x64xf32> -> vector<32x64xf32>
    %71 = arith.truncf %70 : vector<32x64xf32> to vector<32x64xbf16>
    %72 = vector.extract_strided_slice %12 {offsets = [64, 0], sizes = [64, 128], strides = [1, 1]} : vector<128x128xbf16> to vector<64x128xbf16>
    %cst_22 = arith.constant dense<0.000000e+00> : vector<32x128xf32>
    %73 = tpu.matmul %71, %72, %cst_22 {dimension_numbers = #tpu.dot_dimension_numbers<[1], [0], [0], [1], [0, 0, 1, 1], [], []>} : vector<32x64xbf16>, vector<64x128xbf16>, vector<32x128xf32> -> vector<32x128xf32>
    %74 = arith.addf %48, %73 : vector<32x128xf32>
    %c0_23 = arith.constant 0 : index
    %c0_24 = arith.constant 0 : index
    %75 = vector.load %arg6[%c0_23, %c0_24] : memref<1x128xf32, #tpu.memory_space<vmem>>, vector<1x128xf32>
    %76 = vector.broadcast %75 : vector<1x128xf32> to vector<32x128xf32>
    %77 = arith.addf %74, %76 : vector<32x128xf32>
    %78 = arith.extf %3 : vector<32x128xbf16> to vector<32x128xf32>
    %79 = arith.addf %77, %78 : vector<32x128xf32>
    %c0_25 = arith.constant 0 : index
    %c0_26 = arith.constant 0 : index
    %80 = vector.load %arg7[%c0_25, %c0_26] : memref<1x128xf32, #tpu.memory_space<vmem>>, vector<1x128xf32>
    %c0_27 = arith.constant 0 : index
    %c0_28 = arith.constant 0 : index
    %81 = vector.load %arg8[%c0_27, %c0_28] : memref<1x128xf32, #tpu.memory_space<vmem>>, vector<1x128xf32>
    %cst_29 = arith.constant dense<0.000000e+00> : vector<32xf32>
    %82 = vector.multi_reduction <add>, %79, %cst_29 [1] : vector<32x128xf32> to vector<32xf32>
    %83 = vector.shape_cast %82 : vector<32xf32> to vector<32x1xf32>
    %cst_30 = arith.constant 1.280000e+02 : f32
    %84 = vector.broadcast %cst_30 : f32 to vector<32x1xf32>
    %85 = arith.divf %83, %84 : vector<32x1xf32>
    %86 = vector.broadcast %85 : vector<32x1xf32> to vector<32x128xf32>
    %87 = arith.subf %79, %86 : vector<32x128xf32>
    %88 = arith.mulf %87, %87 : vector<32x128xf32>
    %cst_31 = arith.constant dense<0.000000e+00> : vector<32xf32>
    %89 = vector.multi_reduction <add>, %88, %cst_31 [1] : vector<32x128xf32> to vector<32xf32>
    %90 = vector.shape_cast %89 : vector<32xf32> to vector<32x1xf32>
    %cst_32 = arith.constant 1.280000e+02 : f32
    %91 = vector.broadcast %cst_32 : f32 to vector<32x1xf32>
    %92 = arith.divf %90, %91 : vector<32x1xf32>
    %93 = vector.broadcast %85 : vector<32x1xf32> to vector<32x128xf32>
    %94 = arith.subf %79, %93 : vector<32x128xf32>
    %cst_33 = arith.constant 9.99999974E-6 : f32
    %95 = vector.broadcast %cst_33 : f32 to vector<32x1xf32>
    %96 = arith.addf %92, %95 : vector<32x1xf32>
    %97 = math.rsqrt %96 : vector<32x1xf32>
    %98 = vector.broadcast %97 : vector<32x1xf32> to vector<32x128xf32>
    %99 = arith.mulf %94, %98 : vector<32x128xf32>
    %100 = vector.broadcast %80 : vector<1x128xf32> to vector<32x128xf32>
    %101 = arith.mulf %99, %100 : vector<32x128xf32>
    %102 = vector.broadcast %81 : vector<1x128xf32> to vector<32x128xf32>
    %103 = arith.addf %101, %102 : vector<32x128xf32>
    %104 = arith.truncf %103 : vector<32x128xf32> to vector<32x128xbf16>
    %c0_34 = arith.constant 0 : index
    %c0_35 = arith.constant 0 : index
    %c0_36 = arith.constant 0 : index
    %105 = vector.load %arg9[%c0_34, %c0_35, %c0_36] : memref<1x32x128xbf16, #tpu.memory_space<vmem>>, vector<1x32x128xbf16>
    %106 = vector.shape_cast %105 : vector<1x32x128xbf16> to vector<32x128xbf16>
    %107 = vector.shape_cast %104 : vector<32x128xbf16> to vector<1x32x128xbf16>
    tpu.vector_store %arg9[%c0_34, %c0_35, %c0_36], %107 {strides = array<i32>} : memref<1x32x128xbf16, #tpu.memory_space<vmem>>, vector<1x32x128xbf16>,
    return
  }
  func.func @transform_0(%arg0: i32, %arg1: memref<2xi32, #tpu.memory_space<smem>>) -> (i32, i32, i32) {
    %c0_i32 = arith.constant 0 : i32
    %c0_i32_0 = arith.constant 0 : i32
    %c0_i32_1 = arith.constant 0 : i32
    return %arg0, %c0_i32, %c0_i32_0 : i32, i32, i32
  }
  func.func @transform_1(%arg0: i32, %arg1: memref<2xi32, #tpu.memory_space<smem>>) -> (i32, i32) {
    %c0_i32 = arith.constant 0 : i32
    %c0_i32_0 = arith.constant 0 : i32
    %c0_i32_1 = arith.constant 0 : i32
    return %c0_i32, %c0_i32_0 : i32, i32
  }
  func.func @transform_2(%arg0: i32, %arg1: memref<2xi32, #tpu.memory_space<smem>>) -> (i32, i32) {
    %c0_i32 = arith.constant 0 : i32
    %c0_i32_0 = arith.constant 0 : i32
    %c0_i32_1 = arith.constant 0 : i32
    return %c0_i32, %c0_i32_0 : i32, i32
  }
  func.func @transform_3(%arg0: i32, %arg1: memref<2xi32, #tpu.memory_space<smem>>) -> (i32, i32) {
    %c0_i32 = arith.constant 0 : i32
    %c0_i32_0 = arith.constant 0 : i32
    %c0_i32_1 = arith.constant 0 : i32
    return %c0_i32, %c0_i32_0 : i32, i32
  }
  func.func @transform_4(%arg0: i32, %arg1: memref<2xi32, #tpu.memory_space<smem>>) -> (i32, i32) {
    %c0_i32 = arith.constant 0 : i32
    %c0_i32_0 = arith.constant 0 : i32
    %c0_i32_1 = arith.constant 0 : i32
    return %c0_i32, %c0_i32_0 : i32, i32
  }
  func.func @transform_5(%arg0: i32, %arg1: memref<2xi32, #tpu.memory_space<smem>>) -> (i32, i32) {
    %c0_i32 = arith.constant 0 : i32
    %c0_i32_0 = arith.constant 0 : i32
    %c0_i32_1 = arith.constant 0 : i32
    return %c0_i32, %c0_i32_0 : i32, i32
  }
  func.func @transform_6(%arg0: i32, %arg1: memref<2xi32, #tpu.memory_space<smem>>) -> (i32, i32) {
    %c0_i32 = arith.constant 0 : i32
    %c0_i32_0 = arith.constant 0 : i32
    %c0_i32_1 = arith.constant 0 : i32
    return %c0_i32, %c0_i32_0 : i32, i32
  }
  func.func @transform_7(%arg0: i32, %arg1: memref<2xi32, #tpu.memory_space<smem>>) -> (i32, i32, i32) {
    %c0_i32 = arith.constant 0 : i32
    %c0_i32_0 = arith.constant 0 : i32
    %c0_i32_1 = arith.constant 0 : i32
    return %arg0, %c0_i32, %c0_i32_0 : i32, i32, i32
  }
}

module attributes {stable_mosaic.version = 11 : i64} {
  func.func @_ffn_res_ln_kernel(%arg0: i32, %arg1: memref<64x128xbf16, #tpu.memory_space<vmem>>, %arg2: memref<128x256xbf16, #tpu.memory_space<vmem>>, %arg3: memref<1x256xf32, #tpu.memory_space<vmem>>, %arg4: memref<256x128xbf16, #tpu.memory_space<vmem>>, %arg5: memref<1x128xf32, #tpu.memory_space<vmem>>, %arg6: memref<1x128xf32, #tpu.memory_space<vmem>>, %arg7: memref<1x128xf32, #tpu.memory_space<vmem>>, %arg8: memref<64x128xbf16, #tpu.memory_space<vmem>>) attributes {dimension_semantics = [#tpu.dimension_semantics<parallel>], iteration_bounds = array<i64: 1>, scalar_prefetch = 0 : i64, scratch_operands = 0 : i64, tpu.core_type = #tpu.core_type<tc>, window_params = [{transform_indices = @transform_0, window_bounds = array<i64: 64, 128>}, {pipeline_mode = #tpu.pipeline_mode<synchronous>, transform_indices = @transform_1, window_bounds = array<i64: 128, 256>}, {pipeline_mode = #tpu.pipeline_mode<synchronous>, transform_indices = @transform_2, window_bounds = array<i64: 1, 256>}, {pipeline_mode = #tpu.pipeline_mode<synchronous>, transform_indices = @transform_3, window_bounds = array<i64: 256, 128>}, {pipeline_mode = #tpu.pipeline_mode<synchronous>, transform_indices = @transform_4, window_bounds = array<i64: 1, 128>}, {pipeline_mode = #tpu.pipeline_mode<synchronous>, transform_indices = @transform_5, window_bounds = array<i64: 1, 128>}, {pipeline_mode = #tpu.pipeline_mode<synchronous>, transform_indices = @transform_6, window_bounds = array<i64: 1, 128>}, {transform_indices = @transform_7, window_bounds = array<i64: 64, 128>}]} {
    %c0 = arith.constant 0 : index
    %c0_0 = arith.constant 0 : index
    %0 = vector.load %arg1[%c0, %c0_0] : memref<64x128xbf16, #tpu.memory_space<vmem>>, vector<64x128xbf16>
    %c0_1 = arith.constant 0 : index
    %c0_2 = arith.constant 0 : index
    %1 = vector.load %arg2[%c0_1, %c0_2] : memref<128x256xbf16, #tpu.memory_space<vmem>>, vector<128x256xbf16>
    %cst = arith.constant dense<0.000000e+00> : vector<64x256xf32>
    %2 = tpu.matmul %0, %1, %cst {dimension_numbers = #tpu.dot_dimension_numbers<[1], [0], [0], [1], [0, 0, 1, 1], [], []>} : vector<64x128xbf16>, vector<128x256xbf16>, vector<64x256xf32> -> vector<64x256xf32>
    %c0_3 = arith.constant 0 : index
    %c0_4 = arith.constant 0 : index
    %3 = vector.load %arg3[%c0_3, %c0_4] : memref<1x256xf32, #tpu.memory_space<vmem>>, vector<1x256xf32>
    %4 = vector.broadcast %3 : vector<1x256xf32> to vector<64x256xf32>
    %5 = arith.addf %2, %4 : vector<64x256xf32>
    %cst_5 = arith.constant 0.000000e+00 : f32
    %6 = vector.broadcast %cst_5 : f32 to vector<64x256xf32>
    %7 = arith.maximumf %5, %6 : vector<64x256xf32>
    %8 = arith.truncf %7 : vector<64x256xf32> to vector<64x256xbf16>
    %c0_6 = arith.constant 0 : index
    %c0_7 = arith.constant 0 : index
    %9 = vector.load %arg4[%c0_6, %c0_7] : memref<256x128xbf16, #tpu.memory_space<vmem>>, vector<256x128xbf16>
    %cst_8 = arith.constant dense<0.000000e+00> : vector<64x128xf32>
    %10 = tpu.matmul %8, %9, %cst_8 {dimension_numbers = #tpu.dot_dimension_numbers<[1], [0], [0], [1], [0, 0, 1, 1], [], []>} : vector<64x256xbf16>, vector<256x128xbf16>, vector<64x128xf32> -> vector<64x128xf32>
    %c0_9 = arith.constant 0 : index
    %c0_10 = arith.constant 0 : index
    %11 = vector.load %arg5[%c0_9, %c0_10] : memref<1x128xf32, #tpu.memory_space<vmem>>, vector<1x128xf32>
    %12 = vector.broadcast %11 : vector<1x128xf32> to vector<64x128xf32>
    %13 = arith.addf %10, %12 : vector<64x128xf32>
    %14 = arith.extf %0 : vector<64x128xbf16> to vector<64x128xf32>
    %15 = arith.addf %13, %14 : vector<64x128xf32>
    %c0_11 = arith.constant 0 : index
    %c0_12 = arith.constant 0 : index
    %16 = vector.load %arg6[%c0_11, %c0_12] : memref<1x128xf32, #tpu.memory_space<vmem>>, vector<1x128xf32>
    %c0_13 = arith.constant 0 : index
    %c0_14 = arith.constant 0 : index
    %17 = vector.load %arg7[%c0_13, %c0_14] : memref<1x128xf32, #tpu.memory_space<vmem>>, vector<1x128xf32>
    %cst_15 = arith.constant dense<0.000000e+00> : vector<64xf32>
    %18 = vector.multi_reduction <add>, %15, %cst_15 [1] : vector<64x128xf32> to vector<64xf32>
    %19 = vector.shape_cast %18 : vector<64xf32> to vector<64x1xf32>
    %cst_16 = arith.constant 1.280000e+02 : f32
    %20 = vector.broadcast %cst_16 : f32 to vector<64x1xf32>
    %21 = arith.divf %19, %20 : vector<64x1xf32>
    %22 = vector.broadcast %21 : vector<64x1xf32> to vector<64x128xf32>
    %23 = arith.subf %15, %22 : vector<64x128xf32>
    %24 = arith.mulf %23, %23 : vector<64x128xf32>
    %cst_17 = arith.constant dense<0.000000e+00> : vector<64xf32>
    %25 = vector.multi_reduction <add>, %24, %cst_17 [1] : vector<64x128xf32> to vector<64xf32>
    %26 = vector.shape_cast %25 : vector<64xf32> to vector<64x1xf32>
    %cst_18 = arith.constant 1.280000e+02 : f32
    %27 = vector.broadcast %cst_18 : f32 to vector<64x1xf32>
    %28 = arith.divf %26, %27 : vector<64x1xf32>
    %29 = vector.broadcast %21 : vector<64x1xf32> to vector<64x128xf32>
    %30 = arith.subf %15, %29 : vector<64x128xf32>
    %cst_19 = arith.constant 9.99999974E-6 : f32
    %31 = vector.broadcast %cst_19 : f32 to vector<64x1xf32>
    %32 = arith.addf %28, %31 : vector<64x1xf32>
    %33 = math.rsqrt %32 : vector<64x1xf32>
    %34 = vector.broadcast %33 : vector<64x1xf32> to vector<64x128xf32>
    %35 = arith.mulf %30, %34 : vector<64x128xf32>
    %36 = vector.broadcast %16 : vector<1x128xf32> to vector<64x128xf32>
    %37 = arith.mulf %35, %36 : vector<64x128xf32>
    %38 = vector.broadcast %17 : vector<1x128xf32> to vector<64x128xf32>
    %39 = arith.addf %37, %38 : vector<64x128xf32>
    %40 = arith.truncf %39 : vector<64x128xf32> to vector<64x128xbf16>
    %c0_20 = arith.constant 0 : index
    %c0_21 = arith.constant 0 : index
    %41 = vector.load %arg8[%c0_20, %c0_21] : memref<64x128xbf16, #tpu.memory_space<vmem>>, vector<64x128xbf16>
    tpu.vector_store %arg8[%c0_20, %c0_21], %40 {strides = array<i32>} : memref<64x128xbf16, #tpu.memory_space<vmem>>, vector<64x128xbf16>,
    return
  }
  func.func @transform_0(%arg0: i32) -> (i32, i32) {
    %c0_i32 = arith.constant 0 : i32
    %c0_i32_0 = arith.constant 0 : i32
    return %arg0, %c0_i32 : i32, i32
  }
  func.func @transform_1(%arg0: i32) -> (i32, i32) {
    %c0_i32 = arith.constant 0 : i32
    %c0_i32_0 = arith.constant 0 : i32
    %c0_i32_1 = arith.constant 0 : i32
    return %c0_i32, %c0_i32_0 : i32, i32
  }
  func.func @transform_2(%arg0: i32) -> (i32, i32) {
    %c0_i32 = arith.constant 0 : i32
    %c0_i32_0 = arith.constant 0 : i32
    %c0_i32_1 = arith.constant 0 : i32
    return %c0_i32, %c0_i32_0 : i32, i32
  }
  func.func @transform_3(%arg0: i32) -> (i32, i32) {
    %c0_i32 = arith.constant 0 : i32
    %c0_i32_0 = arith.constant 0 : i32
    %c0_i32_1 = arith.constant 0 : i32
    return %c0_i32, %c0_i32_0 : i32, i32
  }
  func.func @transform_4(%arg0: i32) -> (i32, i32) {
    %c0_i32 = arith.constant 0 : i32
    %c0_i32_0 = arith.constant 0 : i32
    %c0_i32_1 = arith.constant 0 : i32
    return %c0_i32, %c0_i32_0 : i32, i32
  }
  func.func @transform_5(%arg0: i32) -> (i32, i32) {
    %c0_i32 = arith.constant 0 : i32
    %c0_i32_0 = arith.constant 0 : i32
    %c0_i32_1 = arith.constant 0 : i32
    return %c0_i32, %c0_i32_0 : i32, i32
  }
  func.func @transform_6(%arg0: i32) -> (i32, i32) {
    %c0_i32 = arith.constant 0 : i32
    %c0_i32_0 = arith.constant 0 : i32
    %c0_i32_1 = arith.constant 0 : i32
    return %c0_i32, %c0_i32_0 : i32, i32
  }
  func.func @transform_7(%arg0: i32) -> (i32, i32) {
    %c0_i32 = arith.constant 0 : i32
    %c0_i32_0 = arith.constant 0 : i32
    return %arg0, %c0_i32 : i32, i32
  }
}

module attributes {stable_mosaic.version = 11 : i64} {
  func.func @_cross_attn_ln_kernel(%arg0: i32, %arg1: memref<2xi32, #tpu.memory_space<smem>>, %arg2: memref<1x32x128xbf16, #tpu.memory_space<vmem>>, %arg3: memref<1x32x128xbf16, #tpu.memory_space<vmem>>, %arg4: memref<128x128xbf16, #tpu.memory_space<vmem>>, %arg5: memref<1x128xf32, #tpu.memory_space<vmem>>, %arg6: memref<128x256xbf16, #tpu.memory_space<vmem>>, %arg7: memref<1x256xf32, #tpu.memory_space<vmem>>, %arg8: memref<128x128xbf16, #tpu.memory_space<vmem>>, %arg9: memref<1x128xf32, #tpu.memory_space<vmem>>, %arg10: memref<1x128xf32, #tpu.memory_space<vmem>>, %arg11: memref<1x128xf32, #tpu.memory_space<vmem>>, %arg12: memref<1x32x128xbf16, #tpu.memory_space<vmem>>) attributes {dimension_semantics = [#tpu.dimension_semantics<parallel>], iteration_bounds = array<i64: 2>, scalar_prefetch = 1 : i64, scratch_operands = 0 : i64, tpu.core_type = #tpu.core_type<tc>, window_params = [{transform_indices = @transform_0, window_bounds = array<i64: 1, 32, 128>}, {transform_indices = @transform_1, window_bounds = array<i64: 1, 32, 128>}, {pipeline_mode = #tpu.pipeline_mode<synchronous>, transform_indices = @transform_2, window_bounds = array<i64: 128, 128>}, {pipeline_mode = #tpu.pipeline_mode<synchronous>, transform_indices = @transform_3, window_bounds = array<i64: 1, 128>}, {pipeline_mode = #tpu.pipeline_mode<synchronous>, transform_indices = @transform_4, window_bounds = array<i64: 128, 256>}, {pipeline_mode = #tpu.pipeline_mode<synchronous>, transform_indices = @transform_5, window_bounds = array<i64: 1, 256>}, {pipeline_mode = #tpu.pipeline_mode<synchronous>, transform_indices = @transform_6, window_bounds = array<i64: 128, 128>}, {pipeline_mode = #tpu.pipeline_mode<synchronous>, transform_indices = @transform_7, window_bounds = array<i64: 1, 128>}, {pipeline_mode = #tpu.pipeline_mode<synchronous>, transform_indices = @transform_8, window_bounds = array<i64: 1, 128>}, {pipeline_mode = #tpu.pipeline_mode<synchronous>, transform_indices = @transform_9, window_bounds = array<i64: 1, 128>}, {transform_indices = @transform_10, window_bounds = array<i64: 1, 32, 128>}]} {
    %0 = arith.index_cast %arg0 : i32 to index
    %1 = memref.load %arg1[%0] : memref<2xi32, #tpu.memory_space<smem>>
    %c0 = arith.constant 0 : index
    %c0_0 = arith.constant 0 : index
    %c0_1 = arith.constant 0 : index
    %2 = vector.load %arg2[%c0, %c0_0, %c0_1] : memref<1x32x128xbf16, #tpu.memory_space<vmem>>, vector<1x32x128xbf16>
    %3 = vector.shape_cast %2 : vector<1x32x128xbf16> to vector<32x128xbf16>
    %c0_2 = arith.constant 0 : index
    %c0_3 = arith.constant 0 : index
    %c0_4 = arith.constant 0 : index
    %4 = vector.load %arg3[%c0_2, %c0_3, %c0_4] : memref<1x32x128xbf16, #tpu.memory_space<vmem>>, vector<1x32x128xbf16>
    %5 = vector.shape_cast %4 : vector<1x32x128xbf16> to vector<32x128xbf16>
    %c0_5 = arith.constant 0 : index
    %c0_6 = arith.constant 0 : index
    %6 = vector.load %arg4[%c0_5, %c0_6] : memref<128x128xbf16, #tpu.memory_space<vmem>>, vector<128x128xbf16>
    %cst = arith.constant dense<0.000000e+00> : vector<32x128xf32>
    %7 = tpu.matmul %3, %6, %cst {dimension_numbers = #tpu.dot_dimension_numbers<[1], [0], [0], [1], [0, 0, 1, 1], [], []>} : vector<32x128xbf16>, vector<128x128xbf16>, vector<32x128xf32> -> vector<32x128xf32>
    %c0_7 = arith.constant 0 : index
    %c0_8 = arith.constant 0 : index
    %8 = vector.load %arg5[%c0_7, %c0_8] : memref<1x128xf32, #tpu.memory_space<vmem>>, vector<1x128xf32>
    %9 = vector.broadcast %8 : vector<1x128xf32> to vector<32x128xf32>
    %10 = arith.addf %7, %9 : vector<32x128xf32>
    %c0_9 = arith.constant 0 : index
    %c0_10 = arith.constant 0 : index
    %11 = vector.load %arg6[%c0_9, %c0_10] : memref<128x256xbf16, #tpu.memory_space<vmem>>, vector<128x256xbf16>
    %cst_11 = arith.constant dense<0.000000e+00> : vector<32x256xf32>
    %12 = tpu.matmul %5, %11, %cst_11 {dimension_numbers = #tpu.dot_dimension_numbers<[1], [0], [0], [1], [0, 0, 1, 1], [], []>} : vector<32x128xbf16>, vector<128x256xbf16>, vector<32x256xf32> -> vector<32x256xf32>
    %c0_12 = arith.constant 0 : index
    %c0_13 = arith.constant 0 : index
    %13 = vector.load %arg7[%c0_12, %c0_13] : memref<1x256xf32, #tpu.memory_space<vmem>>, vector<1x256xf32>
    %14 = vector.broadcast %13 : vector<1x256xf32> to vector<32x256xf32>
    %15 = arith.addf %12, %14 : vector<32x256xf32>
    %16 = vector.extract_strided_slice %15 {offsets = [0, 0], sizes = [32, 128], strides = [1, 1]} : vector<32x256xf32> to vector<32x128xf32>
    %17 = vector.extract_strided_slice %15 {offsets = [0, 128], sizes = [32, 128], strides = [1, 1]} : vector<32x256xf32> to vector<32x128xf32>
    %c0_14 = arith.constant 0 : index
    %c0_15 = arith.constant 0 : index
    %18 = vector.load %arg8[%c0_14, %c0_15] : memref<128x128xbf16, #tpu.memory_space<vmem>>, vector<128x128xbf16>
    %19 = tpu.iota {dimensions = array<i32: 1>} : vector<32x32xi32>
    %20 = vector.broadcast %1 : i32 to vector<32x32xi32>
    %21 = arith.cmpi slt, %19, %20 : vector<32x32xi32>
    %cst_16 = arith.constant 0.000000e+00 : f32
    %cst_17 = arith.constant -1.000000e+09 : f32
    %22 = vector.broadcast %cst_16 : f32 to vector<32x32xf32>
    %23 = vector.broadcast %cst_17 : f32 to vector<32x32xf32>
    %24 = arith.select %21, %22, %23 : vector<32x32xi1>, vector<32x32xf32>
    %cst_18 = arith.constant 0.000000e+00 : f32
    %25 = vector.broadcast %cst_18 : f32 to vector<32x128xf32>
    %26 = vector.extract_strided_slice %10 {offsets = [0, 0], sizes = [32, 64], strides = [1, 1]} : vector<32x128xf32> to vector<32x64xf32>
    %27 = arith.truncf %26 : vector<32x64xf32> to vector<32x64xbf16>
    %28 = vector.extract_strided_slice %16 {offsets = [0, 0], sizes = [32, 64], strides = [1, 1]} : vector<32x128xf32> to vector<32x64xf32>
    %29 = arith.truncf %28 : vector<32x64xf32> to vector<32x64xbf16>
    %30 = vector.extract_strided_slice %17 {offsets = [0, 0], sizes = [32, 64], strides = [1, 1]} : vector<32x128xf32> to vector<32x64xf32>
    %31 = arith.truncf %30 : vector<32x64xf32> to vector<32x64xbf16>
    %cst_19 = arith.constant dense<0.000000e+00> : vector<32x32xf32>
    %32 = tpu.matmul %27, %29, %cst_19 {dimension_numbers = #tpu.dot_dimension_numbers<[1], [1], [0], [0], [0, 0, 1, 0], [], []>} : vector<32x64xbf16>, vector<32x64xbf16>, vector<32x32xf32> -> vector<32x32xf32>
    %cst_20 = arith.constant 1.250000e-01 : f32
    %33 = vector.broadcast %cst_20 : f32 to vector<32x32xf32>
    %34 = arith.mulf %32, %33 : vector<32x32xf32>
    %35 = arith.addf %34, %24 : vector<32x32xf32>
    %cst_21 = arith.constant dense<0xFF800000> : vector<32xf32>
    %36 = vector.multi_reduction <maximumf>, %35, %cst_21 [1] : vector<32x32xf32> to vector<32xf32>
    %37 = vector.shape_cast %36 : vector<32xf32> to vector<32x1xf32>
    %38 = vector.broadcast %37 : vector<32x1xf32> to vector<32x32xf32>
    %39 = arith.subf %35, %38 : vector<32x32xf32>
    %40 = math.exp %39 : vector<32x32xf32>
    %cst_22 = arith.constant dense<0.000000e+00> : vector<32xf32>
    %41 = vector.multi_reduction <add>, %40, %cst_22 [1] : vector<32x32xf32> to vector<32xf32>
    %42 = vector.shape_cast %41 : vector<32xf32> to vector<32x1xf32>
    %43 = tpu.reciprocal %42 : vector<32x1xf32> -> vector<32x1xf32>
    %44 = vector.broadcast %43 : vector<32x1xf32> to vector<32x32xf32>
    %45 = arith.mulf %40, %44 : vector<32x32xf32>
    %46 = arith.truncf %45 : vector<32x32xf32> to vector<32x32xbf16>
    %cst_23 = arith.constant dense<0.000000e+00> : vector<32x64xf32>
    %47 = tpu.matmul %46, %31, %cst_23 {dimension_numbers = #tpu.dot_dimension_numbers<[1], [0], [0], [1], [0, 0, 1, 1], [], []>} : vector<32x32xbf16>, vector<32x64xbf16>, vector<32x64xf32> -> vector<32x64xf32>
    %48 = arith.truncf %47 : vector<32x64xf32> to vector<32x64xbf16>
    %49 = vector.extract_strided_slice %18 {offsets = [0, 0], sizes = [64, 128], strides = [1, 1]} : vector<128x128xbf16> to vector<64x128xbf16>
    %cst_24 = arith.constant dense<0.000000e+00> : vector<32x128xf32>
    %50 = tpu.matmul %48, %49, %cst_24 {dimension_numbers = #tpu.dot_dimension_numbers<[1], [0], [0], [1], [0, 0, 1, 1], [], []>} : vector<32x64xbf16>, vector<64x128xbf16>, vector<32x128xf32> -> vector<32x128xf32>
    %51 = arith.addf %25, %50 : vector<32x128xf32>
    %52 = vector.extract_strided_slice %10 {offsets = [0, 64], sizes = [32, 64], strides = [1, 1]} : vector<32x128xf32> to vector<32x64xf32>
    %53 = arith.truncf %52 : vector<32x64xf32> to vector<32x64xbf16>
    %54 = vector.extract_strided_slice %16 {offsets = [0, 64], sizes = [32, 64], strides = [1, 1]} : vector<32x128xf32> to vector<32x64xf32>
    %55 = arith.truncf %54 : vector<32x64xf32> to vector<32x64xbf16>
    %56 = vector.extract_strided_slice %17 {offsets = [0, 64], sizes = [32, 64], strides = [1, 1]} : vector<32x128xf32> to vector<32x64xf32>
    %57 = arith.truncf %56 : vector<32x64xf32> to vector<32x64xbf16>
    %cst_25 = arith.constant dense<0.000000e+00> : vector<32x32xf32>
    %58 = tpu.matmul %53, %55, %cst_25 {dimension_numbers = #tpu.dot_dimension_numbers<[1], [1], [0], [0], [0, 0, 1, 0], [], []>} : vector<32x64xbf16>, vector<32x64xbf16>, vector<32x32xf32> -> vector<32x32xf32>
    %cst_26 = arith.constant 1.250000e-01 : f32
    %59 = vector.broadcast %cst_26 : f32 to vector<32x32xf32>
    %60 = arith.mulf %58, %59 : vector<32x32xf32>
    %61 = arith.addf %60, %24 : vector<32x32xf32>
    %cst_27 = arith.constant dense<0xFF800000> : vector<32xf32>
    %62 = vector.multi_reduction <maximumf>, %61, %cst_27 [1] : vector<32x32xf32> to vector<32xf32>
    %63 = vector.shape_cast %62 : vector<32xf32> to vector<32x1xf32>
    %64 = vector.broadcast %63 : vector<32x1xf32> to vector<32x32xf32>
    %65 = arith.subf %61, %64 : vector<32x32xf32>
    %66 = math.exp %65 : vector<32x32xf32>
    %cst_28 = arith.constant dense<0.000000e+00> : vector<32xf32>
    %67 = vector.multi_reduction <add>, %66, %cst_28 [1] : vector<32x32xf32> to vector<32xf32>
    %68 = vector.shape_cast %67 : vector<32xf32> to vector<32x1xf32>
    %69 = tpu.reciprocal %68 : vector<32x1xf32> -> vector<32x1xf32>
    %70 = vector.broadcast %69 : vector<32x1xf32> to vector<32x32xf32>
    %71 = arith.mulf %66, %70 : vector<32x32xf32>
    %72 = arith.truncf %71 : vector<32x32xf32> to vector<32x32xbf16>
    %cst_29 = arith.constant dense<0.000000e+00> : vector<32x64xf32>
    %73 = tpu.matmul %72, %57, %cst_29 {dimension_numbers = #tpu.dot_dimension_numbers<[1], [0], [0], [1], [0, 0, 1, 1], [], []>} : vector<32x32xbf16>, vector<32x64xbf16>, vector<32x64xf32> -> vector<32x64xf32>
    %74 = arith.truncf %73 : vector<32x64xf32> to vector<32x64xbf16>
    %75 = vector.extract_strided_slice %18 {offsets = [64, 0], sizes = [64, 128], strides = [1, 1]} : vector<128x128xbf16> to vector<64x128xbf16>
    %cst_30 = arith.constant dense<0.000000e+00> : vector<32x128xf32>
    %76 = tpu.matmul %74, %75, %cst_30 {dimension_numbers = #tpu.dot_dimension_numbers<[1], [0], [0], [1], [0, 0, 1, 1], [], []>} : vector<32x64xbf16>, vector<64x128xbf16>, vector<32x128xf32> -> vector<32x128xf32>
    %77 = arith.addf %51, %76 : vector<32x128xf32>
    %c0_31 = arith.constant 0 : index
    %c0_32 = arith.constant 0 : index
    %78 = vector.load %arg9[%c0_31, %c0_32] : memref<1x128xf32, #tpu.memory_space<vmem>>, vector<1x128xf32>
    %79 = vector.broadcast %78 : vector<1x128xf32> to vector<32x128xf32>
    %80 = arith.addf %77, %79 : vector<32x128xf32>
    %81 = arith.extf %3 : vector<32x128xbf16> to vector<32x128xf32>
    %82 = arith.addf %80, %81 : vector<32x128xf32>
    %c0_33 = arith.constant 0 : index
    %c0_34 = arith.constant 0 : index
    %83 = vector.load %arg10[%c0_33, %c0_34] : memref<1x128xf32, #tpu.memory_space<vmem>>, vector<1x128xf32>
    %c0_35 = arith.constant 0 : index
    %c0_36 = arith.constant 0 : index
    %84 = vector.load %arg11[%c0_35, %c0_36] : memref<1x128xf32, #tpu.memory_space<vmem>>, vector<1x128xf32>
    %cst_37 = arith.constant dense<0.000000e+00> : vector<32xf32>
    %85 = vector.multi_reduction <add>, %82, %cst_37 [1] : vector<32x128xf32> to vector<32xf32>
    %86 = vector.shape_cast %85 : vector<32xf32> to vector<32x1xf32>
    %cst_38 = arith.constant 1.280000e+02 : f32
    %87 = vector.broadcast %cst_38 : f32 to vector<32x1xf32>
    %88 = arith.divf %86, %87 : vector<32x1xf32>
    %89 = vector.broadcast %88 : vector<32x1xf32> to vector<32x128xf32>
    %90 = arith.subf %82, %89 : vector<32x128xf32>
    %91 = arith.mulf %90, %90 : vector<32x128xf32>
    %cst_39 = arith.constant dense<0.000000e+00> : vector<32xf32>
    %92 = vector.multi_reduction <add>, %91, %cst_39 [1] : vector<32x128xf32> to vector<32xf32>
    %93 = vector.shape_cast %92 : vector<32xf32> to vector<32x1xf32>
    %cst_40 = arith.constant 1.280000e+02 : f32
    %94 = vector.broadcast %cst_40 : f32 to vector<32x1xf32>
    %95 = arith.divf %93, %94 : vector<32x1xf32>
    %96 = vector.broadcast %88 : vector<32x1xf32> to vector<32x128xf32>
    %97 = arith.subf %82, %96 : vector<32x128xf32>
    %cst_41 = arith.constant 9.99999974E-6 : f32
    %98 = vector.broadcast %cst_41 : f32 to vector<32x1xf32>
    %99 = arith.addf %95, %98 : vector<32x1xf32>
    %100 = math.rsqrt %99 : vector<32x1xf32>
    %101 = vector.broadcast %100 : vector<32x1xf32> to vector<32x128xf32>
    %102 = arith.mulf %97, %101 : vector<32x128xf32>
    %103 = vector.broadcast %83 : vector<1x128xf32> to vector<32x128xf32>
    %104 = arith.mulf %102, %103 : vector<32x128xf32>
    %105 = vector.broadcast %84 : vector<1x128xf32> to vector<32x128xf32>
    %106 = arith.addf %104, %105 : vector<32x128xf32>
    %107 = arith.truncf %106 : vector<32x128xf32> to vector<32x128xbf16>
    %c0_42 = arith.constant 0 : index
    %c0_43 = arith.constant 0 : index
    %c0_44 = arith.constant 0 : index
    %108 = vector.load %arg12[%c0_42, %c0_43, %c0_44] : memref<1x32x128xbf16, #tpu.memory_space<vmem>>, vector<1x32x128xbf16>
    %109 = vector.shape_cast %108 : vector<1x32x128xbf16> to vector<32x128xbf16>
    %110 = vector.shape_cast %107 : vector<32x128xbf16> to vector<1x32x128xbf16>
    tpu.vector_store %arg12[%c0_42, %c0_43, %c0_44], %110 {strides = array<i32>} : memref<1x32x128xbf16, #tpu.memory_space<vmem>>, vector<1x32x128xbf16>,
    return
  }
  func.func @transform_0(%arg0: i32, %arg1: memref<2xi32, #tpu.memory_space<smem>>) -> (i32, i32, i32) {
    %c0_i32 = arith.constant 0 : i32
    %c0_i32_0 = arith.constant 0 : i32
    %c0_i32_1 = arith.constant 0 : i32
    return %arg0, %c0_i32, %c0_i32_0 : i32, i32, i32
  }
  func.func @transform_1(%arg0: i32, %arg1: memref<2xi32, #tpu.memory_space<smem>>) -> (i32, i32, i32) {
    %c0_i32 = arith.constant 0 : i32
    %c0_i32_0 = arith.constant 0 : i32
    %c0_i32_1 = arith.constant 0 : i32
    return %arg0, %c0_i32, %c0_i32_0 : i32, i32, i32
  }
  func.func @transform_2(%arg0: i32, %arg1: memref<2xi32, #tpu.memory_space<smem>>) -> (i32, i32) {
    %c0_i32 = arith.constant 0 : i32
    %c0_i32_0 = arith.constant 0 : i32
    %c0_i32_1 = arith.constant 0 : i32
    return %c0_i32, %c0_i32_0 : i32, i32
  }
  func.func @transform_3(%arg0: i32, %arg1: memref<2xi32, #tpu.memory_space<smem>>) -> (i32, i32) {
    %c0_i32 = arith.constant 0 : i32
    %c0_i32_0 = arith.constant 0 : i32
    %c0_i32_1 = arith.constant 0 : i32
    return %c0_i32, %c0_i32_0 : i32, i32
  }
  func.func @transform_4(%arg0: i32, %arg1: memref<2xi32, #tpu.memory_space<smem>>) -> (i32, i32) {
    %c0_i32 = arith.constant 0 : i32
    %c0_i32_0 = arith.constant 0 : i32
    %c0_i32_1 = arith.constant 0 : i32
    return %c0_i32, %c0_i32_0 : i32, i32
  }
  func.func @transform_5(%arg0: i32, %arg1: memref<2xi32, #tpu.memory_space<smem>>) -> (i32, i32) {
    %c0_i32 = arith.constant 0 : i32
    %c0_i32_0 = arith.constant 0 : i32
    %c0_i32_1 = arith.constant 0 : i32
    return %c0_i32, %c0_i32_0 : i32, i32
  }
  func.func @transform_6(%arg0: i32, %arg1: memref<2xi32, #tpu.memory_space<smem>>) -> (i32, i32) {
    %c0_i32 = arith.constant 0 : i32
    %c0_i32_0 = arith.constant 0 : i32
    %c0_i32_1 = arith.constant 0 : i32
    return %c0_i32, %c0_i32_0 : i32, i32
  }
  func.func @transform_7(%arg0: i32, %arg1: memref<2xi32, #tpu.memory_space<smem>>) -> (i32, i32) {
    %c0_i32 = arith.constant 0 : i32
    %c0_i32_0 = arith.constant 0 : i32
    %c0_i32_1 = arith.constant 0 : i32
    return %c0_i32, %c0_i32_0 : i32, i32
  }
  func.func @transform_8(%arg0: i32, %arg1: memref<2xi32, #tpu.memory_space<smem>>) -> (i32, i32) {
    %c0_i32 = arith.constant 0 : i32
    %c0_i32_0 = arith.constant 0 : i32
    %c0_i32_1 = arith.constant 0 : i32
    return %c0_i32, %c0_i32_0 : i32, i32
  }
  func.func @transform_9(%arg0: i32, %arg1: memref<2xi32, #tpu.memory_space<smem>>) -> (i32, i32) {
    %c0_i32 = arith.constant 0 : i32
    %c0_i32_0 = arith.constant 0 : i32
    %c0_i32_1 = arith.constant 0 : i32
    return %c0_i32, %c0_i32_0 : i32, i32
  }
  func.func @transform_10(%arg0: i32, %arg1: memref<2xi32, #tpu.memory_space<smem>>) -> (i32, i32, i32) {
    %c0_i32 = arith.constant 0 : i32
    %c0_i32_0 = arith.constant 0 : i32
    %c0_i32_1 = arith.constant 0 : i32
    return %arg0, %c0_i32, %c0_i32_0 : i32, i32, i32
  }
}

module attributes {stable_mosaic.version = 11 : i64} {
  func.func @_self_attn_ln_kernel(%arg0: i32, %arg1: memref<2xi32, #tpu.memory_space<smem>>, %arg2: memref<1x32x128xbf16, #tpu.memory_space<vmem>>, %arg3: memref<128x384xbf16, #tpu.memory_space<vmem>>, %arg4: memref<1x384xf32, #tpu.memory_space<vmem>>, %arg5: memref<128x128xbf16, #tpu.memory_space<vmem>>, %arg6: memref<1x128xf32, #tpu.memory_space<vmem>>, %arg7: memref<1x128xf32, #tpu.memory_space<vmem>>, %arg8: memref<1x128xf32, #tpu.memory_space<vmem>>, %arg9: memref<1x32x128xbf16, #tpu.memory_space<vmem>>) attributes {dimension_semantics = [#tpu.dimension_semantics<parallel>], iteration_bounds = array<i64: 2>, scalar_prefetch = 1 : i64, scratch_operands = 0 : i64, tpu.core_type = #tpu.core_type<tc>, window_params = [{transform_indices = @transform_0, window_bounds = array<i64: 1, 32, 128>}, {pipeline_mode = #tpu.pipeline_mode<synchronous>, transform_indices = @transform_1, window_bounds = array<i64: 128, 384>}, {pipeline_mode = #tpu.pipeline_mode<synchronous>, transform_indices = @transform_2, window_bounds = array<i64: 1, 384>}, {pipeline_mode = #tpu.pipeline_mode<synchronous>, transform_indices = @transform_3, window_bounds = array<i64: 128, 128>}, {pipeline_mode = #tpu.pipeline_mode<synchronous>, transform_indices = @transform_4, window_bounds = array<i64: 1, 128>}, {pipeline_mode = #tpu.pipeline_mode<synchronous>, transform_indices = @transform_5, window_bounds = array<i64: 1, 128>}, {pipeline_mode = #tpu.pipeline_mode<synchronous>, transform_indices = @transform_6, window_bounds = array<i64: 1, 128>}, {transform_indices = @transform_7, window_bounds = array<i64: 1, 32, 128>}]} {
    %0 = arith.index_cast %arg0 : i32 to index
    %1 = memref.load %arg1[%0] : memref<2xi32, #tpu.memory_space<smem>>
    %c0 = arith.constant 0 : index
    %c0_0 = arith.constant 0 : index
    %c0_1 = arith.constant 0 : index
    %2 = vector.load %arg2[%c0, %c0_0, %c0_1] : memref<1x32x128xbf16, #tpu.memory_space<vmem>>, vector<1x32x128xbf16>
    %3 = vector.shape_cast %2 : vector<1x32x128xbf16> to vector<32x128xbf16>
    %c0_2 = arith.constant 0 : index
    %c0_3 = arith.constant 0 : index
    %4 = vector.load %arg3[%c0_2, %c0_3] : memref<128x384xbf16, #tpu.memory_space<vmem>>, vector<128x384xbf16>
    %cst = arith.constant dense<0.000000e+00> : vector<32x384xf32>
    %5 = tpu.matmul %3, %4, %cst {dimension_numbers = #tpu.dot_dimension_numbers<[1], [0], [0], [1], [0, 0, 1, 1], [], []>} : vector<32x128xbf16>, vector<128x384xbf16>, vector<32x384xf32> -> vector<32x384xf32>
    %c0_4 = arith.constant 0 : index
    %c0_5 = arith.constant 0 : index
    %6 = vector.load %arg4[%c0_4, %c0_5] : memref<1x384xf32, #tpu.memory_space<vmem>>, vector<1x384xf32>
    %7 = vector.broadcast %6 : vector<1x384xf32> to vector<32x384xf32>
    %8 = arith.addf %5, %7 : vector<32x384xf32>
    %9 = vector.extract_strided_slice %8 {offsets = [0, 0], sizes = [32, 128], strides = [1, 1]} : vector<32x384xf32> to vector<32x128xf32>
    %10 = vector.extract_strided_slice %8 {offsets = [0, 128], sizes = [32, 128], strides = [1, 1]} : vector<32x384xf32> to vector<32x128xf32>
    %11 = vector.extract_strided_slice %8 {offsets = [0, 256], sizes = [32, 128], strides = [1, 1]} : vector<32x384xf32> to vector<32x128xf32>
    %c0_6 = arith.constant 0 : index
    %c0_7 = arith.constant 0 : index
    %12 = vector.load %arg5[%c0_6, %c0_7] : memref<128x128xbf16, #tpu.memory_space<vmem>>, vector<128x128xbf16>
    %13 = tpu.iota {dimensions = array<i32: 1>} : vector<32x32xi32>
    %14 = vector.broadcast %1 : i32 to vector<32x32xi32>
    %15 = arith.cmpi slt, %13, %14 : vector<32x32xi32>
    %cst_8 = arith.constant 0.000000e+00 : f32
    %cst_9 = arith.constant -1.000000e+09 : f32
    %16 = vector.broadcast %cst_8 : f32 to vector<32x32xf32>
    %17 = vector.broadcast %cst_9 : f32 to vector<32x32xf32>
    %18 = arith.select %15, %16, %17 : vector<32x32xi1>, vector<32x32xf32>
    %cst_10 = arith.constant 0.000000e+00 : f32
    %19 = vector.broadcast %cst_10 : f32 to vector<32x128xf32>
    %20 = vector.extract_strided_slice %9 {offsets = [0, 0], sizes = [32, 64], strides = [1, 1]} : vector<32x128xf32> to vector<32x64xf32>
    %21 = arith.truncf %20 : vector<32x64xf32> to vector<32x64xbf16>
    %22 = vector.extract_strided_slice %10 {offsets = [0, 0], sizes = [32, 64], strides = [1, 1]} : vector<32x128xf32> to vector<32x64xf32>
    %23 = arith.truncf %22 : vector<32x64xf32> to vector<32x64xbf16>
    %24 = vector.extract_strided_slice %11 {offsets = [0, 0], sizes = [32, 64], strides = [1, 1]} : vector<32x128xf32> to vector<32x64xf32>
    %25 = arith.truncf %24 : vector<32x64xf32> to vector<32x64xbf16>
    %cst_11 = arith.constant dense<0.000000e+00> : vector<32x32xf32>
    %26 = tpu.matmul %21, %23, %cst_11 {dimension_numbers = #tpu.dot_dimension_numbers<[1], [1], [0], [0], [0, 0, 1, 0], [], []>} : vector<32x64xbf16>, vector<32x64xbf16>, vector<32x32xf32> -> vector<32x32xf32>
    %cst_12 = arith.constant 1.250000e-01 : f32
    %27 = vector.broadcast %cst_12 : f32 to vector<32x32xf32>
    %28 = arith.mulf %26, %27 : vector<32x32xf32>
    %29 = arith.addf %28, %18 : vector<32x32xf32>
    %cst_13 = arith.constant dense<0xFF800000> : vector<32xf32>
    %30 = vector.multi_reduction <maximumf>, %29, %cst_13 [1] : vector<32x32xf32> to vector<32xf32>
    %31 = vector.shape_cast %30 : vector<32xf32> to vector<32x1xf32>
    %32 = vector.broadcast %31 : vector<32x1xf32> to vector<32x32xf32>
    %33 = arith.subf %29, %32 : vector<32x32xf32>
    %34 = math.exp %33 : vector<32x32xf32>
    %cst_14 = arith.constant dense<0.000000e+00> : vector<32xf32>
    %35 = vector.multi_reduction <add>, %34, %cst_14 [1] : vector<32x32xf32> to vector<32xf32>
    %36 = vector.shape_cast %35 : vector<32xf32> to vector<32x1xf32>
    %37 = tpu.reciprocal %36 : vector<32x1xf32> -> vector<32x1xf32>
    %38 = vector.broadcast %37 : vector<32x1xf32> to vector<32x32xf32>
    %39 = arith.mulf %34, %38 : vector<32x32xf32>
    %40 = arith.truncf %39 : vector<32x32xf32> to vector<32x32xbf16>
    %cst_15 = arith.constant dense<0.000000e+00> : vector<32x64xf32>
    %41 = tpu.matmul %40, %25, %cst_15 {dimension_numbers = #tpu.dot_dimension_numbers<[1], [0], [0], [1], [0, 0, 1, 1], [], []>} : vector<32x32xbf16>, vector<32x64xbf16>, vector<32x64xf32> -> vector<32x64xf32>
    %42 = arith.truncf %41 : vector<32x64xf32> to vector<32x64xbf16>
    %43 = vector.extract_strided_slice %12 {offsets = [0, 0], sizes = [64, 128], strides = [1, 1]} : vector<128x128xbf16> to vector<64x128xbf16>
    %cst_16 = arith.constant dense<0.000000e+00> : vector<32x128xf32>
    %44 = tpu.matmul %42, %43, %cst_16 {dimension_numbers = #tpu.dot_dimension_numbers<[1], [0], [0], [1], [0, 0, 1, 1], [], []>} : vector<32x64xbf16>, vector<64x128xbf16>, vector<32x128xf32> -> vector<32x128xf32>
    %45 = arith.addf %19, %44 : vector<32x128xf32>
    %46 = vector.extract_strided_slice %9 {offsets = [0, 64], sizes = [32, 64], strides = [1, 1]} : vector<32x128xf32> to vector<32x64xf32>
    %47 = arith.truncf %46 : vector<32x64xf32> to vector<32x64xbf16>
    %48 = vector.extract_strided_slice %10 {offsets = [0, 64], sizes = [32, 64], strides = [1, 1]} : vector<32x128xf32> to vector<32x64xf32>
    %49 = arith.truncf %48 : vector<32x64xf32> to vector<32x64xbf16>
    %50 = vector.extract_strided_slice %11 {offsets = [0, 64], sizes = [32, 64], strides = [1, 1]} : vector<32x128xf32> to vector<32x64xf32>
    %51 = arith.truncf %50 : vector<32x64xf32> to vector<32x64xbf16>
    %cst_17 = arith.constant dense<0.000000e+00> : vector<32x32xf32>
    %52 = tpu.matmul %47, %49, %cst_17 {dimension_numbers = #tpu.dot_dimension_numbers<[1], [1], [0], [0], [0, 0, 1, 0], [], []>} : vector<32x64xbf16>, vector<32x64xbf16>, vector<32x32xf32> -> vector<32x32xf32>
    %cst_18 = arith.constant 1.250000e-01 : f32
    %53 = vector.broadcast %cst_18 : f32 to vector<32x32xf32>
    %54 = arith.mulf %52, %53 : vector<32x32xf32>
    %55 = arith.addf %54, %18 : vector<32x32xf32>
    %cst_19 = arith.constant dense<0xFF800000> : vector<32xf32>
    %56 = vector.multi_reduction <maximumf>, %55, %cst_19 [1] : vector<32x32xf32> to vector<32xf32>
    %57 = vector.shape_cast %56 : vector<32xf32> to vector<32x1xf32>
    %58 = vector.broadcast %57 : vector<32x1xf32> to vector<32x32xf32>
    %59 = arith.subf %55, %58 : vector<32x32xf32>
    %60 = math.exp %59 : vector<32x32xf32>
    %cst_20 = arith.constant dense<0.000000e+00> : vector<32xf32>
    %61 = vector.multi_reduction <add>, %60, %cst_20 [1] : vector<32x32xf32> to vector<32xf32>
    %62 = vector.shape_cast %61 : vector<32xf32> to vector<32x1xf32>
    %63 = tpu.reciprocal %62 : vector<32x1xf32> -> vector<32x1xf32>
    %64 = vector.broadcast %63 : vector<32x1xf32> to vector<32x32xf32>
    %65 = arith.mulf %60, %64 : vector<32x32xf32>
    %66 = arith.truncf %65 : vector<32x32xf32> to vector<32x32xbf16>
    %cst_21 = arith.constant dense<0.000000e+00> : vector<32x64xf32>
    %67 = tpu.matmul %66, %51, %cst_21 {dimension_numbers = #tpu.dot_dimension_numbers<[1], [0], [0], [1], [0, 0, 1, 1], [], []>} : vector<32x32xbf16>, vector<32x64xbf16>, vector<32x64xf32> -> vector<32x64xf32>
    %68 = arith.truncf %67 : vector<32x64xf32> to vector<32x64xbf16>
    %69 = vector.extract_strided_slice %12 {offsets = [64, 0], sizes = [64, 128], strides = [1, 1]} : vector<128x128xbf16> to vector<64x128xbf16>
    %cst_22 = arith.constant dense<0.000000e+00> : vector<32x128xf32>
    %70 = tpu.matmul %68, %69, %cst_22 {dimension_numbers = #tpu.dot_dimension_numbers<[1], [0], [0], [1], [0, 0, 1, 1], [], []>} : vector<32x64xbf16>, vector<64x128xbf16>, vector<32x128xf32> -> vector<32x128xf32>
    %71 = arith.addf %45, %70 : vector<32x128xf32>
    %c0_23 = arith.constant 0 : index
    %c0_24 = arith.constant 0 : index
    %72 = vector.load %arg6[%c0_23, %c0_24] : memref<1x128xf32, #tpu.memory_space<vmem>>, vector<1x128xf32>
    %73 = vector.broadcast %72 : vector<1x128xf32> to vector<32x128xf32>
    %74 = arith.addf %71, %73 : vector<32x128xf32>
    %75 = arith.extf %3 : vector<32x128xbf16> to vector<32x128xf32>
    %76 = arith.addf %74, %75 : vector<32x128xf32>
    %c0_25 = arith.constant 0 : index
    %c0_26 = arith.constant 0 : index
    %77 = vector.load %arg7[%c0_25, %c0_26] : memref<1x128xf32, #tpu.memory_space<vmem>>, vector<1x128xf32>
    %c0_27 = arith.constant 0 : index
    %c0_28 = arith.constant 0 : index
    %78 = vector.load %arg8[%c0_27, %c0_28] : memref<1x128xf32, #tpu.memory_space<vmem>>, vector<1x128xf32>
    %cst_29 = arith.constant dense<0.000000e+00> : vector<32xf32>
    %79 = vector.multi_reduction <add>, %76, %cst_29 [1] : vector<32x128xf32> to vector<32xf32>
    %80 = vector.shape_cast %79 : vector<32xf32> to vector<32x1xf32>
    %cst_30 = arith.constant 1.280000e+02 : f32
    %81 = vector.broadcast %cst_30 : f32 to vector<32x1xf32>
    %82 = arith.divf %80, %81 : vector<32x1xf32>
    %83 = vector.broadcast %82 : vector<32x1xf32> to vector<32x128xf32>
    %84 = arith.subf %76, %83 : vector<32x128xf32>
    %85 = arith.mulf %84, %84 : vector<32x128xf32>
    %cst_31 = arith.constant dense<0.000000e+00> : vector<32xf32>
    %86 = vector.multi_reduction <add>, %85, %cst_31 [1] : vector<32x128xf32> to vector<32xf32>
    %87 = vector.shape_cast %86 : vector<32xf32> to vector<32x1xf32>
    %cst_32 = arith.constant 1.280000e+02 : f32
    %88 = vector.broadcast %cst_32 : f32 to vector<32x1xf32>
    %89 = arith.divf %87, %88 : vector<32x1xf32>
    %90 = vector.broadcast %82 : vector<32x1xf32> to vector<32x128xf32>
    %91 = arith.subf %76, %90 : vector<32x128xf32>
    %cst_33 = arith.constant 9.99999974E-6 : f32
    %92 = vector.broadcast %cst_33 : f32 to vector<32x1xf32>
    %93 = arith.addf %89, %92 : vector<32x1xf32>
    %94 = math.rsqrt %93 : vector<32x1xf32>
    %95 = vector.broadcast %94 : vector<32x1xf32> to vector<32x128xf32>
    %96 = arith.mulf %91, %95 : vector<32x128xf32>
    %97 = vector.broadcast %77 : vector<1x128xf32> to vector<32x128xf32>
    %98 = arith.mulf %96, %97 : vector<32x128xf32>
    %99 = vector.broadcast %78 : vector<1x128xf32> to vector<32x128xf32>
    %100 = arith.addf %98, %99 : vector<32x128xf32>
    %101 = arith.truncf %100 : vector<32x128xf32> to vector<32x128xbf16>
    %c0_34 = arith.constant 0 : index
    %c0_35 = arith.constant 0 : index
    %c0_36 = arith.constant 0 : index
    %102 = vector.load %arg9[%c0_34, %c0_35, %c0_36] : memref<1x32x128xbf16, #tpu.memory_space<vmem>>, vector<1x32x128xbf16>
    %103 = vector.shape_cast %102 : vector<1x32x128xbf16> to vector<32x128xbf16>
    %104 = vector.shape_cast %101 : vector<32x128xbf16> to vector<1x32x128xbf16>
    tpu.vector_store %arg9[%c0_34, %c0_35, %c0_36], %104 {strides = array<i32>} : memref<1x32x128xbf16, #tpu.memory_space<vmem>>, vector<1x32x128xbf16>,
    return
  }
  func.func @transform_0(%arg0: i32, %arg1: memref<2xi32, #tpu.memory_space<smem>>) -> (i32, i32, i32) {
    %c0_i32 = arith.constant 0 : i32
    %c0_i32_0 = arith.constant 0 : i32
    %c0_i32_1 = arith.constant 0 : i32
    return %arg0, %c0_i32, %c0_i32_0 : i32, i32, i32
  }
  func.func @transform_1(%arg0: i32, %arg1: memref<2xi32, #tpu.memory_space<smem>>) -> (i32, i32) {
    %c0_i32 = arith.constant 0 : i32
    %c0_i32_0 = arith.constant 0 : i32
    %c0_i32_1 = arith.constant 0 : i32
    return %c0_i32, %c0_i32_0 : i32, i32
  }
  func.func @transform_2(%arg0: i32, %arg1: memref<2xi32, #tpu.memory_space<smem>>) -> (i32, i32) {
    %c0_i32 = arith.constant 0 : i32
    %c0_i32_0 = arith.constant 0 : i32
    %c0_i32_1 = arith.constant 0 : i32
    return %c0_i32, %c0_i32_0 : i32, i32
  }
  func.func @transform_3(%arg0: i32, %arg1: memref<2xi32, #tpu.memory_space<smem>>) -> (i32, i32) {
    %c0_i32 = arith.constant 0 : i32
    %c0_i32_0 = arith.constant 0 : i32
    %c0_i32_1 = arith.constant 0 : i32
    return %c0_i32, %c0_i32_0 : i32, i32
  }
  func.func @transform_4(%arg0: i32, %arg1: memref<2xi32, #tpu.memory_space<smem>>) -> (i32, i32) {
    %c0_i32 = arith.constant 0 : i32
    %c0_i32_0 = arith.constant 0 : i32
    %c0_i32_1 = arith.constant 0 : i32
    return %c0_i32, %c0_i32_0 : i32, i32
  }
  func.func @transform_5(%arg0: i32, %arg1: memref<2xi32, #tpu.memory_space<smem>>) -> (i32, i32) {
    %c0_i32 = arith.constant 0 : i32
    %c0_i32_0 = arith.constant 0 : i32
    %c0_i32_1 = arith.constant 0 : i32
    return %c0_i32, %c0_i32_0 : i32, i32
  }
  func.func @transform_6(%arg0: i32, %arg1: memref<2xi32, #tpu.memory_space<smem>>) -> (i32, i32) {
    %c0_i32 = arith.constant 0 : i32
    %c0_i32_0 = arith.constant 0 : i32
    %c0_i32_1 = arith.constant 0 : i32
    return %c0_i32, %c0_i32_0 : i32, i32
  }
  func.func @transform_7(%arg0: i32, %arg1: memref<2xi32, #tpu.memory_space<smem>>) -> (i32, i32, i32) {
    %c0_i32 = arith.constant 0 : i32
    %c0_i32_0 = arith.constant 0 : i32
    %c0_i32_1 = arith.constant 0 : i32
    return %arg0, %c0_i32, %c0_i32_0 : i32, i32, i32
  }
}

module attributes {stable_mosaic.version = 11 : i64} {
  func.func @_logits_kernel(%arg0: i32, %arg1: i32, %arg2: memref<64x128xbf16, #tpu.memory_space<vmem>>, %arg3: memref<128x128xbf16, #tpu.memory_space<vmem>>, %arg4: memref<1x128xf32, #tpu.memory_space<vmem>>, %arg5: memref<64x128xf32, #tpu.memory_space<vmem>>) attributes {dimension_semantics = [#tpu.dimension_semantics<parallel>, #tpu.dimension_semantics<parallel>], iteration_bounds = array<i64: 1, 1>, scalar_prefetch = 0 : i64, scratch_operands = 0 : i64, tpu.core_type = #tpu.core_type<tc>, window_params = [{transform_indices = @transform_0, window_bounds = array<i64: 64, 128>}, {transform_indices = @transform_1, window_bounds = array<i64: 128, 128>}, {transform_indices = @transform_2, window_bounds = array<i64: 1, 128>}, {transform_indices = @transform_3, window_bounds = array<i64: 64, 128>}]} {
    %c0 = arith.constant 0 : index
    %c0_0 = arith.constant 0 : index
    %0 = vector.load %arg2[%c0, %c0_0] : memref<64x128xbf16, #tpu.memory_space<vmem>>, vector<64x128xbf16>
    %c0_1 = arith.constant 0 : index
    %c0_2 = arith.constant 0 : index
    %1 = vector.load %arg3[%c0_1, %c0_2] : memref<128x128xbf16, #tpu.memory_space<vmem>>, vector<128x128xbf16>
    %cst = arith.constant dense<0.000000e+00> : vector<64x128xf32>
    %2 = tpu.matmul %0, %1, %cst {dimension_numbers = #tpu.dot_dimension_numbers<[1], [0], [0], [1], [0, 0, 1, 1], [], []>} : vector<64x128xbf16>, vector<128x128xbf16>, vector<64x128xf32> -> vector<64x128xf32>
    %c0_3 = arith.constant 0 : index
    %c0_4 = arith.constant 0 : index
    %3 = vector.load %arg4[%c0_3, %c0_4] : memref<1x128xf32, #tpu.memory_space<vmem>>, vector<1x128xf32>
    %4 = vector.broadcast %3 : vector<1x128xf32> to vector<64x128xf32>
    %5 = arith.addf %2, %4 : vector<64x128xf32>
    %c0_5 = arith.constant 0 : index
    %c0_6 = arith.constant 0 : index
    %6 = vector.load %arg5[%c0_5, %c0_6] : memref<64x128xf32, #tpu.memory_space<vmem>>, vector<64x128xf32>
    tpu.vector_store %arg5[%c0_5, %c0_6], %5 {strides = array<i32>} : memref<64x128xf32, #tpu.memory_space<vmem>>, vector<64x128xf32>,
    return
  }
  func.func @transform_0(%arg0: i32, %arg1: i32) -> (i32, i32) {
    %c0_i32 = arith.constant 0 : i32
    %c0_i32_0 = arith.constant 0 : i32
    return %arg0, %c0_i32 : i32, i32
  }
  func.func @transform_1(%arg0: i32, %arg1: i32) -> (i32, i32) {
    %c0_i32 = arith.constant 0 : i32
    %c0_i32_0 = arith.constant 0 : i32
    return %c0_i32, %arg1 : i32, i32
  }
  func.func @transform_2(%arg0: i32, %arg1: i32) -> (i32, i32) {
    %c0_i32 = arith.constant 0 : i32
    %c0_i32_0 = arith.constant 0 : i32
    return %c0_i32, %arg1 : i32, i32
  }
  func.func @transform_3(%arg0: i32, %arg1: i32) -> (i32, i32) {
    %c0_i32 = arith.constant 0 : i32
    return %arg0, %arg1 : i32, i32
  }
}

</mosaic_0001>

<llo_original>
// kernel: transformer_forward.12
$region0: #{transformer_forward.12}
  #allocation0 [shape = 'u32[]', space=smem, size = 0x4, offset = 0x4, fixed_abs, tag = 'smem constant byte address 0x4 - core index']
  #allocation1 [shape = 'u32[144,128]{1,0:T(1,128)}', space=vmem, size = 0x12000, scoped, tag = 'internal scratch']
  %s0 = inlined_call_operand.vmem [shape: bf16[64,128], index: 0, kind: input, shape index: {}]
  %s1 = inlined_call_operand.vmem [shape: bf16[128,256], index: 1, kind: input, shape index: {}]
  %s2 = inlined_call_operand.vmem [shape: f32[1,256], index: 2, kind: input, shape index: {}]
  %s3 = inlined_call_operand.vmem [shape: bf16[256,128], index: 3, kind: input, shape index: {}]
  %s4 = inlined_call_operand.vmem [shape: f32[1,128], index: 4, kind: input, shape index: {}]
  %s5 = inlined_call_operand.vmem [shape: f32[1,128], index: 5, kind: input, shape index: {}]
  %s6 = inlined_call_operand.vmem [shape: f32[1,128], index: 6, kind: input, shape index: {}]
  %s7 = inlined_call_operand.vmem [shape: bf16[64,128], index: 7, kind: output, shape index: {}]
  %s8 = sld [smem:[#allocation0]]
  $region38: #{transformer_forward.12} parent=0
    _
  %s10 = ssub.s32 1, %s8
  %s11 = scalar_select 0, %s10, %s8
  // Predicated region
  $region2: #{transformer_forward.12} parent=0 // pred_check
    _
  $region3: #{transformer_forward.12} parent=0 // pred_check_branch
    %13 = sbr.rel (0) target = $region5
  $region4: #{transformer_forward.12} parent=0 // pred_region
    _
  $region5: #{transformer_forward.12} parent=0 // pred_fallthru
    _
  // Predicated region
  $region6: #{transformer_forward.12} parent=0 // pred_check
    _
  $region7: #{transformer_forward.12} parent=0 // pred_check_branch
    %15 = sbr.rel (0) target = $region9
  $region8: #{transformer_forward.12} parent=0 // pred_region
    _
  $region9: #{transformer_forward.12} parent=0 // pred_fallthru
    _
  // Predicated region
  $region10: #{transformer_forward.12} parent=0 // pred_check
    _
  $region11: #{transformer_forward.12} parent=0 // pred_check_branch
    %17 = sbr.rel (0) target = $region13
  $region12: #{transformer_forward.12} parent=0 // pred_region
    _
  $region13: #{transformer_forward.12} parent=0 // pred_fallthru
    _
  // Predicated region
  $region14: #{transformer_forward.12} parent=0 // pred_check
    _
  $region15: #{transformer_forward.12} parent=0 // pred_check_branch
    %19 = sbr.rel (0) target = $region17
  $region16: #{transformer_forward.12} parent=0 // pred_region
    _
  $region17: #{transformer_forward.12} parent=0 // pred_fallthru
    _
  // Predicated region
  $region18: #{transformer_forward.12} parent=0 // pred_check
    _
  $region19: #{transformer_forward.12} parent=0 // pred_check_branch
    %21 = sbr.rel (0) target = $region21
  $region20: #{transformer_forward.12} parent=0 // pred_region
    _
  $region21: #{transformer_forward.12} parent=0 // pred_fallthru
    _
  // Predicated region
  $region22: #{transformer_forward.12} parent=0 // pred_check
    _
  $region23: #{transformer_forward.12} parent=0 // pred_check_branch
    %23 = sbr.rel (0) target = $region25
  $region24: #{transformer_forward.12} parent=0 // pred_region
    _
  $region25: #{transformer_forward.12} parent=0 // pred_fallthru
    _
  // Predicated region
  $region26: #{transformer_forward.12} parent=0 // pred_check
    _
  $region27: #{transformer_forward.12} parent=0 // pred_check_branch
    %25 = sbr.rel (0) target = $region29
  $region28: #{transformer_forward.12} parent=0 // pred_region
    _
  $region29: #{transformer_forward.12} parent=0 // pred_fallthru
    _
  %v27 = vld [vmem:[%s0] sm:$0xf]
  %v28 = vld [vmem:[%s0 + $0x4] sm:$0xf]
  %v29 = vld [vmem:[%s0 + $0x8] sm:$0xf]
  %v30 = vld [vmem:[%s0 + $0xc] sm:$0xf]
  %v31 = vld [vmem:[%s0 + $0x10] sm:$0xf]
  %v32 = vld [vmem:[%s0 + $0x14] sm:$0xf]
  %v33 = vld [vmem:[%s0 + $0x18] sm:$0xf]
  %v34 = vld [vmem:[%s0 + $0x1c] sm:$0xf]
  %v35 = vld [vmem:[%s1] sm:$0xff]
  %v36 = vld [vmem:[%s1 + $0x8] sm:$0xff]
  %v37 = vld [vmem:[%s1 + $0x10] sm:$0xff]
  %v38 = vld [vmem:[%s1 + $0x18] sm:$0xff]
  %v39 = vld [vmem:[%s1 + $0x20] sm:$0xff]
  %v40 = vld [vmem:[%s1 + $0x28] sm:$0xff]
  %v41 = vld [vmem:[%s1 + $0x30] sm:$0xff]
  %v42 = vld [vmem:[%s1 + $0x38] sm:$0xff]
  %v43 = vld [vmem:[%s1 + $0x40] sm:$0xff]
  %v44 = vld [vmem:[%s1 + $0x48] sm:$0xff]
  %v45 = vld [vmem:[%s1 + $0x50] sm:$0xff]
  %v46 = vld [vmem:[%s1 + $0x58] sm:$0xff]
  %v47 = vld [vmem:[%s1 + $0x60] sm:$0xff]
  %v48 = vld [vmem:[%s1 + $0x68] sm:$0xff]
  %v49 = vld [vmem:[%s1 + $0x70] sm:$0xff]
  %v50 = vld [vmem:[%s1 + $0x78] sm:$0xff]
  %v51 = vld [vmem:[%s2] sm:$0x3]
  %v53 = vlaneseq
  %v54 = vshrl.u32 %v53, 7
  %v55 = vsub.s32 0, %v54
  %v56 = vrot.slane %v51, %v55
  %v57 = vlaneseq
  %v58 = vshrl.u32 %v57, 7
  %v59 = vsub.s32 1, %v58
  %v60 = vrot.slane %v51, %v59
  %v71 = vunpack.c.l.b16 %v27
  %v72 = vunpack.c.l.b16 %v28
  %v73 = vunpack.c.l.b16 %v29
  %v74 = vunpack.c.l.b16 %v30
  %v75 = vunpack.c.l.b16 %v31
  %v76 = vunpack.c.l.b16 %v32
  %v77 = vunpack.c.l.b16 %v33
  %v78 = vunpack.c.l.b16 %v34
  %v79 = vpack.c.b16 %v72, %v71
  %v80 = vpack.c.b16 %v74, %v73
  %v81 = vpack.c.b16 %v76, %v75
  %v82 = vpack.c.b16 %v78, %v77
  %v103 = vunpack.c.l.b16 %v35
  %v104 = vunpack.c.h.b16 %v35
  %v105 = vunpack.c.l.b16 %v36
  %v106 = vunpack.c.h.b16 %v36
  %v107 = vunpack.c.l.b16 %v37
  %v108 = vunpack.c.h.b16 %v37
  %v109 = vunpack.c.l.b16 %v38
  %v110 = vunpack.c.h.b16 %v38
  %v111 = vunpack.c.l.b16 %v39
  %v112 = vunpack.c.h.b16 %v39
  %v113 = vunpack.c.l.b16 %v40
  %v114 = vunpack.c.h.b16 %v40
  %v115 = vunpack.c.l.b16 %v41
  %v116 = vunpack.c.h.b16 %v41
  %v117 = vunpack.c.l.b16 %v42
  %v118 = vunpack.c.h.b16 %v42
  %v119 = vunpack.c.l.b16 %v43
  %v120 = vunpack.c.h.b16 %v43
  %v121 = vunpack.c.l.b16 %v44
  %v122 = vunpack.c.h.b16 %v44
  %v123 = vunpack.c.l.b16 %v45
  %v124 = vunpack.c.h.b16 %v45
  %v125 = vunpack.c.l.b16 %v46
  %v126 = vunpack.c.h.b16 %v46
  %v127 = vunpack.c.l.b16 %v47
  %v128 = vunpack.c.h.b16 %v47
  %v129 = vunpack.c.l.b16 %v48
  %v130 = vunpack.c.h.b16 %v48
  %v131 = vunpack.c.l.b16 %v49
  %v132 = vunpack.c.h.b16 %v49
  %v133 = vunpack.c.l.b16 %v50
  %v134 = vunpack.c.h.b16 %v50
  %v135 = vpack.c.b16 %v105, %v103
  %v136 = vpack.c.b16 %v106, %v104
  %v137 = vpack.c.b16 %v109, %v107
  %v138 = vpack.c.b16 %v110, %v108
  %v139 = vpack.c.b16 %v113, %v111
  %v140 = vpack.c.b16 %v114, %v112
  %v141 = vpack.c.b16 %v117, %v115
  %v142 = vpack.c.b16 %v118, %v116
  %v143 = vpack.c.b16 %v121, %v119
  %v144 = vpack.c.b16 %v122, %v120
  %v145 = vpack.c.b16 %v125, %v123
  %v146 = vpack.c.b16 %v126, %v124
  %v147 = vpack.c.b16 %v129, %v127
  %v148 = vpack.c.b16 %v130, %v128
  %v149 = vpack.c.b16 %v133, %v131
  %v150 = vpack.c.b16 %v134, %v132
  %167 = vmatprep.subr.bf16.mxu0 %v136
  %168 = vmatpush1.bf16.msra.mxu0 %v135
  %169 = vmatprep.subr.bf16.mxu0 %v138
  %170 = vmatpush1.bf16.msra.mxu0 %v137
  %171 = vmatprep.subr.bf16.mxu0 %v140
  %172 = vmatpush1.bf16.msra.mxu0 %v139
  %173 = vmatprep.subr.bf16.mxu0 %v142
  %174 = vmatpush1.bf16.msra.mxu0 %v141
  %175 = vmatprep.subr.bf16.mxu0 %v144
  %176 = vmatpush1.bf16.msra.mxu0 %v143
  %177 = vmatprep.subr.bf16.mxu0 %v146
  %178 = vmatpush1.bf16.msra.mxu0 %v145
  %179 = vmatprep.subr.bf16.mxu0 %v148
  %180 = vmatpush1.bf16.msra.mxu0 %v147
  %181 = vmatprep.subr.bf16.mxu0 %v150
  %182 = vmatpush1.bf16.msra.mxu0 %v149
  %183 = vmatprep.subr.bf16.mxu0 0
  %184 = vmatpush1.bf16.msra.mxu0 0
  %185 = vmatprep.subr.bf16.mxu0 0
  %186 = vmatpush1.bf16.msra.mxu0 0
  %187 = vmatprep.subr.bf16.mxu0 0
  %188 = vmatpush1.bf16.msra.mxu0 0
  %189 = vmatprep.subr.bf16.mxu0 0
  %190 = vmatpush1.bf16.msra.mxu0 0
  %191 = vmatprep.subr.bf16.mxu0 0
  %192 = vmatpush1.bf16.msra.mxu0 0
  %193 = vmatprep.subr.bf16.mxu0 0
  %194 = vmatpush1.bf16.msra.mxu0 0
  %195 = vmatprep.subr.bf16.mxu0 0
  %196 = vmatpush1.bf16.msra.mxu0 0
  %197 = vmatprep.subr.bf16.mxu0 0
  %198 = vmatpush1.bf16.msra.mxu0 0
  %199 = vmatprep.mubr.bf16.mxu0 0
  %200 = vmatmul.mubr.bf16.gmra.mrb[0].mxu0 %v79
  %v201 = vpop.f32.mrb[0].mxu0
  %v202 = vadd.f32 %v56, %v201
  %v203 = vpop.f32.mrb[0].mxu0
  %v204 = vadd.f32 %v60, %v203
  %v205 = vpop.f32.mrb[0].mxu0
  %v206 = vadd.f32 %v56, %v205
  %v207 = vpop.f32.mrb[0].mxu0
  %v208 = vadd.f32 %v60, %v207
  %209 = vmatprep.mubr.bf16.mxu0 0
  %210 = vmatmul.mubr.bf16.gmra.mrb[0].mxu0 %v80
  %v211 = vpop.f32.mrb[0].mxu0
  %v212 = vadd.f32 %v56, %v211
  %v213 = vpop.f32.mrb[0].mxu0
  %v214 = vadd.f32 %v60, %v213
  %v215 = vpop.f32.mrb[0].mxu0
  %v216 = vadd.f32 %v56, %v215
  %v217 = vpop.f32.mrb[0].mxu0
  %v218 = vadd.f32 %v60, %v217
  %219 = vmatprep.mubr.bf16.mxu0 0
  %220 = vmatmul.mubr.bf16.gmra.mrb[0].mxu0 %v81
  %v221 = vpop.f32.mrb[0].mxu0
  %v222 = vadd.f32 %v56, %v221
  %v223 = vpop.f32.mrb[0].mxu0
  %v224 = vadd.f32 %v60, %v223
  %v225 = vpop.f32.mrb[0].mxu0
  %v226 = vadd.f32 %v56, %v225
  %v227 = vpop.f32.mrb[0].mxu0
  %v228 = vadd.f32 %v60, %v227
  %229 = vmatprep.mubr.bf16.mxu0 0
  %230 = vmatmul.mubr.bf16.gmra.mrb[0].mxu0 %v82
  %v231 = vpop.f32.mrb[0].mxu0
  %v232 = vadd.f32 %v56, %v231
  %v233 = vpop.f32.mrb[0].mxu0
  %v234 = vadd.f32 %v60, %v233
  %v235 = vpop.f32.mrb[0].mxu0
  %v236 = vadd.f32 %v56, %v235
  %v237 = vpop.f32.mrb[0].mxu0
  %v238 = vadd.f32 %v60, %v237
  %239 = vdwg.mxu0
  %v240 = vmax.f32 %v202, 0.0
  %v241 = vmax.f32 %v204, 0.0
  %v242 = vmax.f32 %v206, 0.0
  %v243 = vmax.f32 %v208, 0.0
  %v244 = vmax.f32 %v212, 0.0
  %v245 = vmax.f32 %v214, 0.0
  %v246 = vmax.f32 %v216, 0.0
  %v247 = vmax.f32 %v218, 0.0
  %v248 = vmax.f32 %v222, 0.0
  %v249 = vmax.f32 %v224, 0.0
  %v250 = vmax.f32 %v226, 0.0
  %v251 = vmax.f32 %v228, 0.0
  %v252 = vmax.f32 %v232, 0.0
  %v253 = vmax.f32 %v234, 0.0
  %v254 = vmax.f32 %v236, 0.0
  %v255 = vmax.f32 %v238, 0.0
  %v256 = vpack.c.bf16 %v242, %v240
  %v257 = vpack.c.bf16 %v243, %v241
  %v258 = vpack.c.bf16 %v246, %v244
  %v259 = vpack.c.bf16 %v247, %v245
  %v260 = vpack.c.bf16 %v250, %v248
  %v261 = vpack.c.bf16 %v251, %v249
  %v262 = vpack.c.bf16 %v254, %v252
  %v263 = vpack.c.bf16 %v255, %v253
  %v264 = vld [vmem:[%s3] sm:$0xf]
  %v265 = vld [vmem:[%s3 + $0x4] sm:$0xf]
  %v266 = vld [vmem:[%s3 + $0x8] sm:$0xf]
  %v267 = vld [vmem:[%s3 + $0xc] sm:$0xf]
  %v268 = vld [vmem:[%s3 + $0x10] sm:$0xf]
  %v269 = vld [vmem:[%s3 + $0x14] sm:$0xf]
  %v270 = vld [vmem:[%s3 + $0x18] sm:$0xf]
  %v271 = vld [vmem:[%s3 + $0x1c] sm:$0xf]
  %v272 = vld [vmem:[%s3 + $0x20] sm:$0xf]
  %v273 = vld [vmem:[%s3 + $0x24] sm:$0xf]
  %v274 = vld [vmem:[%s3 + $0x28] sm:$0xf]
  %v275 = vld [vmem:[%s3 + $0x2c] sm:$0xf]
  %v276 = vld [vmem:[%s3 + $0x30] sm:$0xf]
  %v277 = vld [vmem:[%s3 + $0x34] sm:$0xf]
  %v278 = vld [vmem:[%s3 + $0x38] sm:$0xf]
  %v279 = vld [vmem:[%s3 + $0x3c] sm:$0xf]
  %v280 = vld [vmem:[%s3 + $0x40] sm:$0xf]
  %v281 = vld [vmem:[%s3 + $0x44] sm:$0xf]
  %v282 = vld [vmem:[%s3 + $0x48] sm:$0xf]
  %v283 = vld [vmem:[%s3 + $0x4c] sm:$0xf]
  %v284 = vld [vmem:[%s3 + $0x50] sm:$0xf]
  %v285 = vld [vmem:[%s3 + $0x54] sm:$0xf]
  %v286 = vld [vmem:[%s3 + $0x58] sm:$0xf]
  %v287 = vld [vmem:[%s3 + $0x5c] sm:$0xf]
  %v288 = vld [vmem:[%s3 + $0x60] sm:$0xf]
  %v289 = vld [vmem:[%s3 + $0x64] sm:$0xf]
  %v290 = vld [vmem:[%s3 + $0x68] sm:$0xf]
  %v291 = vld [vmem:[%s3 + $0x6c] sm:$0xf]
  %v292 = vld [vmem:[%s3 + $0x70] sm:$0xf]
  %v293 = vld [vmem:[%s3 + $0x74] sm:$0xf]
  %v294 = vld [vmem:[%s3 + $0x78] sm:$0xf]
  %v295 = vld [vmem:[%s3 + $0x7c] sm:$0xf]
  %v296 = vld [vmem:[%s4] sm:$0x1]
  %v298 = vlaneseq
  %v299 = vshrl.u32 %v298, 7
  %v300 = vsub.s32 0, %v299
  %v301 = vrot.slane %v296, %v300
  %v335 = vunpack.c.l.b16 %v264
  %v336 = vunpack.c.l.b16 %v265
  %v337 = vunpack.c.l.b16 %v266
  %v338 = vunpack.c.l.b16 %v267
  %v339 = vunpack.c.l.b16 %v268
  %v340 = vunpack.c.l.b16 %v269
  %v341 = vunpack.c.l.b16 %v270
  %v342 = vunpack.c.l.b16 %v271
  %v343 = vunpack.c.l.b16 %v272
  %v344 = vunpack.c.l.b16 %v273
  %v345 = vunpack.c.l.b16 %v274
  %v346 = vunpack.c.l.b16 %v275
  %v347 = vunpack.c.l.b16 %v276
  %v348 = vunpack.c.l.b16 %v277
  %v349 = vunpack.c.l.b16 %v278
  %v350 = vunpack.c.l.b16 %v279
  %v351 = vunpack.c.l.b16 %v280
  %v352 = vunpack.c.l.b16 %v281
  %v353 = vunpack.c.l.b16 %v282
  %v354 = vunpack.c.l.b16 %v283
  %v355 = vunpack.c.l.b16 %v284
  %v356 = vunpack.c.l.b16 %v285
  %v357 = vunpack.c.l.b16 %v286
  %v358 = vunpack.c.l.b16 %v287
  %v359 = vunpack.c.l.b16 %v288
  %v360 = vunpack.c.l.b16 %v289
  %v361 = vunpack.c.l.b16 %v290
  %v362 = vunpack.c.l.b16 %v291
  %v363 = vunpack.c.l.b16 %v292
  %v364 = vunpack.c.l.b16 %v293
  %v365 = vunpack.c.l.b16 %v294
  %v366 = vunpack.c.l.b16 %v295
  %v367 = vpack.c.b16 %v336, %v335
  %v368 = vpack.c.b16 %v338, %v337
  %v369 = vpack.c.b16 %v340, %v339
  %v370 = vpack.c.b16 %v342, %v341
  %v371 = vpack.c.b16 %v344, %v343
  %v372 = vpack.c.b16 %v346, %v345
  %v373 = vpack.c.b16 %v348, %v347
  %v374 = vpack.c.b16 %v350, %v349
  %v375 = vpack.c.b16 %v352, %v351
  %v376 = vpack.c.b16 %v354, %v353
  %v377 = vpack.c.b16 %v356, %v355
  %v378 = vpack.c.b16 %v358, %v357
  %v379 = vpack.c.b16 %v360, %v359
  %v380 = vpack.c.b16 %v362, %v361
  %v381 = vpack.c.b16 %v364, %v363
  %v382 = vpack.c.b16 %v366, %v365
  %399 = vmatprep.subr.bf16.mxu0 0
  %400 = vmatpush1.bf16.msra.mxu0 %v367
  %401 = vmatprep.subr.bf16.mxu0 0
  %402 = vmatpush1.bf16.msra.mxu0 %v368
  %403 = vmatprep.subr.bf16.mxu0 0
  %404 = vmatpush1.bf16.msra.mxu0 %v369
  %405 = vmatprep.subr.bf16.mxu0 0
  %406 = vmatpush1.bf16.msra.mxu0 %v370
  %407 = vmatprep.subr.bf16.mxu0 0
  %408 = vmatpush1.bf16.msra.mxu0 %v371
  %409 = vmatprep.subr.bf16.mxu0 0
  %410 = vmatpush1.bf16.msra.mxu0 %v372
  %411 = vmatprep.subr.bf16.mxu0 0
  %412 = vmatpush1.bf16.msra.mxu0 %v373
  %413 = vmatprep.subr.bf16.mxu0 0
  %414 = vmatpush1.bf16.msra.mxu0 %v374
  %415 = vmatprep.subr.bf16.mxu0 0
  %416 = vmatpush1.bf16.msra.mxu0 %v375
  %417 = vmatprep.subr.bf16.mxu0 0
  %418 = vmatpush1.bf16.msra.mxu0 %v376
  %419 = vmatprep.subr.bf16.mxu0 0
  %420 = vmatpush1.bf16.msra.mxu0 %v377
  %421 = vmatprep.subr.bf16.mxu0 0
  %422 = vmatpush1.bf16.msra.mxu0 %v378
  %423 = vmatprep.subr.bf16.mxu0 0
  %424 = vmatpush1.bf16.msra.mxu0 %v379
  %425 = vmatprep.subr.bf16.mxu0 0
  %426 = vmatpush1.bf16.msra.mxu0 %v380
  %427 = vmatprep.subr.bf16.mxu0 0
  %428 = vmatpush1.bf16.msra.mxu0 %v381
  %429 = vmatprep.subr.bf16.mxu0 0
  %430 = vmatpush1.bf16.msra.mxu0 %v382
  %431 = vmatprep.mubr.bf16.mxu0 %v257
  %432 = vmatmul.mubr.bf16.gmra.mrb[0].mxu0 %v256
  %v433 = vpop.f32.mrb[0].mxu0
  %v434 = vadd.f32 %v301, %v433
  %v435 = vpop.f32.mrb[0].mxu0
  %v436 = vpop.f32.mrb[0].mxu0
  %v437 = vadd.f32 %v301, %v436
  %v438 = vpop.f32.mrb[0].mxu0
  %439 = vmatprep.mubr.bf16.mxu0 %v259
  %440 = vmatmul.mubr.bf16.gmra.mrb[0].mxu0 %v258
  %v441 = vpop.f32.mrb[0].mxu0
  %v442 = vadd.f32 %v301, %v441
  %v443 = vpop.f32.mrb[0].mxu0
  %v444 = vpop.f32.mrb[0].mxu0
  %v445 = vadd.f32 %v301, %v444
  %v446 = vpop.f32.mrb[0].mxu0
  %447 = vmatprep.mubr.bf16.mxu0 %v261
  %448 = vmatmul.mubr.bf16.gmra.mrb[0].mxu0 %v260
  %v449 = vpop.f32.mrb[0].mxu0
  %v450 = vadd.f32 %v301, %v449
  %v451 = vpop.f32.mrb[0].mxu0
  %v452 = vpop.f32.mrb[0].mxu0
  %v453 = vadd.f32 %v301, %v452
  %v454 = vpop.f32.mrb[0].mxu0
  %455 = vmatprep.mubr.bf16.mxu0 %v263
  %456 = vmatmul.mubr.bf16.gmra.mrb[0].mxu0 %v262
  %v457 = vpop.f32.mrb[0].mxu0
  %v458 = vadd.f32 %v301, %v457
  %v459 = vpop.f32.mrb[0].mxu0
  %v460 = vpop.f32.mrb[0].mxu0
  %v461 = vadd.f32 %v301, %v460
  %v462 = vpop.f32.mrb[0].mxu0
  %463 = vdwg.mxu0
  %v464 = vunpack.c.l.bf16 %v27
  %v465 = vunpack.c.l.bf16 %v28
  %v466 = vunpack.c.l.bf16 %v29
  %v467 = vunpack.c.l.bf16 %v30
  %v468 = vunpack.c.l.bf16 %v31
  %v469 = vunpack.c.l.bf16 %v32
  %v470 = vunpack.c.l.bf16 %v33
  %v471 = vunpack.c.l.bf16 %v34
  %v472 = vadd.f32 %v434, %v464
  %v473 = vadd.f32 %v437, %v465
  %v474 = vadd.f32 %v442, %v466
  %v475 = vadd.f32 %v445, %v467
  %v476 = vadd.f32 %v450, %v468
  %v477 = vadd.f32 %v453, %v469
  %v478 = vadd.f32 %v458, %v470
  %v479 = vadd.f32 %v461, %v471
  %v480 = vld [vmem:[%s5] sm:$0x1]
  %v481 = vld [vmem:[%s6] sm:$0x1]
  %482 = vadd.xlane.f32.xlu0 %v472
  %v483 = vpop.xlane.xlu0 %482
  %484 = vadd.xlane.f32.xlu0 %v473
  %v485 = vpop.xlane.xlu0 %484
  %486 = vadd.xlane.f32.xlu0 %v474
  %v487 = vpop.xlane.xlu0 %486
  %488 = vadd.xlane.f32.xlu0 %v475
  %v489 = vpop.xlane.xlu0 %488
  %490 = vadd.xlane.f32.xlu0 %v476
  %v491 = vpop.xlane.xlu0 %490
  %492 = vadd.xlane.f32.xlu0 %v477
  %v493 = vpop.xlane.xlu0 %492
  %494 = vadd.xlane.f32.xlu0 %v478
  %v495 = vpop.xlane.xlu0 %494
  %496 = vadd.xlane.f32.xlu0 %v479
  %v497 = vpop.xlane.xlu0 %496
  %v498 = vrcp.pop 128.0
  %v499 = vmul.f32 %v483, %v498
  %v500 = vmul.f32 %v485, %v498
  %v501 = vmul.f32 %v487, %v498
  %v502 = vmul.f32 %v489, %v498
  %v503 = vmul.f32 %v491, %v498
  %v504 = vmul.f32 %v493, %v498
  %v505 = vmul.f32 %v495, %v498
  %v506 = vmul.f32 %v497, %v498
  %v507 = vsub.f32 %v472, %v499
  %v508 = vsub.f32 %v473, %v500
  %v509 = vsub.f32 %v474, %v501
  %v510 = vsub.f32 %v475, %v502
  %v511 = vsub.f32 %v476, %v503
  %v512 = vsub.f32 %v477, %v504
  %v513 = vsub.f32 %v478, %v505
  %v514 = vsub.f32 %v479, %v506
  %v515 = vmul.f32 %v507, %v507
  %v516 = vmul.f32 %v508, %v508
  %v517 = vmul.f32 %v509, %v509
  %v518 = vmul.f32 %v510, %v510
  %v519 = vmul.f32 %v511, %v511
  %v520 = vmul.f32 %v512, %v512
  %v521 = vmul.f32 %v513, %v513
  %v522 = vmul.f32 %v514, %v514
  %523 = vadd.xlane.f32.xlu0 %v515
  %v524 = vpop.xlane.xlu0 %523
  %525 = vadd.xlane.f32.xlu0 %v516
  %v526 = vpop.xlane.xlu0 %525
  %527 = vadd.xlane.f32.xlu0 %v517
  %v528 = vpop.xlane.xlu0 %527
  %529 = vadd.xlane.f32.xlu0 %v518
  %v530 = vpop.xlane.xlu0 %529
  %531 = vadd.xlane.f32.xlu0 %v519
  %v532 = vpop.xlane.xlu0 %531
  %533 = vadd.xlane.f32.xlu0 %v520
  %v534 = vpop.xlane.xlu0 %533
  %535 = vadd.xlane.f32.xlu0 %v521
  %v536 = vpop.xlane.xlu0 %535
  %537 = vadd.xlane.f32.xlu0 %v522
  %v538 = vpop.xlane.xlu0 %537
  %v539 = vmul.f32 %v524, %v498
  %v540 = vmul.f32 %v526, %v498
  %v541 = vmul.f32 %v528, %v498
  %v542 = vmul.f32 %v530, %v498
  %v543 = vmul.f32 %v532, %v498
  %v544 = vmul.f32 %v534, %v498
  %v545 = vmul.f32 %v536, %v498
  %v546 = vmul.f32 %v538, %v498
  %v547 = vadd.f32 %v539, 1e-05
  %v548 = vadd.f32 %v540, 1e-05
  %v549 = vadd.f32 %v541, 1e-05
  %v550 = vadd.f32 %v542, 1e-05
  %v551 = vadd.f32 %v543, 1e-05
  %v552 = vadd.f32 %v544, 1e-05
  %v553 = vadd.f32 %v545, 1e-05
  %v554 = vadd.f32 %v546, 1e-05
  %v555 = vrsqrt.pop %v547
  %v556 = vrsqrt.pop %v548
  %v557 = vrsqrt.pop %v549
  %v558 = vrsqrt.pop %v550
  %v559 = vrsqrt.pop %v551
  %v560 = vrsqrt.pop %v552
  %v561 = vrsqrt.pop %v553
  %v562 = vrsqrt.pop %v554
  %v563 = vmul.f32 %v507, %v555
  %v564 = vmul.f32 %v508, %v556
  %v565 = vmul.f32 %v509, %v557
  %v566 = vmul.f32 %v510, %v558
  %v567 = vmul.f32 %v511, %v559
  %v568 = vmul.f32 %v512, %v560
  %v569 = vmul.f32 %v513, %v561
  %v570 = vmul.f32 %v514, %v562
  %v572 = vlaneseq
  %v573 = vshrl.u32 %v572, 7
  %v574 = vsub.s32 0, %v573
  %v575 = vrot.slane %v480, %v574
  %v577 = vmul.f32 %v563, %v575
  %v578 = vmul.f32 %v564, %v575
  %v579 = vmul.f32 %v565, %v575
  %v580 = vmul.f32 %v566, %v575
  %v581 = vmul.f32 %v567, %v575
  %v582 = vmul.f32 %v568, %v575
  %v583 = vmul.f32 %v569, %v575
  %v584 = vmul.f32 %v570, %v575
  %v586 = vlaneseq
  %v587 = vshrl.u32 %v586, 7
  %v588 = vsub.s32 0, %v587
  %v589 = vrot.slane %v481, %v588
  %v591 = vadd.f32 %v577, %v589
  %v592 = vadd.f32 %v578, %v589
  %v593 = vadd.f32 %v579, %v589
  %v594 = vadd.f32 %v580, %v589
  %v595 = vadd.f32 %v581, %v589
  %v596 = vadd.f32 %v582, %v589
  %v597 = vadd.f32 %v583, %v589
  %v598 = vadd.f32 %v584, %v589
  %v599 = vpack.c.bf16 %v592, %v591
  %v600 = vpack.c.bf16 %v594, %v593
  %v601 = vpack.c.bf16 %v596, %v595
  %v602 = vpack.c.bf16 %v598, %v597
  %v607 = vunpack.c.l.b16 %v599
  %v608 = vunpack.c.h.b16 %v599
  %v609 = vunpack.c.l.b16 %v600
  %v610 = vunpack.c.h.b16 %v600
  %v611 = vunpack.c.l.b16 %v601
  %v612 = vunpack.c.h.b16 %v601
  %v613 = vunpack.c.l.b16 %v602
  %v614 = vunpack.c.h.b16 %v602
  %v615 = vpack.c.b16 %v607, %v607
  %v616 = vpack.c.b16 %v608, %v608
  %v617 = vpack.c.b16 %v609, %v609
  %v618 = vpack.c.b16 %v610, %v610
  %v619 = vpack.c.b16 %v611, %v611
  %v620 = vpack.c.b16 %v612, %v612
  %v621 = vpack.c.b16 %v613, %v613
  %v622 = vpack.c.b16 %v614, %v614
  %631 = vst [vmem:[%s7] sm:$0xf] %v615
  %632 = vst [vmem:[%s7 + $0x4] sm:$0xf] %v616
  %633 = vst [vmem:[%s7 + $0x8] sm:$0xf] %v617
  %634 = vst [vmem:[%s7 + $0xc] sm:$0xf] %v618
  %635 = vst [vmem:[%s7 + $0x10] sm:$0xf] %v619
  %636 = vst [vmem:[%s7 + $0x14] sm:$0xf] %v620
  %637 = vst [vmem:[%s7 + $0x18] sm:$0xf] %v621
  %638 = vst [vmem:[%s7 + $0x1c] sm:$0xf] %v622
  // Predicated region
  $region30: #{transformer_forward.12} parent=0 // pred_check
    _
  $region31: #{transformer_forward.12} parent=0 // pred_check_branch
    %640 = sbr.rel (0) target = $region33
  $region32: #{transformer_forward.12} parent=0 // pred_region
    _
  $region33: #{transformer_forward.12} parent=0 // pred_fallthru
    _
  // Predicated region
  $region34: #{transformer_forward.12} parent=0 // pred_check
    _
  $region35: #{transformer_forward.12} parent=0 // pred_check_branch
    %642 = sbr.rel (0) target = $region37
  $region36: #{transformer_forward.12} parent=0 // pred_region
    _
  $region37: #{transformer_forward.12} parent=0 // pred_fallthru
    _

// kernel: transformer_forward.15
$region0: #{transformer_forward.15}
  #allocation0 [shape = 'u32[]', space=smem, size = 0x4, offset = 0x4, fixed_abs, tag = 'smem constant byte address 0x4 - core index']
  #allocation1 [shape = 'u32[144,128]{1,0:T(1,128)}', space=vmem, size = 0x12000, scoped, tag = 'internal scratch']
  #allocation2 [shape = 's32[1]{0}', space=sflag, size = 0x4, scoped, tag = 'scoped memory for transformer_forward.15']
  #allocation3 [shape = 'u8[512]{0}', space=smem, size = 0x200, scoped, tag = 'prefetched SMEM operand 0']
  %s0 = inlined_call_operand.vmem [shape: s32[2], index: 0, kind: input, shape index: {}]
  %s1 = inlined_call_operand.vmem [shape: bf16[2,32,128], index: 1, kind: input, shape index: {}]
  %s2 = inlined_call_operand.vmem [shape: bf16[128,384], index: 2, kind: input, shape index: {}]
  %s3 = inlined_call_operand.vmem [shape: f32[1,384], index: 3, kind: input, shape index: {}]
  %s4 = inlined_call_operand.vmem [shape: bf16[128,128], index: 4, kind: input, shape index: {}]
  %s5 = inlined_call_operand.vmem [shape: f32[1,128], index: 5, kind: input, shape index: {}]
  %s6 = inlined_call_operand.vmem [shape: f32[1,128], index: 6, kind: input, shape index: {}]
  %s7 = inlined_call_operand.vmem [shape: f32[1,128], index: 7, kind: input, shape index: {}]
  %s8 = inlined_call_operand.vmem [shape: bf16[2,32,128], index: 8, kind: output, shape index: {}]
  %s9 = sld [smem:[#allocation0]]
  $region61: #{transformer_forward.15} parent=0
    _
  %s11 = ssub.s32 1, %s9
  %s12 = scalar_select 0, %s11, %s9
  %s13 = sshll.u32 %s0, 4
  %s14 = int_to_ptr.vmem [resolvable:$true] %s13
  %16 = dma.vmem_to_smem %s14, 16, [#allocation3], [#allocation2]
  %17 = dma.done [#allocation2], 16
  %18 = sfence
  loop: start=0, step=1, limit=4
  $region2: #{transformer_forward.15} parent=0 // loop_pre_header
    _
  $region3: #{transformer_forward.15} parent=0 // loop_header
    %s20 = sphi 0, %s24
    %p21 = scmp.ge.s32.totalorder %s20, 4
    %s30 = sphi 0, %s32
    %s33 = sphi 0, %s30
    %s34 = sphi 0, %s33
    %s50 = sphi 0, %s34
    %s54 = sphi 0, %s54
    %s56 = sphi 0, %s54
    %s57 = sphi 0, %s56
    %s71 = sphi 0, %s57
    %s75 = sphi 0, %s75
    %s77 = sphi 0, %s75
    %s78 = sphi 0, %s77
    %s92 = sphi 0, %s78
    %s96 = sphi 0, %s96
    %s98 = sphi 0, %s96
    %s99 = sphi 0, %s98
    %s113 = sphi 0, %s99
    %s117 = sphi 0, %s117
    %s119 = sphi 0, %s117
    %s120 = sphi 0, %s119
    %s134 = sphi 0, %s120
    %s138 = sphi 0, %s138
    %s140 = sphi 0, %s138
    %s141 = sphi 0, %s140
    %s155 = sphi 0, %s141
    %s159 = sphi 0, %s159
    %s161 = sphi 0, %s159
    %s162 = sphi 0, %s161
    %s176 = sphi 0, %s162
    %s182 = sphi 0, %s184
    %s185 = sphi 0, %s182
    %s186 = sphi 0, %s185
    %s202 = sphi 0, %s186
  $region4: #{transformer_forward.15} parent=0 // loop_header_branch
    %23 = sbr.rel (%p21) target = $region8
  $region5: #{transformer_forward.15} parent=0 // loop_body
    %s25 = ssub.s32 %s20, 1
    %s26 = ssub.s32 %s20, 2
    %s27 = sadd.s32 %s20, 1
    %s28 = ssub.s32 %s20, %s27
    %p29 = scmp.eq.s32.totalorder %s28, 0
    %s31 = sadd.s32 %s30, 1
    %s32 = scalar_select %p29, %s30, %s31
    %p35 = pneg %p29
    %p36 = scmp.eq.s32.totalorder %s20, 1
    %p37 = por %p35, %p36
    %p38 = scmp.ne.s32.totalorder %s30, %s33
    %p39 = scmp.eq.s32.totalorder %s20, 0
    %p40 = por %p38, %p39
    %p41 = scmp.ne.s32.totalorder %s30, %s33
    %p42 = scmp.eq.s32.totalorder %s25, 1
    %p43 = por %p41, %p42
    %p44 = scmp.ne.s32.totalorder %s33, %s34
    %p45 = scmp.eq.s32.totalorder %s25, 0
    %p46 = por %p44, %p45
    %p47 = scmp.ne.s32.totalorder %s33, %s34
    %p48 = scmp.eq.s32.totalorder %s26, 1
    %p49 = por %p47, %p48
    %p51 = scmp.ne.s32.totalorder %s34, %s50
    %p52 = scmp.eq.s32.totalorder %s26, 0
    %p53 = por %p51, %p52
    %s55 = sadd.s32 %s54, 1
    %p58 = scmp.eq.s32.totalorder %s20, 1
    %p59 = scmp.ne.s32.totalorder %s54, %s56
    %p60 = scmp.eq.s32.totalorder %s20, 0
    %p61 = por %p59, %p60
    %p62 = scmp.ne.s32.totalorder %s54, %s56
    %p63 = scmp.eq.s32.totalorder %s25, 1
    %p64 = por %p62, %p63
    %p65 = scmp.ne.s32.totalorder %s56, %s57
    %p66 = scmp.eq.s32.totalorder %s25, 0
    %p67 = por %p65, %p66
    %p68 = scmp.ne.s32.totalorder %s56, %s57
    %p69 = scmp.eq.s32.totalorder %s26, 1
    %p70 = por %p68, %p69
    %p72 = scmp.ne.s32.totalorder %s57, %s71
    %p73 = scmp.eq.s32.totalorder %s26, 0
    %p74 = por %p72, %p73
    %s76 = sadd.s32 %s75, 1
    %p79 = scmp.eq.s32.totalorder %s20, 1
    %p80 = scmp.ne.s32.totalorder %s75, %s77
    %p81 = scmp.eq.s32.totalorder %s20, 0
    %p82 = por %p80, %p81
    %p83 = scmp.ne.s32.totalorder %s75, %s77
    %p84 = scmp.eq.s32.totalorder %s25, 1
    %p85 = por %p83, %p84
    %p86 = scmp.ne.s32.totalorder %s77, %s78
    %p87 = scmp.eq.s32.totalorder %s25, 0
    %p88 = por %p86, %p87
    %p89 = scmp.ne.s32.totalorder %s77, %s78
    %p90 = scmp.eq.s32.totalorder %s26, 1
    %p91 = por %p89, %p90
    %p93 = scmp.ne.s32.totalorder %s78, %s92
    %p94 = scmp.eq.s32.totalorder %s26, 0
    %p95 = por %p93, %p94
    %s97 = sadd.s32 %s96, 1
    %p100 = scmp.eq.s32.totalorder %s20, 1
    %p101 = scmp.ne.s32.totalorder %s96, %s98
    %p102 = scmp.eq.s32.totalorder %s20, 0
    %p103 = por %p101, %p102
    %p104 = scmp.ne.s32.totalorder %s96, %s98
    %p105 = scmp.eq.s32.totalorder %s25, 1
    %p106 = por %p104, %p105
    %p107 = scmp.ne.s32.totalorder %s98, %s99
    %p108 = scmp.eq.s32.totalorder %s25, 0
    %p109 = por %p107, %p108
    %p110 = scmp.ne.s32.totalorder %s98, %s99
    %p111 = scmp.eq.s32.totalorder %s26, 1
    %p112 = por %p110, %p111
    %p114 = scmp.ne.s32.totalorder %s99, %s113
    %p115 = scmp.eq.s32.totalorder %s26, 0
    %p116 = por %p114, %p115
    %s118 = sadd.s32 %s117, 1
    %p121 = scmp.eq.s32.totalorder %s20, 1
    %p122 = scmp.ne.s32.totalorder %s117, %s119
    %p123 = scmp.eq.s32.totalorder %s20, 0
    %p124 = por %p122, %p123
    %p125 = scmp.ne.s32.totalorder %s117, %s119
    %p126 = scmp.eq.s32.totalorder %s25, 1
    %p127 = por %p125, %p126
    %p128 = scmp.ne.s32.totalorder %s119, %s120
    %p129 = scmp.eq.s32.totalorder %s25, 0
    %p130 = por %p128, %p129
    %p131 = scmp.ne.s32.totalorder %s119, %s120
    %p132 = scmp.eq.s32.totalorder %s26, 1
    %p133 = por %p131, %p132
    %p135 = scmp.ne.s32.totalorder %s120, %s134
    %p136 = scmp.eq.s32.totalorder %s26, 0
    %p137 = por %p135, %p136
    %s139 = sadd.s32 %s138, 1
    %p142 = scmp.eq.s32.totalorder %s20, 1
    %p143 = scmp.ne.s32.totalorder %s138, %s140
    %p144 = scmp.eq.s32.totalorder %s20, 0
    %p145 = por %p143, %p144
    %p146 = scmp.ne.s32.totalorder %s138, %s140
    %p147 = scmp.eq.s32.totalorder %s25, 1
    %p148 = por %p146, %p147
    %p149 = scmp.ne.s32.totalorder %s140, %s141
    %p150 = scmp.eq.s32.totalorder %s25, 0
    %p151 = por %p149, %p150
    %p152 = scmp.ne.s32.totalorder %s140, %s141
    %p153 = scmp.eq.s32.totalorder %s26, 1
    %p154 = por %p152, %p153
    %p156 = scmp.ne.s32.totalorder %s141, %s155
    %p157 = scmp.eq.s32.totalorder %s26, 0
    %p158 = por %p156, %p157
    %s160 = sadd.s32 %s159, 1
    %p163 = scmp.eq.s32.totalorder %s20, 1
    %p164 = scmp.ne.s32.totalorder %s159, %s161
    %p165 = scmp.eq.s32.totalorder %s20, 0
    %p166 = por %p164, %p165
    %p167 = scmp.ne.s32.totalorder %s159, %s161
    %p168 = scmp.eq.s32.totalorder %s25, 1
    %p169 = por %p167, %p168
    %p170 = scmp.ne.s32.totalorder %s161, %s162
    %p171 = scmp.eq.s32.totalorder %s25, 0
    %p172 = por %p170, %p171
    %p173 = scmp.ne.s32.totalorder %s161, %s162
    %p174 = scmp.eq.s32.totalorder %s26, 1
    %p175 = por %p173, %p174
    %p177 = scmp.ne.s32.totalorder %s162, %s176
    %p178 = scmp.eq.s32.totalorder %s26, 0
    %p179 = por %p177, %p178
    %s180 = ssub.s32 %s20, %s27
    %p181 = scmp.eq.s32.totalorder %s180, 0
    %s183 = sadd.s32 %s182, 1
    %s184 = scalar_select %p181, %s182, %s183
    %p187 = pneg %p181
    %p188 = scmp.eq.s32.totalorder %s20, 1
    %p189 = por %p187, %p188
    %p190 = scmp.ne.s32.totalorder %s182, %s185
    %p191 = scmp.eq.s32.totalorder %s20, 0
    %p192 = por %p190, %p191
    %p193 = scmp.ne.s32.totalorder %s182, %s185
    %p194 = scmp.eq.s32.totalorder %s25, 1
    %p195 = por %p193, %p194
    %p196 = scmp.ne.s32.totalorder %s185, %s186
    %p197 = scmp.eq.s32.totalorder %s25, 0
    %p198 = por %p196, %p197
    %p199 = scmp.ne.s32.totalorder %s185, %s186
    %p200 = scmp.eq.s32.totalorder %s26, 1
    %p201 = por %p199, %p200
    %p203 = scmp.ne.s32.totalorder %s186, %s202
    %p204 = scmp.eq.s32.totalorder %s26, 0
    %p205 = por %p203, %p204
    %p206 = scmp.le.s32.totalorder 1, %s20
    %p207 = scmp.lt.s32.totalorder %s20, 3
    %p208 = pnand %p206, %p207
    %p209 = pneg %p208
    // Predicated region
    $region9: #{transformer_forward.15} parent=5 // pred_check
      _
    $region10: #{transformer_forward.15} parent=5 // pred_check_branch
      %211 = sbr.rel (%p208) target = $region12
    $region11: #{transformer_forward.15} parent=5 // pred_region
      %s212 = ssub.s32 %s20, 1
      // Predicated region
      $region13: #{transformer_forward.15} parent=11 // pred_check
        %p213 = pneg %p67
      $region14: #{transformer_forward.15} parent=11 // pred_check_branch
        %215 = sbr.rel (%p213) target = $region16
      $region15: #{transformer_forward.15} parent=11 // pred_region
        _
      $region16: #{transformer_forward.15} parent=11 // pred_fallthru
        _
      // Predicated region
      $region17: #{transformer_forward.15} parent=11 // pred_check
        %p216 = pneg %p88
      $region18: #{transformer_forward.15} parent=11 // pred_check_branch
        %218 = sbr.rel (%p216) target = $region20
      $region19: #{transformer_forward.15} parent=11 // pred_region
        _
      $region20: #{transformer_forward.15} parent=11 // pred_fallthru
        _
      // Predicated region
      $region21: #{transformer_forward.15} parent=11 // pred_check
        %p219 = pneg %p109
      $region22: #{transformer_forward.15} parent=11 // pred_check_branch
        %221 = sbr.rel (%p219) target = $region24
      $region23: #{transformer_forward.15} parent=11 // pred_region
        _
      $region24: #{transformer_forward.15} parent=11 // pred_fallthru
        _
      // Predicated region
      $region25: #{transformer_forward.15} parent=11 // pred_check
        %p222 = pneg %p130
      $region26: #{transformer_forward.15} parent=11 // pred_check_branch
        %224 = sbr.rel (%p222) target = $region28
      $region27: #{transformer_forward.15} parent=11 // pred_region
        _
      $region28: #{transformer_forward.15} parent=11 // pred_fallthru
        _
      // Predicated region
      $region29: #{transformer_forward.15} parent=11 // pred_check
        %p225 = pneg %p151
      $region30: #{transformer_forward.15} parent=11 // pred_check_branch
        %227 = sbr.rel (%p225) target = $region32
      $region31: #{transformer_forward.15} parent=11 // pred_region
        _
      $region32: #{transformer_forward.15} parent=11 // pred_fallthru
        _
      // Predicated region
      $region33: #{transformer_forward.15} parent=11 // pred_check
        %p228 = pneg %p172
      $region34: #{transformer_forward.15} parent=11 // pred_check_branch
        %230 = sbr.rel (%p228) target = $region36
      $region35: #{transformer_forward.15} parent=11 // pred_region
        _
      $region36: #{transformer_forward.15} parent=11 // pred_fallthru
        _
    $region12: #{transformer_forward.15} parent=5 // pred_fallthru
      _
    %p231 = scmp.lt.s32.totalorder %s20, 2
    // Predicated region
    $region37: #{transformer_forward.15} parent=5 // pred_check
      %p232 = pneg %p231
    $region38: #{transformer_forward.15} parent=5 // pred_check_branch
      %234 = sbr.rel (%p232) target = $region40
    $region39: #{transformer_forward.15} parent=5 // pred_region
      // Predicated region
      $region41: #{transformer_forward.15} parent=39 // pred_check
        %p235 = pneg %p40
      $region42: #{transformer_forward.15} parent=39 // pred_check_branch
        %237 = sbr.rel (%p235) target = $region44
      $region43: #{transformer_forward.15} parent=39 // pred_region
        %p238 = scmp.lt.s32.totalorder %s20, 1
        %s239 = scalar_select %p238, %s20, 1
        %s240 = smul.addr %s239, 4
        %s241 = smul.addr %s240, 4
        %s242 = scalar_lea.vmem %s1, %s241
      $region44: #{transformer_forward.15} parent=39 // pred_fallthru
        _
    $region40: #{transformer_forward.15} parent=5 // pred_fallthru
      _
    %p243 = scmp.le.s32.totalorder 1, %s20
    %p244 = scmp.lt.s32.totalorder %s20, 3
    %p245 = pnand %p243, %p244
    %p246 = pneg %p245
    // Predicated region
    $region45: #{transformer_forward.15} parent=5 // pred_check
      _
    $region46: #{transformer_forward.15} parent=5 // pred_check_branch
      %248 = sbr.rel (%p245) target = $region48
    $region47: #{transformer_forward.15} parent=5 // pred_region
      %s249 = ssub.s32 %s20, 1
      %p250 = scmp.lt.s32.totalorder %s25, 1
      %s251 = scalar_select %p250, %s25, 1
      %s252 = smul.addr %s251, 4
      %s253 = smul.addr %s252, 4
      %s254 = scalar_lea.vmem %s1, %s253
      %p255 = pneg %p46
      %p256 = pneg %p43
      %p257 = pneg %p67
      %p258 = pneg %p64
      %p259 = pneg %p88
      %p260 = pneg %p85
      %p261 = pneg %p109
      %p262 = pneg %p106
      %p263 = pneg %p130
      %p264 = pneg %p127
      %p265 = pneg %p151
      %p266 = pneg %p148
      %p267 = pneg %p172
      %p268 = pneg %p169
      %p269 = pneg %p198
      %p270 = pneg %p195
      %p271 = scmp.lt.s32.totalorder %s25, 1
      %s272 = scalar_select %p271, %s25, 1
      %s273 = smul.addr %s272, 4
      %s274 = smul.addr %s273, 4
      %s275 = scalar_lea.vmem %s8, %s274
      %p276 = scmp.lt.s32.totalorder %s25, 1
      %s277 = scalar_select %p276, %s25, 1
      %s278 = smul.addr %s277, 4
      %s279 = smul.addr %s278, 4
      %s280 = scalar_lea.vmem %s1, %s279
      %p281 = scmp.lt.s32.totalorder %s25, 1
      %s282 = scalar_select %p281, %s25, 1
      %s283 = smul.addr %s282, 4
      %s284 = smul.addr %s283, 4
      %s285 = scalar_lea.vmem %s8, %s284
      %s287 = sld [smem:[#allocation3 + %s25]]
      %v288 = vld [vmem:[%s280] sm:$0xf]
      %v289 = vld [vmem:[%s280 + $0x4] sm:$0xf]
      %v290 = vld [vmem:[%s280 + $0x8] sm:$0xf]
      %v291 = vld [vmem:[%s280 + $0xc] sm:$0xf]
      %v292 = vld [vmem:[%s2] sm:$0xff]
      %v293 = vld [vmem:[%s2 + $0x8] sm:$0xf]
      %v294 = vld [vmem:[%s2 + $0xc] sm:$0xff]
      %v295 = vld [vmem:[%s2 + $0x14] sm:$0xf]
      %v296 = vld [vmem:[%s2 + $0x18] sm:$0xff]
      %v297 = vld [vmem:[%s2 + $0x20] sm:$0xf]
      %v298 = vld [vmem:[%s2 + $0x24] sm:$0xff]
      %v299 = vld [vmem:[%s2 + $0x2c] sm:$0xf]
      %v300 = vld [vmem:[%s2 + $0x30] sm:$0xff]
      %v301 = vld [vmem:[%s2 + $0x38] sm:$0xf]
      %v302 = vld [vmem:[%s2 + $0x3c] sm:$0xff]
      %v303 = vld [vmem:[%s2 + $0x44] sm:$0xf]
      %v304 = vld [vmem:[%s2 + $0x48] sm:$0xff]
      %v305 = vld [vmem:[%s2 + $0x50] sm:$0xf]
      %v306 = vld [vmem:[%s2 + $0x54] sm:$0xff]
      %v307 = vld [vmem:[%s2 + $0x5c] sm:$0xf]
      %v308 = vld [vmem:[%s2 + $0x60] sm:$0xff]
      %v309 = vld [vmem:[%s2 + $0x68] sm:$0xf]
      %v310 = vld [vmem:[%s2 + $0x6c] sm:$0xff]
      %v311 = vld [vmem:[%s2 + $0x74] sm:$0xf]
      %v312 = vld [vmem:[%s2 + $0x78] sm:$0xff]
      %v313 = vld [vmem:[%s2 + $0x80] sm:$0xf]
      %v314 = vld [vmem:[%s2 + $0x84] sm:$0xff]
      %v315 = vld [vmem:[%s2 + $0x8c] sm:$0xf]
      %v316 = vld [vmem:[%s2 + $0x90] sm:$0xff]
      %v317 = vld [vmem:[%s2 + $0x98] sm:$0xf]
      %v318 = vld [vmem:[%s2 + $0x9c] sm:$0xff]
      %v319 = vld [vmem:[%s2 + $0xa4] sm:$0xf]
      %v320 = vld [vmem:[%s2 + $0xa8] sm:$0xff]
      %v321 = vld [vmem:[%s2 + $0xb0] sm:$0xf]
      %v322 = vld [vmem:[%s2 + $0xb4] sm:$0xff]
      %v323 = vld [vmem:[%s2 + $0xbc] sm:$0xf]
      %v324 = vld [vmem:[%s3] sm:$0x7]
      %v326 = vlaneseq
      %v327 = vshrl.u32 %v326, 7
      %v328 = vsub.s32 0, %v327
      %v329 = vrot.slane %v324, %v328
      %v330 = vlaneseq
      %v331 = vshrl.u32 %v330, 7
      %v332 = vsub.s32 1, %v331
      %v333 = vrot.slane %v324, %v332
      %v334 = vlaneseq
      %v335 = vshrl.u32 %v334, 7
      %v336 = vsub.s32 2, %v335
      %v337 = vrot.slane %v324, %v336
      %v345 = vunpack.c.l.b16 %v288
      %v346 = vunpack.c.l.b16 %v289
      %v347 = vunpack.c.l.b16 %v290
      %v348 = vunpack.c.l.b16 %v291
      %v349 = vpack.c.b16 %v346, %v345
      %v350 = vpack.c.b16 %v348, %v347
      %v385 = vunpack.c.l.b16 %v292
      %v386 = vunpack.c.h.b16 %v292
      %v387 = vunpack.c.l.b16 %v293
      %v388 = vunpack.c.l.b16 %v294
      %v389 = vunpack.c.h.b16 %v294
      %v390 = vunpack.c.l.b16 %v295
      %v391 = vunpack.c.l.b16 %v296
      %v392 = vunpack.c.h.b16 %v296
      %v393 = vunpack.c.l.b16 %v297
      %v394 = vunpack.c.l.b16 %v298
      %v395 = vunpack.c.h.b16 %v298
      %v396 = vunpack.c.l.b16 %v299
      %v397 = vunpack.c.l.b16 %v300
      %v398 = vunpack.c.h.b16 %v300
      %v399 = vunpack.c.l.b16 %v301
      %v400 = vunpack.c.l.b16 %v302
      %v401 = vunpack.c.h.b16 %v302
      %v402 = vunpack.c.l.b16 %v303
      %v403 = vunpack.c.l.b16 %v304
      %v404 = vunpack.c.h.b16 %v304
      %v405 = vunpack.c.l.b16 %v305
      %v406 = vunpack.c.l.b16 %v306
      %v407 = vunpack.c.h.b16 %v306
      %v408 = vunpack.c.l.b16 %v307
      %v409 = vunpack.c.l.b16 %v308
      %v410 = vunpack.c.h.b16 %v308
      %v411 = vunpack.c.l.b16 %v309
      %v412 = vunpack.c.l.b16 %v310
      %v413 = vunpack.c.h.b16 %v310
      %v414 = vunpack.c.l.b16 %v311
      %v415 = vunpack.c.l.b16 %v312
      %v416 = vunpack.c.h.b16 %v312
      %v417 = vunpack.c.l.b16 %v313
      %v418 = vunpack.c.l.b16 %v314
      %v419 = vunpack.c.h.b16 %v314
      %v420 = vunpack.c.l.b16 %v315
      %v421 = vunpack.c.l.b16 %v316
      %v422 = vunpack.c.h.b16 %v316
      %v423 = vunpack.c.l.b16 %v317
      %v424 = vunpack.c.l.b16 %v318
      %v425 = vunpack.c.h.b16 %v318
      %v426 = vunpack.c.l.b16 %v319
      %v427 = vunpack.c.l.b16 %v320
      %v428 = vunpack.c.h.b16 %v320
      %v429 = vunpack.c.l.b16 %v321
      %v430 = vunpack.c.l.b16 %v322
      %v431 = vunpack.c.h.b16 %v322
      %v432 = vunpack.c.l.b16 %v323
      %v433 = vpack.c.b16 %v388, %v385
      %v434 = vpack.c.b16 %v389, %v386
      %v435 = vpack.c.b16 %v390, %v387
      %v436 = vpack.c.b16 %v394, %v391
      %v437 = vpack.c.b16 %v395, %v392
      %v438 = vpack.c.b16 %v396, %v393
      %v439 = vpack.c.b16 %v400, %v397
      %v440 = vpack.c.b16 %v401, %v398
      %v441 = vpack.c.b16 %v402, %v399
      %v442 = vpack.c.b16 %v406, %v403
      %v443 = vpack.c.b16 %v407, %v404
      %v444 = vpack.c.b16 %v408, %v405
      %v445 = vpack.c.b16 %v412, %v409
      %v446 = vpack.c.b16 %v413, %v410
      %v447 = vpack.c.b16 %v414, %v411
      %v448 = vpack.c.b16 %v418, %v415
      %v449 = vpack.c.b16 %v419, %v416
      %v450 = vpack.c.b16 %v420, %v417
      %v451 = vpack.c.b16 %v424, %v421
      %v452 = vpack.c.b16 %v425, %v422
      %v453 = vpack.c.b16 %v426, %v423
      %v454 = vpack.c.b16 %v430, %v427
      %v455 = vpack.c.b16 %v431, %v428
      %v456 = vpack.c.b16 %v432, %v429
      %481 = vmatprep.subr.bf16.mxu0 %v434
      %482 = vmatpush1.bf16.msra.mxu0 %v433
      %483 = vmatprep.subr.bf16.mxu0 %v437
      %484 = vmatpush1.bf16.msra.mxu0 %v436
      %485 = vmatprep.subr.bf16.mxu0 %v440
      %486 = vmatpush1.bf16.msra.mxu0 %v439
      %487 = vmatprep.subr.bf16.mxu0 %v443
      %488 = vmatpush1.bf16.msra.mxu0 %v442
      %489 = vmatprep.subr.bf16.mxu0 %v446
      %490 = vmatpush1.bf16.msra.mxu0 %v445
      %491 = vmatprep.subr.bf16.mxu0 %v449
      %492 = vmatpush1.bf16.msra.mxu0 %v448
      %493 = vmatprep.subr.bf16.mxu0 %v452
      %494 = vmatpush1.bf16.msra.mxu0 %v451
      %495 = vmatprep.subr.bf16.mxu0 %v455
      %496 = vmatpush1.bf16.msra.mxu0 %v454
      %497 = vmatprep.subr.bf16.mxu0 0
      %498 = vmatpush1.bf16.msra.mxu0 0
      %499 = vmatprep.subr.bf16.mxu0 0
      %500 = vmatpush1.bf16.msra.mxu0 0
      %501 = vmatprep.subr.bf16.mxu0 0
      %502 = vmatpush1.bf16.msra.mxu0 0
      %503 = vmatprep.subr.bf16.mxu0 0
      %504 = vmatpush1.bf16.msra.mxu0 0
      %505 = vmatprep.subr.bf16.mxu0 0
      %506 = vmatpush1.bf16.msra.mxu0 0
      %507 = vmatprep.subr.bf16.mxu0 0
      %508 = vmatpush1.bf16.msra.mxu0 0
      %509 = vmatprep.subr.bf16.mxu0 0
      %510 = vmatpush1.bf16.msra.mxu0 0
      %511 = vmatprep.subr.bf16.mxu0 0
      %512 = vmatpush1.bf16.msra.mxu0 0
      %513 = vmatprep.mubr.bf16.mxu0 0
      %514 = vmatmul.mubr.bf16.gmra.mrb[0].mxu0 %v349
      %v515 = vpop.f32.mrb[0].mxu0
      %v516 = vadd.f32 %v329, %v515
      %v517 = vpop.f32.mrb[0].mxu0
      %v518 = vadd.f32 %v333, %v517
      %v519 = vpop.f32.mrb[0].mxu0
      %v520 = vadd.f32 %v329, %v519
      %v521 = vpop.f32.mrb[0].mxu0
      %v522 = vadd.f32 %v333, %v521
      %523 = vmatprep.mubr.bf16.mxu0 0
      %524 = vmatmul.mubr.bf16.gmra.mrb[0].mxu0 %v350
      %v525 = vpop.f32.mrb[0].mxu0
      %v526 = vadd.f32 %v329, %v525
      %v527 = vpop.f32.mrb[0].mxu0
      %v528 = vadd.f32 %v333, %v527
      %v529 = vpop.f32.mrb[0].mxu0
      %v530 = vadd.f32 %v329, %v529
      %v531 = vpop.f32.mrb[0].mxu0
      %v532 = vadd.f32 %v333, %v531
      %533 = vdwg.mxu0
      %534 = vmatprep.subr.bf16.mxu0 0
      %535 = vmatpush1.bf16.msra.mxu0 %v435
      %536 = vmatprep.subr.bf16.mxu0 0
      %537 = vmatpush1.bf16.msra.mxu0 %v438
      %538 = vmatprep.subr.bf16.mxu0 0
      %539 = vmatpush1.bf16.msra.mxu0 %v441
      %540 = vmatprep.subr.bf16.mxu0 0
      %541 = vmatpush1.bf16.msra.mxu0 %v444
      %542 = vmatprep.subr.bf16.mxu0 0
      %543 = vmatpush1.bf16.msra.mxu0 %v447
      %544 = vmatprep.subr.bf16.mxu0 0
      %545 = vmatpush1.bf16.msra.mxu0 %v450
      %546 = vmatprep.subr.bf16.mxu0 0
      %547 = vmatpush1.bf16.msra.mxu0 %v453
      %548 = vmatprep.subr.bf16.mxu0 0
      %549 = vmatpush1.bf16.msra.mxu0 %v456
      %550 = vmatprep.subr.bf16.mxu0 0
      %551 = vmatpush1.bf16.msra.mxu0 0
      %552 = vmatprep.subr.bf16.mxu0 0
      %553 = vmatpush1.bf16.msra.mxu0 0
      %554 = vmatprep.subr.bf16.mxu0 0
      %555 = vmatpush1.bf16.msra.mxu0 0
      %556 = vmatprep.subr.bf16.mxu0 0
      %557 = vmatpush1.bf16.msra.mxu0 0
      %558 = vmatprep.subr.bf16.mxu0 0
      %559 = vmatpush1.bf16.msra.mxu0 0
      %560 = vmatprep.subr.bf16.mxu0 0
      %561 = vmatpush1.bf16.msra.mxu0 0
      %562 = vmatprep.subr.bf16.mxu0 0
      %563 = vmatpush1.bf16.msra.mxu0 0
      %564 = vmatprep.subr.bf16.mxu0 0
      %565 = vmatpush1.bf16.msra.mxu0 0
      %566 = vmatprep.mubr.bf16.mxu0 0
      %567 = vmatmul.mubr.bf16.gmra.mrb[0].mxu0 %v349
      %v568 = vpop.f32.mrb[0].mxu0
      %v569 = vadd.f32 %v337, %v568
      %v570 = vpop.f32.mrb[0].mxu0
      %v571 = vpop.f32.mrb[0].mxu0
      %v572 = vadd.f32 %v337, %v571
      %v573 = vpop.f32.mrb[0].mxu0
      %574 = vmatprep.mubr.bf16.mxu0 0
      %575 = vmatmul.mubr.bf16.gmra.mrb[0].mxu0 %v350
      %v576 = vpop.f32.mrb[0].mxu0
      %v577 = vadd.f32 %v337, %v576
      %v578 = vpop.f32.mrb[0].mxu0
      %v579 = vpop.f32.mrb[0].mxu0
      %v580 = vadd.f32 %v337, %v579
      %v581 = vpop.f32.mrb[0].mxu0
      %582 = vdwg.mxu0
      %v583 = vld [vmem:[%s4] sm:$0xf]
      %v584 = vld [vmem:[%s4 + $0x4] sm:$0xf]
      %v585 = vld [vmem:[%s4 + $0x8] sm:$0xf]
      %v586 = vld [vmem:[%s4 + $0xc] sm:$0xf]
      %v587 = vld [vmem:[%s4 + $0x10] sm:$0xf]
      %v588 = vld [vmem:[%s4 + $0x14] sm:$0xf]
      %v589 = vld [vmem:[%s4 + $0x18] sm:$0xf]
      %v590 = vld [vmem:[%s4 + $0x1c] sm:$0xf]
      %v591 = vld [vmem:[%s4 + $0x20] sm:$0xf]
      %v592 = vld [vmem:[%s4 + $0x24] sm:$0xf]
      %v593 = vld [vmem:[%s4 + $0x28] sm:$0xf]
      %v594 = vld [vmem:[%s4 + $0x2c] sm:$0xf]
      %v595 = vld [vmem:[%s4 + $0x30] sm:$0xf]
      %v596 = vld [vmem:[%s4 + $0x34] sm:$0xf]
      %v597 = vld [vmem:[%s4 + $0x38] sm:$0xf]
      %v598 = vld [vmem:[%s4 + $0x3c] sm:$0xf]
      %v599 = vlaneseq
      %v600 = vshrl.u32 %v599, 7
      %v601 = vadd.s32 %v600, 8
      %v602 = vadd.s32 %v600, 16
      %v603 = vadd.s32 %v600, 24
      %v604 = vlaneseq
      %v605 = vand.u32 %v604, 127
      %v606 = vstv %s287
      %vm607 = vcmp.lt.s32.totalorder %v600, %v606
      %vm608 = vcmp.lt.s32.totalorder %v601, %v606
      %vm609 = vcmp.lt.s32.totalorder %v602, %v606
      %vm610 = vcmp.lt.s32.totalorder %v603, %v606
      %vm611 = vcmp.le.s32.totalorder %v605, %v600
      %vm612 = vcmp.le.s32.totalorder %v605, %v601
      %vm613 = vcmp.le.s32.totalorder %v605, %v602
      %vm614 = vcmp.le.s32.totalorder %v605, %v603
      %vm615 = vmand %vm607, %vm611
      %vm616 = vmand %vm608, %vm612
      %vm617 = vmand %vm609, %vm613
      %vm618 = vmand %vm610, %vm614
      %v619 = vsel %vm615, 0.0, -1e+09
      %v620 = vsel %vm616, 0.0, -1e+09
      %v621 = vsel %vm617, 0.0, -1e+09
      %v622 = vsel %vm618, 0.0, -1e+09
      %v623 = vpack.c.bf16 %v520, %v516
      %v624 = vpack.c.bf16 %v530, %v526
      %v625 = vpack.c.bf16 %v522, %v518
      %v626 = vpack.c.bf16 %v532, %v528
      %v627 = vpack.c.bf16 %v572, %v569
      %v628 = vpack.c.bf16 %v580, %v577
      %vm629 = vcmask 523264
      %v631 = vsel %vm629, %v623, 0
      %v634 = vsel %vm629, %v624, 0
      %v637 = vsel %vm629, %v625, 0
      %v640 = vsel %vm629, %v626, 0
      %642 = vmatprep.subr.bf16.mxu0 0
      %643 = vmatpush1.bf16.xpose.msra.mxu0 %v637
      %644 = vmatprep.subr.bf16.mxu0 0
      %645 = vmatpush1.bf16.xpose.msra.mxu0 %v640
      %646 = vmatprep.subr.bf16.mxu0 0
      %647 = vmatpush1.bf16.xpose.msra.mxu0 0
      %648 = vmatprep.subr.bf16.mxu0 0
      %649 = vmatpush1.bf16.xpose.msra.mxu0 0
      %650 = vmatprep.subr.bf16.mxu0 0
      %651 = vmatpush1.bf16.xpose.msra.mxu0 0
      %652 = vmatprep.subr.bf16.mxu0 0
      %653 = vmatpush1.bf16.xpose.msra.mxu0 0
      %654 = vmatprep.subr.bf16.mxu0 0
      %655 = vmatpush1.bf16.xpose.msra.mxu0 0
      %656 = vmatprep.subr.bf16.mxu0 0
      %657 = vmatpush1.bf16.xpose.msra.mxu0 0
      %658 = vmatprep.subr.bf16.mxu0 0
      %659 = vmatpush1.bf16.xpose.msra.mxu0 0
      %660 = vmatprep.subr.bf16.mxu0 0
      %661 = vmatpush1.bf16.xpose.msra.mxu0 0
      %662 = vmatprep.subr.bf16.mxu0 0
      %663 = vmatpush1.bf16.xpose.msra.mxu0 0
      %664 = vmatprep.subr.bf16.mxu0 0
      %665 = vmatpush1.bf16.xpose.msra.mxu0 0
      %666 = vmatprep.subr.bf16.mxu0 0
      %667 = vmatpush1.bf16.xpose.msra.mxu0 0
      %668 = vmatprep.subr.bf16.mxu0 0
      %669 = vmatpush1.bf16.xpose.msra.mxu0 0
      %670 = vmatprep.subr.bf16.mxu0 0
      %671 = vmatpush1.bf16.xpose.msra.mxu0 0
      %672 = vmatprep.subr.bf16.mxu0 0
      %673 = vmatpush1.bf16.xpose.msra.mxu0 0
      %674 = vmatprep.mubr.bf16.mxu0 0
      %675 = vmatmul.mubr.bf16.gmra.mrb[0].mxu0 %v631
      %v676 = vpop.f32.mrb[0].mxu0
      %v677 = vadd.f32 0.0, %v676
      %v678 = vpop.f32.mrb[0].mxu0
      %v679 = vpop.f32.mrb[0].mxu0
      %v680 = vadd.f32 0.0, %v679
      %v681 = vpop.f32.mrb[0].mxu0
      %682 = vmatprep.mubr.bf16.mxu0 0
      %683 = vmatmul.mubr.bf16.gmra.mrb[0].mxu0 %v634
      %v684 = vpop.f32.mrb[0].mxu0
      %v685 = vadd.f32 0.0, %v684
      %v686 = vpop.f32.mrb[0].mxu0
      %v687 = vpop.f32.mrb[0].mxu0
      %v688 = vadd.f32 0.0, %v687
      %v689 = vpop.f32.mrb[0].mxu0
      %690 = vdwg.mxu0
      %v691 = vmul.f32 %v677, 0.125
      %v692 = vmul.f32 %v680, 0.125
      %v693 = vmul.f32 %v685, 0.125
      %v694 = vmul.f32 %v688, 0.125
      %v695 = vadd.f32 %v691, %v619
      %v696 = vadd.f32 %v692, %v620
      %v697 = vadd.f32 %v693, %v621
      %v698 = vadd.f32 %v694, %v622
      %vm699 = vcmask 261120
      %v700 = vsel %vm699, %v695, -inf
      %701 = vmax.xlane.f32.xlu0 %v700
      %v702 = vpop.xlane.xlu0 %701
      %v703 = vsel %vm699, %v696, -inf
      %704 = vmax.xlane.f32.xlu0 %v703
      %v705 = vpop.xlane.xlu0 %704
      %v706 = vsel %vm699, %v697, -inf
      %707 = vmax.xlane.f32.xlu0 %v706
      %v708 = vpop.xlane.xlu0 %707
      %v709 = vsel %vm699, %v698, -inf
      %710 = vmax.xlane.f32.xlu0 %v709
      %v711 = vpop.xlane.xlu0 %710
      %v712 = vsub.f32 %v695, %v702
      %v713 = vsub.f32 %v696, %v705
      %v714 = vsub.f32 %v697, %v708
      %v715 = vsub.f32 %v698, %v711
      %v716 = vmul.f32 %v712, 1.442695
      %v717 = vpow.pop %v716
      %v718 = vmul.f32 %v713, 1.442695
      %v719 = vpow.pop %v718
      %v720 = vmul.f32 %v714, 1.442695
      %v721 = vpow.pop %v720
      %v722 = vmul.f32 %v715, 1.442695
      %v723 = vpow.pop %v722
      %v724 = vsel %vm699, %v717, 0.0
      %725 = vadd.xlane.f32.xlu0 %v724
      %v726 = vpop.xlane.xlu0 %725
      %v727 = vsel %vm699, %v719, 0.0
      %728 = vadd.xlane.f32.xlu0 %v727
      %v729 = vpop.xlane.xlu0 %728
      %v730 = vsel %vm699, %v721, 0.0
      %731 = vadd.xlane.f32.xlu0 %v730
      %v732 = vpop.xlane.xlu0 %731
      %v733 = vsel %vm699, %v723, 0.0
      %734 = vadd.xlane.f32.xlu0 %v733
      %v735 = vpop.xlane.xlu0 %734
      %v736 = vrcp.pop %v726
      %v737 = vrcp.pop %v729
      %v738 = vrcp.pop %v732
      %v739 = vrcp.pop %v735
      %v740 = vmul.f32 %v717, %v736
      %v741 = vmul.f32 %v719, %v737
      %v742 = vmul.f32 %v721, %v738
      %v743 = vmul.f32 %v723, %v739
      %v744 = vpack.c.bf16 %v741, %v740
      %v745 = vpack.c.bf16 %v743, %v742
      %v747 = vsel %vm699, %v744, 0
      %v750 = vsel %vm699, %v745, 0
      %752 = vmatprep.subr.bf16.mxu0 0
      %753 = vmatpush1.bf16.msra.mxu0 %v627
      %754 = vmatprep.subr.bf16.mxu0 0
      %755 = vmatpush1.bf16.msra.mxu0 %v628
      %756 = vmatprep.subr.bf16.mxu0 0
      %757 = vmatpush1.bf16.msra.mxu0 0
      %758 = vmatprep.subr.bf16.mxu0 0
      %759 = vmatpush1.bf16.msra.mxu0 0
      %760 = vmatprep.subr.bf16.mxu0 0
      %761 = vmatpush1.bf16.msra.mxu0 0
      %762 = vmatprep.subr.bf16.mxu0 0
      %763 = vmatpush1.bf16.msra.mxu0 0
      %764 = vmatprep.subr.bf16.mxu0 0
      %765 = vmatpush1.bf16.msra.mxu0 0
      %766 = vmatprep.subr.bf16.mxu0 0
      %767 = vmatpush1.bf16.msra.mxu0 0
      %768 = vmatprep.subr.bf16.mxu0 0
      %769 = vmatpush1.bf16.msra.mxu0 0
      %770 = vmatprep.subr.bf16.mxu0 0
      %771 = vmatpush1.bf16.msra.mxu0 0
      %772 = vmatprep.subr.bf16.mxu0 0
      %773 = vmatpush1.bf16.msra.mxu0 0
      %774 = vmatprep.subr.bf16.mxu0 0
      %775 = vmatpush1.bf16.msra.mxu0 0
      %776 = vmatprep.subr.bf16.mxu0 0
      %777 = vmatpush1.bf16.msra.mxu0 0
      %778 = vmatprep.subr.bf16.mxu0 0
      %779 = vmatpush1.bf16.msra.mxu0 0
      %780 = vmatprep.subr.bf16.mxu0 0
      %781 = vmatpush1.bf16.msra.mxu0 0
      %782 = vmatprep.subr.bf16.mxu0 0
      %783 = vmatpush1.bf16.msra.mxu0 0
      %784 = vmatprep.mubr.bf16.mxu0 0
      %785 = vmatmul.mubr.bf16.gmra.mrb[0].mxu0 %v747
      %v786 = vpop.f32.mrb[0].mxu0
      %v787 = vadd.f32 0.0, %v786
      %v788 = vpop.f32.mrb[0].mxu0
      %v789 = vpop.f32.mrb[0].mxu0
      %v790 = vadd.f32 0.0, %v789
      %v791 = vpop.f32.mrb[0].mxu0
      %792 = vmatprep.mubr.bf16.mxu0 0
      %793 = vmatmul.mubr.bf16.gmra.mrb[0].mxu0 %v750
      %v794 = vpop.f32.mrb[0].mxu0
      %v795 = vadd.f32 0.0, %v794
      %v796 = vpop.f32.mrb[0].mxu0
      %v797 = vpop.f32.mrb[0].mxu0
      %v798 = vadd.f32 0.0, %v797
      %v799 = vpop.f32.mrb[0].mxu0
      %800 = vdwg.mxu0
      %v801 = vpack.c.bf16 %v790, %v787
      %v802 = vpack.c.bf16 %v798, %v795
      %805 = vrot.lane.b32.xlu0 %v623, 64
      %v806 = vpop.permute.xlu0 %805
      %807 = vrot.lane.b32.xlu0 %v624, 64
      %v808 = vpop.permute.xlu0 %807
      %811 = vrot.lane.b32.xlu0 %v625, 64
      %v812 = vpop.permute.xlu0 %811
      %813 = vrot.lane.b32.xlu0 %v626, 64
      %v814 = vpop.permute.xlu0 %813
      %v816 = vsel %vm629, %v806, 0
      %v819 = vsel %vm629, %v808, 0
      %v822 = vsel %vm629, %v812, 0
      %v825 = vsel %vm629, %v814, 0
      %827 = vmatprep.subr.bf16.mxu0 0
      %828 = vmatpush1.bf16.xpose.msra.mxu0 %v822
      %829 = vmatprep.subr.bf16.mxu0 0
      %830 = vmatpush1.bf16.xpose.msra.mxu0 %v825
      %831 = vmatprep.subr.bf16.mxu0 0
      %832 = vmatpush1.bf16.xpose.msra.mxu0 0
      %833 = vmatprep.subr.bf16.mxu0 0
      %834 = vmatpush1.bf16.xpose.msra.mxu0 0
      %835 = vmatprep.subr.bf16.mxu0 0
      %836 = vmatpush1.bf16.xpose.msra.mxu0 0
      %837 = vmatprep.subr.bf16.mxu0 0
      %838 = vmatpush1.bf16.xpose.msra.mxu0 0
      %839 = vmatprep.subr.bf16.mxu0 0
      %840 = vmatpush1.bf16.xpose.msra.mxu0 0
      %841 = vmatprep.subr.bf16.mxu0 0
      %842 = vmatpush1.bf16.xpose.msra.mxu0 0
      %843 = vmatprep.subr.bf16.mxu0 0
      %844 = vmatpush1.bf16.xpose.msra.mxu0 0
      %845 = vmatprep.subr.bf16.mxu0 0
      %846 = vmatpush1.bf16.xpose.msra.mxu0 0
      %847 = vmatprep.subr.bf16.mxu0 0
      %848 = vmatpush1.bf16.xpose.msra.mxu0 0
      %849 = vmatprep.subr.bf16.mxu0 0
      %850 = vmatpush1.bf16.xpose.msra.mxu0 0
      %851 = vmatprep.subr.bf16.mxu0 0
      %852 = vmatpush1.bf16.xpose.msra.mxu0 0
      %853 = vmatprep.subr.bf16.mxu0 0
      %854 = vmatpush1.bf16.xpose.msra.mxu0 0
      %855 = vmatprep.subr.bf16.mxu0 0
      %856 = vmatpush1.bf16.xpose.msra.mxu0 0
      %857 = vmatprep.subr.bf16.mxu0 0
      %858 = vmatpush1.bf16.xpose.msra.mxu0 0
      %859 = vmatprep.mubr.bf16.mxu0 0
      %860 = vmatmul.mubr.bf16.gmra.mrb[0].mxu0 %v816
      %v861 = vpop.f32.mrb[0].mxu0
      %v862 = vadd.f32 0.0, %v861
      %v863 = vpop.f32.mrb[0].mxu0
      %v864 = vpop.f32.mrb[0].mxu0
      %v865 = vadd.f32 0.0, %v864
      %v866 = vpop.f32.mrb[0].mxu0
      %867 = vmatprep.mubr.bf16.mxu0 0
      %868 = vmatmul.mubr.bf16.gmra.mrb[0].mxu0 %v819
      %v869 = vpop.f32.mrb[0].mxu0
      %v870 = vadd.f32 0.0, %v869
      %v871 = vpop.f32.mrb[0].mxu0
      %v872 = vpop.f32.mrb[0].mxu0
      %v873 = vadd.f32 0.0, %v872
      %v874 = vpop.f32.mrb[0].mxu0
      %875 = vdwg.mxu0
      %v876 = vmul.f32 %v862, 0.125
      %v877 = vmul.f32 %v865, 0.125
      %v878 = vmul.f32 %v870, 0.125
      %v879 = vmul.f32 %v873, 0.125
      %v880 = vadd.f32 %v876, %v619
      %v881 = vadd.f32 %v877, %v620
      %v882 = vadd.f32 %v878, %v621
      %v883 = vadd.f32 %v879, %v622
      %v884 = vsel %vm699, %v880, -inf
      %885 = vmax.xlane.f32.xlu0 %v884
      %v886 = vpop.xlane.xlu0 %885
      %v887 = vsel %vm699, %v881, -inf
      %888 = vmax.xlane.f32.xlu0 %v887
      %v889 = vpop.xlane.xlu0 %888
      %v890 = vsel %vm699, %v882, -inf
      %891 = vmax.xlane.f32.xlu0 %v890
      %v892 = vpop.xlane.xlu0 %891
      %v893 = vsel %vm699, %v883, -inf
      %894 = vmax.xlane.f32.xlu0 %v893
      %v895 = vpop.xlane.xlu0 %894
      %v896 = vsub.f32 %v880, %v886
      %v897 = vsub.f32 %v881, %v889
      %v898 = vsub.f32 %v882, %v892
      %v899 = vsub.f32 %v883, %v895
      %v900 = vmul.f32 %v896, 1.442695
      %v901 = vpow.pop %v900
      %v902 = vmul.f32 %v897, 1.442695
      %v903 = vpow.pop %v902
      %v904 = vmul.f32 %v898, 1.442695
      %v905 = vpow.pop %v904
      %v906 = vmul.f32 %v899, 1.442695
      %v907 = vpow.pop %v906
      %v908 = vsel %vm699, %v901, 0.0
      %909 = vadd.xlane.f32.xlu0 %v908
      %v910 = vpop.xlane.xlu0 %909
      %v911 = vsel %vm699, %v903, 0.0
      %912 = vadd.xlane.f32.xlu0 %v911
      %v913 = vpop.xlane.xlu0 %912
      %v914 = vsel %vm699, %v905, 0.0
      %915 = vadd.xlane.f32.xlu0 %v914
      %v916 = vpop.xlane.xlu0 %915
      %v917 = vsel %vm699, %v907, 0.0
      %918 = vadd.xlane.f32.xlu0 %v917
      %v919 = vpop.xlane.xlu0 %918
      %v920 = vrcp.pop %v910
      %v921 = vrcp.pop %v913
      %v922 = vrcp.pop %v916
      %v923 = vrcp.pop %v919
      %v924 = vmul.f32 %v901, %v920
      %v925 = vmul.f32 %v903, %v921
      %v926 = vmul.f32 %v905, %v922
      %v927 = vmul.f32 %v907, %v923
      %v928 = vpack.c.bf16 %v925, %v924
      %v929 = vpack.c.bf16 %v927, %v926
      %932 = vrot.lane.b32.xlu0 %v627, 64
      %v933 = vpop.permute.xlu0 %932
      %934 = vrot.lane.b32.xlu0 %v628, 64
      %v935 = vpop.permute.xlu0 %934
      %v939 = vsel %vm699, %v928, 0
      %v942 = vsel %vm699, %v929, 0
      %944 = vmatprep.subr.bf16.mxu0 0
      %945 = vmatpush1.bf16.msra.mxu0 %v933
      %946 = vmatprep.subr.bf16.mxu0 0
      %947 = vmatpush1.bf16.msra.mxu0 %v935
      %948 = vmatprep.subr.bf16.mxu0 0
      %949 = vmatpush1.bf16.msra.mxu0 0
      %950 = vmatprep.subr.bf16.mxu0 0
      %951 = vmatpush1.bf16.msra.mxu0 0
      %952 = vmatprep.subr.bf16.mxu0 0
      %953 = vmatpush1.bf16.msra.mxu0 0
      %954 = vmatprep.subr.bf16.mxu0 0
      %955 = vmatpush1.bf16.msra.mxu0 0
      %956 = vmatprep.subr.bf16.mxu0 0
      %957 = vmatpush1.bf16.msra.mxu0 0
      %958 = vmatprep.subr.bf16.mxu0 0
      %959 = vmatpush1.bf16.msra.mxu0 0
      %960 = vmatprep.subr.bf16.mxu0 0
      %961 = vmatpush1.bf16.msra.mxu0 0
      %962 = vmatprep.subr.bf16.mxu0 0
      %963 = vmatpush1.bf16.msra.mxu0 0
      %964 = vmatprep.subr.bf16.mxu0 0
      %965 = vmatpush1.bf16.msra.mxu0 0
      %966 = vmatprep.subr.bf16.mxu0 0
      %967 = vmatpush1.bf16.msra.mxu0 0
      %968 = vmatprep.subr.bf16.mxu0 0
      %969 = vmatpush1.bf16.msra.mxu0 0
      %970 = vmatprep.subr.bf16.mxu0 0
      %971 = vmatpush1.bf16.msra.mxu0 0
      %972 = vmatprep.subr.bf16.mxu0 0
      %973 = vmatpush1.bf16.msra.mxu0 0
      %974 = vmatprep.subr.bf16.mxu0 0
      %975 = vmatpush1.bf16.msra.mxu0 0
      %976 = vmatprep.mubr.bf16.mxu0 0
      %977 = vmatmul.mubr.bf16.gmra.mrb[0].mxu0 %v939
      %v978 = vpop.f32.mrb[0].mxu0
      %v979 = vadd.f32 0.0, %v978
      %v980 = vpop.f32.mrb[0].mxu0
      %v981 = vpop.f32.mrb[0].mxu0
      %v982 = vadd.f32 0.0, %v981
      %v983 = vpop.f32.mrb[0].mxu0
      %984 = vmatprep.mubr.bf16.mxu0 0
      %985 = vmatmul.mubr.bf16.gmra.mrb[0].mxu0 %v942
      %v986 = vpop.f32.mrb[0].mxu0
      %v987 = vadd.f32 0.0, %v986
      %v988 = vpop.f32.mrb[0].mxu0
      %v989 = vpop.f32.mrb[0].mxu0
      %v990 = vadd.f32 0.0, %v989
      %v991 = vpop.f32.mrb[0].mxu0
      %992 = vdwg.mxu0
      %v993 = vpack.c.bf16 %v982, %v979
      %v994 = vpack.c.bf16 %v990, %v987
      %v1003 = vunpack.c.l.b16 %v591
      %v1004 = vunpack.c.l.b16 %v592
      %v1005 = vunpack.c.l.b16 %v593
      %v1006 = vunpack.c.l.b16 %v594
      %v1007 = vunpack.c.l.b16 %v595
      %v1008 = vunpack.c.l.b16 %v596
      %v1009 = vunpack.c.l.b16 %v597
      %v1010 = vunpack.c.l.b16 %v598
      %v1011 = vpack.c.b16 %v1004, %v1003
      %v1012 = vpack.c.b16 %v1006, %v1005
      %v1013 = vpack.c.b16 %v1008, %v1007
      %v1014 = vpack.c.b16 %v1010, %v1009
      %v1020 = vsel %vm629, %v993, 0
      %v1023 = vsel %vm629, %v994, 0
      %1025 = vmatprep.subr.bf16.mxu0 0
      %1026 = vmatpush1.bf16.msra.mxu0 %v1011
      %1027 = vmatprep.subr.bf16.mxu0 0
      %1028 = vmatpush1.bf16.msra.mxu0 %v1012
      %1029 = vmatprep.subr.bf16.mxu0 0
      %1030 = vmatpush1.bf16.msra.mxu0 %v1013
      %1031 = vmatprep.subr.bf16.mxu0 0
      %1032 = vmatpush1.bf16.msra.mxu0 %v1014
      %1033 = vmatprep.subr.bf16.mxu0 0
      %1034 = vmatpush1.bf16.msra.mxu0 0
      %1035 = vmatprep.subr.bf16.mxu0 0
      %1036 = vmatpush1.bf16.msra.mxu0 0
      %1037 = vmatprep.subr.bf16.mxu0 0
      %1038 = vmatpush1.bf16.msra.mxu0 0
      %1039 = vmatprep.subr.bf16.mxu0 0
      %1040 = vmatpush1.bf16.msra.mxu0 0
      %1041 = vmatprep.subr.bf16.mxu0 0
      %1042 = vmatpush1.bf16.msra.mxu0 0
      %1043 = vmatprep.subr.bf16.mxu0 0
      %1044 = vmatpush1.bf16.msra.mxu0 0
      %1045 = vmatprep.subr.bf16.mxu0 0
      %1046 = vmatpush1.bf16.msra.mxu0 0
      %1047 = vmatprep.subr.bf16.mxu0 0
      %1048 = vmatpush1.bf16.msra.mxu0 0
      %1049 = vmatprep.subr.bf16.mxu0 0
      %1050 = vmatpush1.bf16.msra.mxu0 0
      %1051 = vmatprep.subr.bf16.mxu0 0
      %1052 = vmatpush1.bf16.msra.mxu0 0
      %1053 = vmatprep.subr.bf16.mxu0 0
      %1054 = vmatpush1.bf16.msra.mxu0 0
      %1055 = vmatprep.subr.bf16.mxu0 0
      %1056 = vmatpush1.bf16.msra.mxu0 0
      %1057 = vmatprep.mubr.bf16.mxu0 0
      %1058 = vmatmul.mubr.bf16.gmra.mrb[0].mxu0 %v1020
      %v1059 = vpop.f32.mrb[0].mxu0
      %v1060 = vadd.f32 0.0, %v1059
      %v1061 = vpop.f32.mrb[0].mxu0
      %v1062 = vpop.f32.mrb[0].mxu0
      %v1063 = vadd.f32 0.0, %v1062
      %v1064 = vpop.f32.mrb[0].mxu0
      %1065 = vmatprep.mubr.bf16.mxu0 0
      %1066 = vmatmul.mubr.bf16.gmra.mrb[0].mxu0 %v1023
      %v1067 = vpop.f32.mrb[0].mxu0
      %v1068 = vadd.f32 0.0, %v1067
      %v1069 = vpop.f32.mrb[0].mxu0
      %v1070 = vpop.f32.mrb[0].mxu0
      %v1071 = vadd.f32 0.0, %v1070
      %v1072 = vpop.f32.mrb[0].mxu0
      %1073 = vdwg.mxu0
      %v1082 = vunpack.c.l.b16 %v583
      %v1083 = vunpack.c.l.b16 %v584
      %v1084 = vunpack.c.l.b16 %v585
      %v1085 = vunpack.c.l.b16 %v586
      %v1086 = vunpack.c.l.b16 %v587
      %v1087 = vunpack.c.l.b16 %v588
      %v1088 = vunpack.c.l.b16 %v589
      %v1089 = vunpack.c.l.b16 %v590
      %v1090 = vpack.c.b16 %v1083, %v1082
      %v1091 = vpack.c.b16 %v1085, %v1084
      %v1092 = vpack.c.b16 %v1087, %v1086
      %v1093 = vpack.c.b16 %v1089, %v1088
      %v1099 = vsel %vm629, %v801, 0
      %v1102 = vsel %vm629, %v802, 0
      %1104 = vmatprep.subr.bf16.mxu0 0
      %1105 = vmatpush1.bf16.msra.mxu0 %v1090
      %1106 = vmatprep.subr.bf16.mxu0 0
      %1107 = vmatpush1.bf16.msra.mxu0 %v1091
      %1108 = vmatprep.subr.bf16.mxu0 0
      %1109 = vmatpush1.bf16.msra.mxu0 %v1092
      %1110 = vmatprep.subr.bf16.mxu0 0
      %1111 = vmatpush1.bf16.msra.mxu0 %v1093
      %1112 = vmatprep.subr.bf16.mxu0 0
      %1113 = vmatpush1.bf16.msra.mxu0 0
      %1114 = vmatprep.subr.bf16.mxu0 0
      %1115 = vmatpush1.bf16.msra.mxu0 0
      %1116 = vmatprep.subr.bf16.mxu0 0
      %1117 = vmatpush1.bf16.msra.mxu0 0
      %1118 = vmatprep.subr.bf16.mxu0 0
      %1119 = vmatpush1.bf16.msra.mxu0 0
      %1120 = vmatprep.subr.bf16.mxu0 0
      %1121 = vmatpush1.bf16.msra.mxu0 0
      %1122 = vmatprep.subr.bf16.mxu0 0
      %1123 = vmatpush1.bf16.msra.mxu0 0
      %1124 = vmatprep.subr.bf16.mxu0 0
      %1125 = vmatpush1.bf16.msra.mxu0 0
      %1126 = vmatprep.subr.bf16.mxu0 0
      %1127 = vmatpush1.bf16.msra.mxu0 0
      %1128 = vmatprep.subr.bf16.mxu0 0
      %1129 = vmatpush1.bf16.msra.mxu0 0
      %1130 = vmatprep.subr.bf16.mxu0 0
      %1131 = vmatpush1.bf16.msra.mxu0 0
      %1132 = vmatprep.subr.bf16.mxu0 0
      %1133 = vmatpush1.bf16.msra.mxu0 0
      %1134 = vmatprep.subr.bf16.mxu0 0
      %1135 = vmatpush1.bf16.msra.mxu0 0
      %1136 = vmatprep.mubr.bf16.mxu0 0
      %1137 = vmatmul.mubr.bf16.gmra.mrb[0].mxu0 %v1099
      %v1138 = vpop.f32.mrb[0].mxu0
      %v1139 = vadd.f32 %v1060, %v1138
      %v1140 = vpop.f32.mrb[0].mxu0
      %v1141 = vpop.f32.mrb[0].mxu0
      %v1142 = vadd.f32 %v1063, %v1141
      %v1143 = vpop.f32.mrb[0].mxu0
      %1144 = vmatprep.mubr.bf16.mxu0 0
      %1145 = vmatmul.mubr.bf16.gmra.mrb[0].mxu0 %v1102
      %v1146 = vpop.f32.mrb[0].mxu0
      %v1147 = vadd.f32 %v1068, %v1146
      %v1148 = vpop.f32.mrb[0].mxu0
      %v1149 = vpop.f32.mrb[0].mxu0
      %v1150 = vadd.f32 %v1071, %v1149
      %v1151 = vpop.f32.mrb[0].mxu0
      %1152 = vdwg.mxu0
      %v1153 = vld [vmem:[%s5] sm:$0x1]
      %v1155 = vlaneseq
      %v1156 = vshrl.u32 %v1155, 7
      %v1157 = vsub.s32 0, %v1156
      %v1158 = vrot.slane %v1153, %v1157
      %v1160 = vadd.f32 %v1139, %v1158
      %v1161 = vadd.f32 %v1142, %v1158
      %v1162 = vadd.f32 %v1147, %v1158
      %v1163 = vadd.f32 %v1150, %v1158
      %v1164 = vunpack.c.l.bf16 %v288
      %v1165 = vunpack.c.l.bf16 %v289
      %v1166 = vunpack.c.l.bf16 %v290
      %v1167 = vunpack.c.l.bf16 %v291
      %v1168 = vadd.f32 %v1160, %v1164
      %v1169 = vadd.f32 %v1161, %v1165
      %v1170 = vadd.f32 %v1162, %v1166
      %v1171 = vadd.f32 %v1163, %v1167
      %v1172 = vld [vmem:[%s6] sm:$0x1]
      %v1173 = vld [vmem:[%s7] sm:$0x1]
      %1174 = vadd.xlane.f32.xlu0 %v1168
      %v1175 = vpop.xlane.xlu0 %1174
      %1176 = vadd.xlane.f32.xlu0 %v1169
      %v1177 = vpop.xlane.xlu0 %1176
      %1178 = vadd.xlane.f32.xlu0 %v1170
      %v1179 = vpop.xlane.xlu0 %1178
      %1180 = vadd.xlane.f32.xlu0 %v1171
      %v1181 = vpop.xlane.xlu0 %1180
      %v1182 = vrcp.pop 128.0
      %v1183 = vmul.f32 %v1175, %v1182
      %v1184 = vmul.f32 %v1177, %v1182
      %v1185 = vmul.f32 %v1179, %v1182
      %v1186 = vmul.f32 %v1181, %v1182
      %v1187 = vsub.f32 %v1168, %v1183
      %v1188 = vsub.f32 %v1169, %v1184
      %v1189 = vsub.f32 %v1170, %v1185
      %v1190 = vsub.f32 %v1171, %v1186
      %v1191 = vmul.f32 %v1187, %v1187
      %v1192 = vmul.f32 %v1188, %v1188
      %v1193 = vmul.f32 %v1189, %v1189
      %v1194 = vmul.f32 %v1190, %v1190
      %1195 = vadd.xlane.f32.xlu0 %v1191
      %v1196 = vpop.xlane.xlu0 %1195
      %1197 = vadd.xlane.f32.xlu0 %v1192
      %v1198 = vpop.xlane.xlu0 %1197
      %1199 = vadd.xlane.f32.xlu0 %v1193
      %v1200 = vpop.xlane.xlu0 %1199
      %1201 = vadd.xlane.f32.xlu0 %v1194
      %v1202 = vpop.xlane.xlu0 %1201
      %v1203 = vmul.f32 %v1196, %v1182
      %v1204 = vmul.f32 %v1198, %v1182
      %v1205 = vmul.f32 %v1200, %v1182
      %v1206 = vmul.f32 %v1202, %v1182
      %v1207 = vadd.f32 %v1203, 1e-05
      %v1208 = vadd.f32 %v1204, 1e-05
      %v1209 = vadd.f32 %v1205, 1e-05
      %v1210 = vadd.f32 %v1206, 1e-05
      %v1211 = vrsqrt.pop %v1207
      %v1212 = vrsqrt.pop %v1208
      %v1213 = vrsqrt.pop %v1209
      %v1214 = vrsqrt.pop %v1210
      %v1215 = vmul.f32 %v1187, %v1211
      %v1216 = vmul.f32 %v1188, %v1212
      %v1217 = vmul.f32 %v1189, %v1213
      %v1218 = vmul.f32 %v1190, %v1214
      %v1220 = vlaneseq
      %v1221 = vshrl.u32 %v1220, 7
      %v1222 = vsub.s32 0, %v1221
      %v1223 = vrot.slane %v1172, %v1222
      %v1225 = vmul.f32 %v1215, %v1223
      %v1226 = vmul.f32 %v1216, %v1223
      %v1227 = vmul.f32 %v1217, %v1223
      %v1228 = vmul.f32 %v1218, %v1223
      %v1230 = vlaneseq
      %v1231 = vshrl.u32 %v1230, 7
      %v1232 = vsub.s32 0, %v1231
      %v1233 = vrot.slane %v1173, %v1232
      %v1235 = vadd.f32 %v1225, %v1233
      %v1236 = vadd.f32 %v1226, %v1233
      %v1237 = vadd.f32 %v1227, %v1233
      %v1238 = vadd.f32 %v1228, %v1233
      %v1239 = vpack.c.bf16 %v1236, %v1235
      %v1240 = vpack.c.bf16 %v1238, %v1237
      %v1243 = vunpack.c.l.b16 %v1239
      %v1244 = vunpack.c.h.b16 %v1239
      %v1245 = vunpack.c.l.b16 %v1240
      %v1246 = vunpack.c.h.b16 %v1240
      %v1247 = vpack.c.b16 %v1243, %v1243
      %v1248 = vpack.c.b16 %v1244, %v1244
      %v1249 = vpack.c.b16 %v1245, %v1245
      %v1250 = vpack.c.b16 %v1246, %v1246
      %1255 = vst [vmem:[%s285] sm:$0xf] %v1247
      %1256 = vst [vmem:[%s285 + $0x4] sm:$0xf] %v1248
      %1257 = vst [vmem:[%s285 + $0x8] sm:$0xf] %v1249
      %1258 = vst [vmem:[%s285 + $0xc] sm:$0xf] %v1250
      %p1259 = scmp.lt.s32.totalorder %s25, 1
      %s1260 = scalar_select %p1259, %s25, 1
      %s1261 = smul.addr %s1260, 4
      %s1262 = smul.addr %s1261, 4
      %s1263 = scalar_lea.vmem %s8, %s1262
      // Predicated region
      $region49: #{transformer_forward.15} parent=47 // pred_check
        %p1264 = pneg %p195
      $region50: #{transformer_forward.15} parent=47 // pred_check_branch
        %1266 = sbr.rel (%p1264) target = $region52
      $region51: #{transformer_forward.15} parent=47 // pred_region
        _
      $region52: #{transformer_forward.15} parent=47 // pred_fallthru
        _
    $region48: #{transformer_forward.15} parent=5 // pred_fallthru
      _
    %p1267 = scmp.le.s32.totalorder 2, %s20
    // Predicated region
    $region53: #{transformer_forward.15} parent=5 // pred_check
      %p1268 = pneg %p1267
    $region54: #{transformer_forward.15} parent=5 // pred_check_branch
      %1270 = sbr.rel (%p1268) target = $region56
    $region55: #{transformer_forward.15} parent=5 // pred_region
      %s1271 = ssub.s32 %s20, 2
      // Predicated region
      $region57: #{transformer_forward.15} parent=55 // pred_check
        %p1272 = pneg %p201
      $region58: #{transformer_forward.15} parent=55 // pred_check_branch
        %1274 = sbr.rel (%p1272) target = $region60
      $region59: #{transformer_forward.15} parent=55 // pred_region
        %p1275 = scmp.lt.s32.totalorder %s26, 1
        %s1276 = scalar_select %p1275, %s26, 1
        %s1277 = smul.addr %s1276, 4
        %s1278 = smul.addr %s1277, 4
        %s1279 = scalar_lea.vmem %s8, %s1278
      $region60: #{transformer_forward.15} parent=55 // pred_fallthru
        _
    $region56: #{transformer_forward.15} parent=5 // pred_fallthru
      _
  $region6: #{transformer_forward.15} parent=0 // loop_footer
    %s24 = sadd.s32 1, %s20
  $region7: #{transformer_forward.15} parent=0 // loop_footer_branch
    %19 = sbr.rel target = $region3
  $region8: #{transformer_forward.15} parent=0 // loop_exit
    _

// kernel: transformer_forward.16
$region0: #{transformer_forward.16}
  #allocation0 [shape = 'u32[]', space=smem, size = 0x4, offset = 0x4, fixed_abs, tag = 'smem constant byte address 0x4 - core index']
  #allocation1 [shape = 'u32[144,128]{1,0:T(1,128)}', space=vmem, size = 0x12000, scoped, tag = 'internal scratch']
  #allocation2 [shape = 's32[1]{0}', space=sflag, size = 0x4, scoped, tag = 'scoped memory for transformer_forward.16']
  #allocation3 [shape = 'u8[512]{0}', space=smem, size = 0x200, scoped, tag = 'prefetched SMEM operand 0']
  %s0 = inlined_call_operand.vmem [shape: s32[2], index: 0, kind: input, shape index: {}]
  %s1 = inlined_call_operand.vmem [shape: bf16[2,32,128], index: 1, kind: input, shape index: {}]
  %s2 = inlined_call_operand.vmem [shape: bf16[2,32,128], index: 2, kind: input, shape index: {}]
  %s3 = inlined_call_operand.vmem [shape: bf16[128,128], index: 3, kind: input, shape index: {}]
  %s4 = inlined_call_operand.vmem [shape: f32[1,128], index: 4, kind: input, shape index: {}]
  %s5 = inlined_call_operand.vmem [shape: bf16[128,256], index: 5, kind: input, shape index: {}]
  %s6 = inlined_call_operand.vmem [shape: f32[1,256], index: 6, kind: input, shape index: {}]
  %s7 = inlined_call_operand.vmem [shape: bf16[128,128], index: 7, kind: input, shape index: {}]
  %s8 = inlined_call_operand.vmem [shape: f32[1,128], index: 8, kind: input, shape index: {}]
  %s9 = inlined_call_operand.vmem [shape: f32[1,128], index: 9, kind: input, shape index: {}]
  %s10 = inlined_call_operand.vmem [shape: f32[1,128], index: 10, kind: input, shape index: {}]
  %s11 = inlined_call_operand.vmem [shape: bf16[2,32,128], index: 11, kind: output, shape index: {}]
  %s12 = sld [smem:[#allocation0]]
  $region73: #{transformer_forward.16} parent=0
    _
  %s14 = ssub.s32 1, %s12
  %s15 = scalar_select 0, %s14, %s12
  %s16 = sshll.u32 %s0, 4
  %s17 = int_to_ptr.vmem [resolvable:$true] %s16
  %19 = dma.vmem_to_smem %s17, 16, [#allocation3], [#allocation2]
  %20 = dma.done [#allocation2], 16
  %21 = sfence
  loop: start=0, step=1, limit=4
  $region2: #{transformer_forward.16} parent=0 // loop_pre_header
    _
  $region3: #{transformer_forward.16} parent=0 // loop_header
    %s23 = sphi 0, %s27
    %p24 = scmp.ge.s32.totalorder %s23, 4
    %s33 = sphi 0, %s35
    %s36 = sphi 0, %s33
    %s37 = sphi 0, %s36
    %s53 = sphi 0, %s37
    %s59 = sphi 0, %s61
    %s62 = sphi 0, %s59
    %s63 = sphi 0, %s62
    %s79 = sphi 0, %s63
    %s83 = sphi 0, %s83
    %s85 = sphi 0, %s83
    %s86 = sphi 0, %s85
    %s100 = sphi 0, %s86
    %s104 = sphi 0, %s104
    %s106 = sphi 0, %s104
    %s107 = sphi 0, %s106
    %s121 = sphi 0, %s107
    %s125 = sphi 0, %s125
    %s127 = sphi 0, %s125
    %s128 = sphi 0, %s127
    %s142 = sphi 0, %s128
    %s146 = sphi 0, %s146
    %s148 = sphi 0, %s146
    %s149 = sphi 0, %s148
    %s163 = sphi 0, %s149
    %s167 = sphi 0, %s167
    %s169 = sphi 0, %s167
    %s170 = sphi 0, %s169
    %s184 = sphi 0, %s170
    %s188 = sphi 0, %s188
    %s190 = sphi 0, %s188
    %s191 = sphi 0, %s190
    %s205 = sphi 0, %s191
    %s209 = sphi 0, %s209
    %s211 = sphi 0, %s209
    %s212 = sphi 0, %s211
    %s226 = sphi 0, %s212
    %s230 = sphi 0, %s230
    %s232 = sphi 0, %s230
    %s233 = sphi 0, %s232
    %s247 = sphi 0, %s233
    %s253 = sphi 0, %s255
    %s256 = sphi 0, %s253
    %s257 = sphi 0, %s256
    %s273 = sphi 0, %s257
  $region4: #{transformer_forward.16} parent=0 // loop_header_branch
    %26 = sbr.rel (%p24) target = $region8
  $region5: #{transformer_forward.16} parent=0 // loop_body
    %s28 = ssub.s32 %s23, 1
    %s29 = ssub.s32 %s23, 2
    %s30 = sadd.s32 %s23, 1
    %s31 = ssub.s32 %s23, %s30
    %p32 = scmp.eq.s32.totalorder %s31, 0
    %s34 = sadd.s32 %s33, 1
    %s35 = scalar_select %p32, %s33, %s34
    %p38 = pneg %p32
    %p39 = scmp.eq.s32.totalorder %s23, 1
    %p40 = por %p38, %p39
    %p41 = scmp.ne.s32.totalorder %s33, %s36
    %p42 = scmp.eq.s32.totalorder %s23, 0
    %p43 = por %p41, %p42
    %p44 = scmp.ne.s32.totalorder %s33, %s36
    %p45 = scmp.eq.s32.totalorder %s28, 1
    %p46 = por %p44, %p45
    %p47 = scmp.ne.s32.totalorder %s36, %s37
    %p48 = scmp.eq.s32.totalorder %s28, 0
    %p49 = por %p47, %p48
    %p50 = scmp.ne.s32.totalorder %s36, %s37
    %p51 = scmp.eq.s32.totalorder %s29, 1
    %p52 = por %p50, %p51
    %p54 = scmp.ne.s32.totalorder %s37, %s53
    %p55 = scmp.eq.s32.totalorder %s29, 0
    %p56 = por %p54, %p55
    %s57 = ssub.s32 %s23, %s30
    %p58 = scmp.eq.s32.totalorder %s57, 0
    %s60 = sadd.s32 %s59, 1
    %s61 = scalar_select %p58, %s59, %s60
    %p64 = pneg %p58
    %p65 = scmp.eq.s32.totalorder %s23, 1
    %p66 = por %p64, %p65
    %p67 = scmp.ne.s32.totalorder %s59, %s62
    %p68 = scmp.eq.s32.totalorder %s23, 0
    %p69 = por %p67, %p68
    %p70 = scmp.ne.s32.totalorder %s59, %s62
    %p71 = scmp.eq.s32.totalorder %s28, 1
    %p72 = por %p70, %p71
    %p73 = scmp.ne.s32.totalorder %s62, %s63
    %p74 = scmp.eq.s32.totalorder %s28, 0
    %p75 = por %p73, %p74
    %p76 = scmp.ne.s32.totalorder %s62, %s63
    %p77 = scmp.eq.s32.totalorder %s29, 1
    %p78 = por %p76, %p77
    %p80 = scmp.ne.s32.totalorder %s63, %s79
    %p81 = scmp.eq.s32.totalorder %s29, 0
    %p82 = por %p80, %p81
    %s84 = sadd.s32 %s83, 1
    %p87 = scmp.eq.s32.totalorder %s23, 1
    %p88 = scmp.ne.s32.totalorder %s83, %s85
    %p89 = scmp.eq.s32.totalorder %s23, 0
    %p90 = por %p88, %p89
    %p91 = scmp.ne.s32.totalorder %s83, %s85
    %p92 = scmp.eq.s32.totalorder %s28, 1
    %p93 = por %p91, %p92
    %p94 = scmp.ne.s32.totalorder %s85, %s86
    %p95 = scmp.eq.s32.totalorder %s28, 0
    %p96 = por %p94, %p95
    %p97 = scmp.ne.s32.totalorder %s85, %s86
    %p98 = scmp.eq.s32.totalorder %s29, 1
    %p99 = por %p97, %p98
    %p101 = scmp.ne.s32.totalorder %s86, %s100
    %p102 = scmp.eq.s32.totalorder %s29, 0
    %p103 = por %p101, %p102
    %s105 = sadd.s32 %s104, 1
    %p108 = scmp.eq.s32.totalorder %s23, 1
    %p109 = scmp.ne.s32.totalorder %s104, %s106
    %p110 = scmp.eq.s32.totalorder %s23, 0
    %p111 = por %p109, %p110
    %p112 = scmp.ne.s32.totalorder %s104, %s106
    %p113 = scmp.eq.s32.totalorder %s28, 1
    %p114 = por %p112, %p113
    %p115 = scmp.ne.s32.totalorder %s106, %s107
    %p116 = scmp.eq.s32.totalorder %s28, 0
    %p117 = por %p115, %p116
    %p118 = scmp.ne.s32.totalorder %s106, %s107
    %p119 = scmp.eq.s32.totalorder %s29, 1
    %p120 = por %p118, %p119
    %p122 = scmp.ne.s32.totalorder %s107, %s121
    %p123 = scmp.eq.s32.totalorder %s29, 0
    %p124 = por %p122, %p123
    %s126 = sadd.s32 %s125, 1
    %p129 = scmp.eq.s32.totalorder %s23, 1
    %p130 = scmp.ne.s32.totalorder %s125, %s127
    %p131 = scmp.eq.s32.totalorder %s23, 0
    %p132 = por %p130, %p131
    %p133 = scmp.ne.s32.totalorder %s125, %s127
    %p134 = scmp.eq.s32.totalorder %s28, 1
    %p135 = por %p133, %p134
    %p136 = scmp.ne.s32.totalorder %s127, %s128
    %p137 = scmp.eq.s32.totalorder %s28, 0
    %p138 = por %p136, %p137
    %p139 = scmp.ne.s32.totalorder %s127, %s128
    %p140 = scmp.eq.s32.totalorder %s29, 1
    %p141 = por %p139, %p140
    %p143 = scmp.ne.s32.totalorder %s128, %s142
    %p144 = scmp.eq.s32.totalorder %s29, 0
    %p145 = por %p143, %p144
    %s147 = sadd.s32 %s146, 1
    %p150 = scmp.eq.s32.totalorder %s23, 1
    %p151 = scmp.ne.s32.totalorder %s146, %s148
    %p152 = scmp.eq.s32.totalorder %s23, 0
    %p153 = por %p151, %p152
    %p154 = scmp.ne.s32.totalorder %s146, %s148
    %p155 = scmp.eq.s32.totalorder %s28, 1
    %p156 = por %p154, %p155
    %p157 = scmp.ne.s32.totalorder %s148, %s149
    %p158 = scmp.eq.s32.totalorder %s28, 0
    %p159 = por %p157, %p158
    %p160 = scmp.ne.s32.totalorder %s148, %s149
    %p161 = scmp.eq.s32.totalorder %s29, 1
    %p162 = por %p160, %p161
    %p164 = scmp.ne.s32.totalorder %s149, %s163
    %p165 = scmp.eq.s32.totalorder %s29, 0
    %p166 = por %p164, %p165
    %s168 = sadd.s32 %s167, 1
    %p171 = scmp.eq.s32.totalorder %s23, 1
    %p172 = scmp.ne.s32.totalorder %s167, %s169
    %p173 = scmp.eq.s32.totalorder %s23, 0
    %p174 = por %p172, %p173
    %p175 = scmp.ne.s32.totalorder %s167, %s169
    %p176 = scmp.eq.s32.totalorder %s28, 1
    %p177 = por %p175, %p176
    %p178 = scmp.ne.s32.totalorder %s169, %s170
    %p179 = scmp.eq.s32.totalorder %s28, 0
    %p180 = por %p178, %p179
    %p181 = scmp.ne.s32.totalorder %s169, %s170
    %p182 = scmp.eq.s32.totalorder %s29, 1
    %p183 = por %p181, %p182
    %p185 = scmp.ne.s32.totalorder %s170, %s184
    %p186 = scmp.eq.s32.totalorder %s29, 0
    %p187 = por %p185, %p186
    %s189 = sadd.s32 %s188, 1
    %p192 = scmp.eq.s32.totalorder %s23, 1
    %p193 = scmp.ne.s32.totalorder %s188, %s190
    %p194 = scmp.eq.s32.totalorder %s23, 0
    %p195 = por %p193, %p194
    %p196 = scmp.ne.s32.totalorder %s188, %s190
    %p197 = scmp.eq.s32.totalorder %s28, 1
    %p198 = por %p196, %p197
    %p199 = scmp.ne.s32.totalorder %s190, %s191
    %p200 = scmp.eq.s32.totalorder %s28, 0
    %p201 = por %p199, %p200
    %p202 = scmp.ne.s32.totalorder %s190, %s191
    %p203 = scmp.eq.s32.totalorder %s29, 1
    %p204 = por %p202, %p203
    %p206 = scmp.ne.s32.totalorder %s191, %s205
    %p207 = scmp.eq.s32.totalorder %s29, 0
    %p208 = por %p206, %p207
    %s210 = sadd.s32 %s209, 1
    %p213 = scmp.eq.s32.totalorder %s23, 1
    %p214 = scmp.ne.s32.totalorder %s209, %s211
    %p215 = scmp.eq.s32.totalorder %s23, 0
    %p216 = por %p214, %p215
    %p217 = scmp.ne.s32.totalorder %s209, %s211
    %p218 = scmp.eq.s32.totalorder %s28, 1
    %p219 = por %p217, %p218
    %p220 = scmp.ne.s32.totalorder %s211, %s212
    %p221 = scmp.eq.s32.totalorder %s28, 0
    %p222 = por %p220, %p221
    %p223 = scmp.ne.s32.totalorder %s211, %s212
    %p224 = scmp.eq.s32.totalorder %s29, 1
    %p225 = por %p223, %p224
    %p227 = scmp.ne.s32.totalorder %s212, %s226
    %p228 = scmp.eq.s32.totalorder %s29, 0
    %p229 = por %p227, %p228
    %s231 = sadd.s32 %s230, 1
    %p234 = scmp.eq.s32.totalorder %s23, 1
    %p235 = scmp.ne.s32.totalorder %s230, %s232
    %p236 = scmp.eq.s32.totalorder %s23, 0
    %p237 = por %p235, %p236
    %p238 = scmp.ne.s32.totalorder %s230, %s232
    %p239 = scmp.eq.s32.totalorder %s28, 1
    %p240 = por %p238, %p239
    %p241 = scmp.ne.s32.totalorder %s232, %s233
    %p242 = scmp.eq.s32.totalorder %s28, 0
    %p243 = por %p241, %p242
    %p244 = scmp.ne.s32.totalorder %s232, %s233
    %p245 = scmp.eq.s32.totalorder %s29, 1
    %p246 = por %p244, %p245
    %p248 = scmp.ne.s32.totalorder %s233, %s247
    %p249 = scmp.eq.s32.totalorder %s29, 0
    %p250 = por %p248, %p249
    %s251 = ssub.s32 %s23, %s30
    %p252 = scmp.eq.s32.totalorder %s251, 0
    %s254 = sadd.s32 %s253, 1
    %s255 = scalar_select %p252, %s253, %s254
    %p258 = pneg %p252
    %p259 = scmp.eq.s32.totalorder %s23, 1
    %p260 = por %p258, %p259
    %p261 = scmp.ne.s32.totalorder %s253, %s256
    %p262 = scmp.eq.s32.totalorder %s23, 0
    %p263 = por %p261, %p262
    %p264 = scmp.ne.s32.totalorder %s253, %s256
    %p265 = scmp.eq.s32.totalorder %s28, 1
    %p266 = por %p264, %p265
    %p267 = scmp.ne.s32.totalorder %s256, %s257
    %p268 = scmp.eq.s32.totalorder %s28, 0
    %p269 = por %p267, %p268
    %p270 = scmp.ne.s32.totalorder %s256, %s257
    %p271 = scmp.eq.s32.totalorder %s29, 1
    %p272 = por %p270, %p271
    %p274 = scmp.ne.s32.totalorder %s257, %s273
    %p275 = scmp.eq.s32.totalorder %s29, 0
    %p276 = por %p274, %p275
    %p277 = scmp.le.s32.totalorder 1, %s23
    %p278 = scmp.lt.s32.totalorder %s23, 3
    %p279 = pnand %p277, %p278
    %p280 = pneg %p279
    // Predicated region
    $region9: #{transformer_forward.16} parent=5 // pred_check
      _
    $region10: #{transformer_forward.16} parent=5 // pred_check_branch
      %282 = sbr.rel (%p279) target = $region12
    $region11: #{transformer_forward.16} parent=5 // pred_region
      %s283 = ssub.s32 %s23, 1
      // Predicated region
      $region13: #{transformer_forward.16} parent=11 // pred_check
        %p284 = pneg %p96
      $region14: #{transformer_forward.16} parent=11 // pred_check_branch
        %286 = sbr.rel (%p284) target = $region16
      $region15: #{transformer_forward.16} parent=11 // pred_region
        _
      $region16: #{transformer_forward.16} parent=11 // pred_fallthru
        _
      // Predicated region
      $region17: #{transformer_forward.16} parent=11 // pred_check
        %p287 = pneg %p117
      $region18: #{transformer_forward.16} parent=11 // pred_check_branch
        %289 = sbr.rel (%p287) target = $region20
      $region19: #{transformer_forward.16} parent=11 // pred_region
        _
      $region20: #{transformer_forward.16} parent=11 // pred_fallthru
        _
      // Predicated region
      $region21: #{transformer_forward.16} parent=11 // pred_check
        %p290 = pneg %p138
      $region22: #{transformer_forward.16} parent=11 // pred_check_branch
        %292 = sbr.rel (%p290) target = $region24
      $region23: #{transformer_forward.16} parent=11 // pred_region
        _
      $region24: #{transformer_forward.16} parent=11 // pred_fallthru
        _
      // Predicated region
      $region25: #{transformer_forward.16} parent=11 // pred_check
        %p293 = pneg %p159
      $region26: #{transformer_forward.16} parent=11 // pred_check_branch
        %295 = sbr.rel (%p293) target = $region28
      $region27: #{transformer_forward.16} parent=11 // pred_region
        _
      $region28: #{transformer_forward.16} parent=11 // pred_fallthru
        _
      // Predicated region
      $region29: #{transformer_forward.16} parent=11 // pred_check
        %p296 = pneg %p180
      $region30: #{transformer_forward.16} parent=11 // pred_check_branch
        %298 = sbr.rel (%p296) target = $region32
      $region31: #{transformer_forward.16} parent=11 // pred_region
        _
      $region32: #{transformer_forward.16} parent=11 // pred_fallthru
        _
      // Predicated region
      $region33: #{transformer_forward.16} parent=11 // pred_check
        %p299 = pneg %p201
      $region34: #{transformer_forward.16} parent=11 // pred_check_branch
        %301 = sbr.rel (%p299) target = $region36
      $region35: #{transformer_forward.16} parent=11 // pred_region
        _
      $region36: #{transformer_forward.16} parent=11 // pred_fallthru
        _
      // Predicated region
      $region37: #{transformer_forward.16} parent=11 // pred_check
        %p302 = pneg %p222
      $region38: #{transformer_forward.16} parent=11 // pred_check_branch
        %304 = sbr.rel (%p302) target = $region40
      $region39: #{transformer_forward.16} parent=11 // pred_region
        _
      $region40: #{transformer_forward.16} parent=11 // pred_fallthru
        _
      // Predicated region
      $region41: #{transformer_forward.16} parent=11 // pred_check
        %p305 = pneg %p243
      $region42: #{transformer_forward.16} parent=11 // pred_check_branch
        %307 = sbr.rel (%p305) target = $region44
      $region43: #{transformer_forward.16} parent=11 // pred_region
        _
      $region44: #{transformer_forward.16} parent=11 // pred_fallthru
        _
    $region12: #{transformer_forward.16} parent=5 // pred_fallthru
      _
    %p308 = scmp.lt.s32.totalorder %s23, 2
    // Predicated region
    $region45: #{transformer_forward.16} parent=5 // pred_check
      %p309 = pneg %p308
    $region46: #{transformer_forward.16} parent=5 // pred_check_branch
      %311 = sbr.rel (%p309) target = $region48
    $region47: #{transformer_forward.16} parent=5 // pred_region
      // Predicated region
      $region49: #{transformer_forward.16} parent=47 // pred_check
        %p312 = pneg %p43
      $region50: #{transformer_forward.16} parent=47 // pred_check_branch
        %314 = sbr.rel (%p312) target = $region52
      $region51: #{transformer_forward.16} parent=47 // pred_region
        %p315 = scmp.lt.s32.totalorder %s23, 1
        %s316 = scalar_select %p315, %s23, 1
        %s317 = smul.addr %s316, 4
        %s318 = smul.addr %s317, 4
        %s319 = scalar_lea.vmem %s1, %s318
      $region52: #{transformer_forward.16} parent=47 // pred_fallthru
        _
      // Predicated region
      $region53: #{transformer_forward.16} parent=47 // pred_check
        %p320 = pneg %p69
      $region54: #{transformer_forward.16} parent=47 // pred_check_branch
        %322 = sbr.rel (%p320) target = $region56
      $region55: #{transformer_forward.16} parent=47 // pred_region
        %p323 = scmp.lt.s32.totalorder %s23, 1
        %s324 = scalar_select %p323, %s23, 1
        %s325 = smul.addr %s324, 4
        %s326 = smul.addr %s325, 4
        %s327 = scalar_lea.vmem %s2, %s326
      $region56: #{transformer_forward.16} parent=47 // pred_fallthru
        _
    $region48: #{transformer_forward.16} parent=5 // pred_fallthru
      _
    %p328 = scmp.le.s32.totalorder 1, %s23
    %p329 = scmp.lt.s32.totalorder %s23, 3
    %p330 = pnand %p328, %p329
    %p331 = pneg %p330
    // Predicated region
    $region57: #{transformer_forward.16} parent=5 // pred_check
      _
    $region58: #{transformer_forward.16} parent=5 // pred_check_branch
      %333 = sbr.rel (%p330) target = $region60
    $region59: #{transformer_forward.16} parent=5 // pred_region
      %s334 = ssub.s32 %s23, 1
      %p335 = scmp.lt.s32.totalorder %s28, 1
      %s336 = scalar_select %p335, %s28, 1
      %s337 = smul.addr %s336, 4
      %s338 = smul.addr %s337, 4
      %s339 = scalar_lea.vmem %s1, %s338
      %p340 = pneg %p49
      %p341 = pneg %p46
      %p342 = scmp.lt.s32.totalorder %s28, 1
      %s343 = scalar_select %p342, %s28, 1
      %s344 = smul.addr %s343, 4
      %s345 = smul.addr %s344, 4
      %s346 = scalar_lea.vmem %s2, %s345
      %p347 = pneg %p75
      %p348 = pneg %p72
      %p349 = pneg %p96
      %p350 = pneg %p93
      %p351 = pneg %p117
      %p352 = pneg %p114
      %p353 = pneg %p138
      %p354 = pneg %p135
      %p355 = pneg %p159
      %p356 = pneg %p156
      %p357 = pneg %p180
      %p358 = pneg %p177
      %p359 = pneg %p201
      %p360 = pneg %p198
      %p361 = pneg %p222
      %p362 = pneg %p219
      %p363 = pneg %p243
      %p364 = pneg %p240
      %p365 = pneg %p269
      %p366 = pneg %p266
      %p367 = scmp.lt.s32.totalorder %s28, 1
      %s368 = scalar_select %p367, %s28, 1
      %s369 = smul.addr %s368, 4
      %s370 = smul.addr %s369, 4
      %s371 = scalar_lea.vmem %s11, %s370
      %p372 = scmp.lt.s32.totalorder %s28, 1
      %s373 = scalar_select %p372, %s28, 1
      %s374 = smul.addr %s373, 4
      %s375 = smul.addr %s374, 4
      %s376 = scalar_lea.vmem %s1, %s375
      %p377 = scmp.lt.s32.totalorder %s28, 1
      %s378 = scalar_select %p377, %s28, 1
      %s379 = smul.addr %s378, 4
      %s380 = smul.addr %s379, 4
      %s381 = scalar_lea.vmem %s2, %s380
      %p382 = scmp.lt.s32.totalorder %s28, 1
      %s383 = scalar_select %p382, %s28, 1
      %s384 = smul.addr %s383, 4
      %s385 = smul.addr %s384, 4
      %s386 = scalar_lea.vmem %s11, %s385
      %s388 = sld [smem:[#allocation3 + %s28]]
      %v389 = vld [vmem:[%s376] sm:$0xf]
      %v390 = vld [vmem:[%s376 + $0x4] sm:$0xf]
      %v391 = vld [vmem:[%s376 + $0x8] sm:$0xf]
      %v392 = vld [vmem:[%s376 + $0xc] sm:$0xf]
      %v393 = vld [vmem:[%s381] sm:$0xf]
      %v394 = vld [vmem:[%s381 + $0x4] sm:$0xf]
      %v395 = vld [vmem:[%s381 + $0x8] sm:$0xf]
      %v396 = vld [vmem:[%s381 + $0xc] sm:$0xf]
      %v397 = vld [vmem:[%s3] sm:$0xf]
      %v398 = vld [vmem:[%s3 + $0x4] sm:$0xf]
      %v399 = vld [vmem:[%s3 + $0x8] sm:$0xf]
      %v400 = vld [vmem:[%s3 + $0xc] sm:$0xf]
      %v401 = vld [vmem:[%s3 + $0x10] sm:$0xf]
      %v402 = vld [vmem:[%s3 + $0x14] sm:$0xf]
      %v403 = vld [vmem:[%s3 + $0x18] sm:$0xf]
      %v404 = vld [vmem:[%s3 + $0x1c] sm:$0xf]
      %v405 = vld [vmem:[%s3 + $0x20] sm:$0xf]
      %v406 = vld [vmem:[%s3 + $0x24] sm:$0xf]
      %v407 = vld [vmem:[%s3 + $0x28] sm:$0xf]
      %v408 = vld [vmem:[%s3 + $0x2c] sm:$0xf]
      %v409 = vld [vmem:[%s3 + $0x30] sm:$0xf]
      %v410 = vld [vmem:[%s3 + $0x34] sm:$0xf]
      %v411 = vld [vmem:[%s3 + $0x38] sm:$0xf]
      %v412 = vld [vmem:[%s3 + $0x3c] sm:$0xf]
      %v413 = vld [vmem:[%s4] sm:$0x1]
      %v415 = vlaneseq
      %v416 = vshrl.u32 %v415, 7
      %v417 = vsub.s32 0, %v416
      %v418 = vrot.slane %v413, %v417
      %v424 = vunpack.c.l.b16 %v389
      %v425 = vunpack.c.l.b16 %v390
      %v426 = vunpack.c.l.b16 %v391
      %v427 = vunpack.c.l.b16 %v392
      %v428 = vpack.c.b16 %v425, %v424
      %v429 = vpack.c.b16 %v427, %v426
      %v448 = vunpack.c.l.b16 %v397
      %v449 = vunpack.c.l.b16 %v398
      %v450 = vunpack.c.l.b16 %v399
      %v451 = vunpack.c.l.b16 %v400
      %v452 = vunpack.c.l.b16 %v401
      %v453 = vunpack.c.l.b16 %v402
      %v454 = vunpack.c.l.b16 %v403
      %v455 = vunpack.c.l.b16 %v404
      %v456 = vunpack.c.l.b16 %v405
      %v457 = vunpack.c.l.b16 %v406
      %v458 = vunpack.c.l.b16 %v407
      %v459 = vunpack.c.l.b16 %v408
      %v460 = vunpack.c.l.b16 %v409
      %v461 = vunpack.c.l.b16 %v410
      %v462 = vunpack.c.l.b16 %v411
      %v463 = vunpack.c.l.b16 %v412
      %v464 = vpack.c.b16 %v449, %v448
      %v465 = vpack.c.b16 %v451, %v450
      %v466 = vpack.c.b16 %v453, %v452
      %v467 = vpack.c.b16 %v455, %v454
      %v468 = vpack.c.b16 %v457, %v456
      %v469 = vpack.c.b16 %v459, %v458
      %v470 = vpack.c.b16 %v461, %v460
      %v471 = vpack.c.b16 %v463, %v462
      %480 = vmatprep.subr.bf16.mxu0 0
      %481 = vmatpush1.bf16.msra.mxu0 %v464
      %482 = vmatprep.subr.bf16.mxu0 0
      %483 = vmatpush1.bf16.msra.mxu0 %v465
      %484 = vmatprep.subr.bf16.mxu0 0
      %485 = vmatpush1.bf16.msra.mxu0 %v466
      %486 = vmatprep.subr.bf16.mxu0 0
      %487 = vmatpush1.bf16.msra.mxu0 %v467
      %488 = vmatprep.subr.bf16.mxu0 0
      %489 = vmatpush1.bf16.msra.mxu0 %v468
      %490 = vmatprep.subr.bf16.mxu0 0
      %491 = vmatpush1.bf16.msra.mxu0 %v469
      %492 = vmatprep.subr.bf16.mxu0 0
      %493 = vmatpush1.bf16.msra.mxu0 %v470
      %494 = vmatprep.subr.bf16.mxu0 0
      %495 = vmatpush1.bf16.msra.mxu0 %v471
      %496 = vmatprep.subr.bf16.mxu0 0
      %497 = vmatpush1.bf16.msra.mxu0 0
      %498 = vmatprep.subr.bf16.mxu0 0
      %499 = vmatpush1.bf16.msra.mxu0 0
      %500 = vmatprep.subr.bf16.mxu0 0
      %501 = vmatpush1.bf16.msra.mxu0 0
      %502 = vmatprep.subr.bf16.mxu0 0
      %503 = vmatpush1.bf16.msra.mxu0 0
      %504 = vmatprep.subr.bf16.mxu0 0
      %505 = vmatpush1.bf16.msra.mxu0 0
      %506 = vmatprep.subr.bf16.mxu0 0
      %507 = vmatpush1.bf16.msra.mxu0 0
      %508 = vmatprep.subr.bf16.mxu0 0
      %509 = vmatpush1.bf16.msra.mxu0 0
      %510 = vmatprep.subr.bf16.mxu0 0
      %511 = vmatpush1.bf16.msra.mxu0 0
      %512 = vmatprep.mubr.bf16.mxu0 0
      %513 = vmatmul.mubr.bf16.gmra.mrb[0].mxu0 %v428
      %v514 = vpop.f32.mrb[0].mxu0
      %v515 = vadd.f32 %v418, %v514
      %v516 = vpop.f32.mrb[0].mxu0
      %v517 = vpop.f32.mrb[0].mxu0
      %v518 = vadd.f32 %v418, %v517
      %v519 = vpop.f32.mrb[0].mxu0
      %520 = vmatprep.mubr.bf16.mxu0 0
      %521 = vmatmul.mubr.bf16.gmra.mrb[0].mxu0 %v429
      %v522 = vpop.f32.mrb[0].mxu0
      %v523 = vadd.f32 %v418, %v522
      %v524 = vpop.f32.mrb[0].mxu0
      %v525 = vpop.f32.mrb[0].mxu0
      %v526 = vadd.f32 %v418, %v525
      %v527 = vpop.f32.mrb[0].mxu0
      %528 = vdwg.mxu0
      %v529 = vld [vmem:[%s5] sm:$0xff]
      %v530 = vld [vmem:[%s5 + $0x8] sm:$0xff]
      %v531 = vld [vmem:[%s5 + $0x10] sm:$0xff]
      %v532 = vld [vmem:[%s5 + $0x18] sm:$0xff]
      %v533 = vld [vmem:[%s5 + $0x20] sm:$0xff]
      %v534 = vld [vmem:[%s5 + $0x28] sm:$0xff]
      %v535 = vld [vmem:[%s5 + $0x30] sm:$0xff]
      %v536 = vld [vmem:[%s5 + $0x38] sm:$0xff]
      %v537 = vld [vmem:[%s5 + $0x40] sm:$0xff]
      %v538 = vld [vmem:[%s5 + $0x48] sm:$0xff]
      %v539 = vld [vmem:[%s5 + $0x50] sm:$0xff]
      %v540 = vld [vmem:[%s5 + $0x58] sm:$0xff]
      %v541 = vld [vmem:[%s5 + $0x60] sm:$0xff]
      %v542 = vld [vmem:[%s5 + $0x68] sm:$0xff]
      %v543 = vld [vmem:[%s5 + $0x70] sm:$0xff]
      %v544 = vld [vmem:[%s5 + $0x78] sm:$0xff]
      %v545 = vld [vmem:[%s6] sm:$0x3]
      %v547 = vlaneseq
      %v548 = vshrl.u32 %v547, 7
      %v549 = vsub.s32 0, %v548
      %v550 = vrot.slane %v545, %v549
      %v551 = vlaneseq
      %v552 = vshrl.u32 %v551, 7
      %v553 = vsub.s32 1, %v552
      %v554 = vrot.slane %v545, %v553
      %v561 = vunpack.c.l.b16 %v393
      %v562 = vunpack.c.l.b16 %v394
      %v563 = vunpack.c.l.b16 %v395
      %v564 = vunpack.c.l.b16 %v396
      %v565 = vpack.c.b16 %v562, %v561
      %v566 = vpack.c.b16 %v564, %v563
      %v585 = vunpack.c.l.b16 %v529
      %v586 = vunpack.c.h.b16 %v529
      %v587 = vunpack.c.l.b16 %v530
      %v588 = vunpack.c.h.b16 %v530
      %v589 = vunpack.c.l.b16 %v531
      %v590 = vunpack.c.h.b16 %v531
      %v591 = vunpack.c.l.b16 %v532
      %v592 = vunpack.c.h.b16 %v532
      %v593 = vunpack.c.l.b16 %v533
      %v594 = vunpack.c.h.b16 %v533
      %v595 = vunpack.c.l.b16 %v534
      %v596 = vunpack.c.h.b16 %v534
      %v597 = vunpack.c.l.b16 %v535
      %v598 = vunpack.c.h.b16 %v535
      %v599 = vunpack.c.l.b16 %v536
      %v600 = vunpack.c.h.b16 %v536
      %v601 = vunpack.c.l.b16 %v537
      %v602 = vunpack.c.h.b16 %v537
      %v603 = vunpack.c.l.b16 %v538
      %v604 = vunpack.c.h.b16 %v538
      %v605 = vunpack.c.l.b16 %v539
      %v606 = vunpack.c.h.b16 %v539
      %v607 = vunpack.c.l.b16 %v540
      %v608 = vunpack.c.h.b16 %v540
      %v609 = vunpack.c.l.b16 %v541
      %v610 = vunpack.c.h.b16 %v541
      %v611 = vunpack.c.l.b16 %v542
      %v612 = vunpack.c.h.b16 %v542
      %v613 = vunpack.c.l.b16 %v543
      %v614 = vunpack.c.h.b16 %v543
      %v615 = vunpack.c.l.b16 %v544
      %v616 = vunpack.c.h.b16 %v544
      %v617 = vpack.c.b16 %v587, %v585
      %v618 = vpack.c.b16 %v588, %v586
      %v619 = vpack.c.b16 %v591, %v589
      %v620 = vpack.c.b16 %v592, %v590
      %v621 = vpack.c.b16 %v595, %v593
      %v622 = vpack.c.b16 %v596, %v594
      %v623 = vpack.c.b16 %v599, %v597
      %v624 = vpack.c.b16 %v600, %v598
      %v625 = vpack.c.b16 %v603, %v601
      %v626 = vpack.c.b16 %v604, %v602
      %v627 = vpack.c.b16 %v607, %v605
      %v628 = vpack.c.b16 %v608, %v606
      %v629 = vpack.c.b16 %v611, %v609
      %v630 = vpack.c.b16 %v612, %v610
      %v631 = vpack.c.b16 %v615, %v613
      %v632 = vpack.c.b16 %v616, %v614
      %649 = vmatprep.subr.bf16.mxu0 %v618
      %650 = vmatpush1.bf16.msra.mxu0 %v617
      %651 = vmatprep.subr.bf16.mxu0 %v620
      %652 = vmatpush1.bf16.msra.mxu0 %v619
      %653 = vmatprep.subr.bf16.mxu0 %v622
      %654 = vmatpush1.bf16.msra.mxu0 %v621
      %655 = vmatprep.subr.bf16.mxu0 %v624
      %656 = vmatpush1.bf16.msra.mxu0 %v623
      %657 = vmatprep.subr.bf16.mxu0 %v626
      %658 = vmatpush1.bf16.msra.mxu0 %v625
      %659 = vmatprep.subr.bf16.mxu0 %v628
      %660 = vmatpush1.bf16.msra.mxu0 %v627
      %661 = vmatprep.subr.bf16.mxu0 %v630
      %662 = vmatpush1.bf16.msra.mxu0 %v629
      %663 = vmatprep.subr.bf16.mxu0 %v632
      %664 = vmatpush1.bf16.msra.mxu0 %v631
      %665 = vmatprep.subr.bf16.mxu0 0
      %666 = vmatpush1.bf16.msra.mxu0 0
      %667 = vmatprep.subr.bf16.mxu0 0
      %668 = vmatpush1.bf16.msra.mxu0 0
      %669 = vmatprep.subr.bf16.mxu0 0
      %670 = vmatpush1.bf16.msra.mxu0 0
      %671 = vmatprep.subr.bf16.mxu0 0
      %672 = vmatpush1.bf16.msra.mxu0 0
      %673 = vmatprep.subr.bf16.mxu0 0
      %674 = vmatpush1.bf16.msra.mxu0 0
      %675 = vmatprep.subr.bf16.mxu0 0
      %676 = vmatpush1.bf16.msra.mxu0 0
      %677 = vmatprep.subr.bf16.mxu0 0
      %678 = vmatpush1.bf16.msra.mxu0 0
      %679 = vmatprep.subr.bf16.mxu0 0
      %680 = vmatpush1.bf16.msra.mxu0 0
      %681 = vmatprep.mubr.bf16.mxu0 0
      %682 = vmatmul.mubr.bf16.gmra.mrb[0].mxu0 %v565
      %v683 = vpop.f32.mrb[0].mxu0
      %v684 = vadd.f32 %v550, %v683
      %v685 = vpop.f32.mrb[0].mxu0
      %v686 = vadd.f32 %v554, %v685
      %v687 = vpop.f32.mrb[0].mxu0
      %v688 = vadd.f32 %v550, %v687
      %v689 = vpop.f32.mrb[0].mxu0
      %v690 = vadd.f32 %v554, %v689
      %691 = vmatprep.mubr.bf16.mxu0 0
      %692 = vmatmul.mubr.bf16.gmra.mrb[0].mxu0 %v566
      %v693 = vpop.f32.mrb[0].mxu0
      %v694 = vadd.f32 %v550, %v693
      %v695 = vpop.f32.mrb[0].mxu0
      %v696 = vadd.f32 %v554, %v695
      %v697 = vpop.f32.mrb[0].mxu0
      %v698 = vadd.f32 %v550, %v697
      %v699 = vpop.f32.mrb[0].mxu0
      %v700 = vadd.f32 %v554, %v699
      %701 = vdwg.mxu0
      %v702 = vld [vmem:[%s7] sm:$0xf]
      %v703 = vld [vmem:[%s7 + $0x4] sm:$0xf]
      %v704 = vld [vmem:[%s7 + $0x8] sm:$0xf]
      %v705 = vld [vmem:[%s7 + $0xc] sm:$0xf]
      %v706 = vld [vmem:[%s7 + $0x10] sm:$0xf]
      %v707 = vld [vmem:[%s7 + $0x14] sm:$0xf]
      %v708 = vld [vmem:[%s7 + $0x18] sm:$0xf]
      %v709 = vld [vmem:[%s7 + $0x1c] sm:$0xf]
      %v710 = vld [vmem:[%s7 + $0x20] sm:$0xf]
      %v711 = vld [vmem:[%s7 + $0x24] sm:$0xf]
      %v712 = vld [vmem:[%s7 + $0x28] sm:$0xf]
      %v713 = vld [vmem:[%s7 + $0x2c] sm:$0xf]
      %v714 = vld [vmem:[%s7 + $0x30] sm:$0xf]
      %v715 = vld [vmem:[%s7 + $0x34] sm:$0xf]
      %v716 = vld [vmem:[%s7 + $0x38] sm:$0xf]
      %v717 = vld [vmem:[%s7 + $0x3c] sm:$0xf]
      %v718 = vlaneseq
      %v719 = vand.u32 %v718, 127
      %v720 = vstv %s388
      %vm721 = vcmp.lt.s32.totalorder %v719, %v720
      %v722 = vsel %vm721, 0.0, -1e+09
      %v723 = vpack.c.bf16 %v518, %v515
      %v724 = vpack.c.bf16 %v526, %v523
      %v725 = vpack.c.bf16 %v688, %v684
      %v726 = vpack.c.bf16 %v698, %v694
      %v727 = vpack.c.bf16 %v690, %v686
      %v728 = vpack.c.bf16 %v700, %v696
      %vm729 = vcmask 523264
      %v731 = vsel %vm729, %v723, 0
      %v734 = vsel %vm729, %v724, 0
      %v737 = vsel %vm729, %v725, 0
      %v740 = vsel %vm729, %v726, 0
      %742 = vmatprep.subr.bf16.mxu0 0
      %743 = vmatpush1.bf16.xpose.msra.mxu0 %v737
      %744 = vmatprep.subr.bf16.mxu0 0
      %745 = vmatpush1.bf16.xpose.msra.mxu0 %v740
      %746 = vmatprep.subr.bf16.mxu0 0
      %747 = vmatpush1.bf16.xpose.msra.mxu0 0
      %748 = vmatprep.subr.bf16.mxu0 0
      %749 = vmatpush1.bf16.xpose.msra.mxu0 0
      %750 = vmatprep.subr.bf16.mxu0 0
      %751 = vmatpush1.bf16.xpose.msra.mxu0 0
      %752 = vmatprep.subr.bf16.mxu0 0
      %753 = vmatpush1.bf16.xpose.msra.mxu0 0
      %754 = vmatprep.subr.bf16.mxu0 0
      %755 = vmatpush1.bf16.xpose.msra.mxu0 0
      %756 = vmatprep.subr.bf16.mxu0 0
      %757 = vmatpush1.bf16.xpose.msra.mxu0 0
      %758 = vmatprep.subr.bf16.mxu0 0
      %759 = vmatpush1.bf16.xpose.msra.mxu0 0
      %760 = vmatprep.subr.bf16.mxu0 0
      %761 = vmatpush1.bf16.xpose.msra.mxu0 0
      %762 = vmatprep.subr.bf16.mxu0 0
      %763 = vmatpush1.bf16.xpose.msra.mxu0 0
      %764 = vmatprep.subr.bf16.mxu0 0
      %765 = vmatpush1.bf16.xpose.msra.mxu0 0
      %766 = vmatprep.subr.bf16.mxu0 0
      %767 = vmatpush1.bf16.xpose.msra.mxu0 0
      %768 = vmatprep.subr.bf16.mxu0 0
      %769 = vmatpush1.bf16.xpose.msra.mxu0 0
      %770 = vmatprep.subr.bf16.mxu0 0
      %771 = vmatpush1.bf16.xpose.msra.mxu0 0
      %772 = vmatprep.subr.bf16.mxu0 0
      %773 = vmatpush1.bf16.xpose.msra.mxu0 0
      %774 = vmatprep.mubr.bf16.mxu0 0
      %775 = vmatmul.mubr.bf16.gmra.mrb[0].mxu0 %v731
      %v776 = vpop.f32.mrb[0].mxu0
      %v777 = vadd.f32 0.0, %v776
      %v778 = vpop.f32.mrb[0].mxu0
      %v779 = vpop.f32.mrb[0].mxu0
      %v780 = vadd.f32 0.0, %v779
      %v781 = vpop.f32.mrb[0].mxu0
      %782 = vmatprep.mubr.bf16.mxu0 0
      %783 = vmatmul.mubr.bf16.gmra.mrb[0].mxu0 %v734
      %v784 = vpop.f32.mrb[0].mxu0
      %v785 = vadd.f32 0.0, %v784
      %v786 = vpop.f32.mrb[0].mxu0
      %v787 = vpop.f32.mrb[0].mxu0
      %v788 = vadd.f32 0.0, %v787
      %v789 = vpop.f32.mrb[0].mxu0
      %790 = vdwg.mxu0
      %v791 = vmul.f32 %v777, 0.125
      %v792 = vmul.f32 %v780, 0.125
      %v793 = vmul.f32 %v785, 0.125
      %v794 = vmul.f32 %v788, 0.125
      %v795 = vadd.f32 %v791, %v722
      %v796 = vadd.f32 %v792, %v722
      %v797 = vadd.f32 %v793, %v722
      %v798 = vadd.f32 %v794, %v722
      %vm799 = vcmask 261120
      %v800 = vsel %vm799, %v795, -inf
      %801 = vmax.xlane.f32.xlu0 %v800
      %v802 = vpop.xlane.xlu0 %801
      %v803 = vsel %vm799, %v796, -inf
      %804 = vmax.xlane.f32.xlu0 %v803
      %v805 = vpop.xlane.xlu0 %804
      %v806 = vsel %vm799, %v797, -inf
      %807 = vmax.xlane.f32.xlu0 %v806
      %v808 = vpop.xlane.xlu0 %807
      %v809 = vsel %vm799, %v798, -inf
      %810 = vmax.xlane.f32.xlu0 %v809
      %v811 = vpop.xlane.xlu0 %810
      %v812 = vsub.f32 %v795, %v802
      %v813 = vsub.f32 %v796, %v805
      %v814 = vsub.f32 %v797, %v808
      %v815 = vsub.f32 %v798, %v811
      %v816 = vmul.f32 %v812, 1.442695
      %v817 = vpow.pop %v816
      %v818 = vmul.f32 %v813, 1.442695
      %v819 = vpow.pop %v818
      %v820 = vmul.f32 %v814, 1.442695
      %v821 = vpow.pop %v820
      %v822 = vmul.f32 %v815, 1.442695
      %v823 = vpow.pop %v822
      %v824 = vsel %vm799, %v817, 0.0
      %825 = vadd.xlane.f32.xlu0 %v824
      %v826 = vpop.xlane.xlu0 %825
      %v827 = vsel %vm799, %v819, 0.0
      %828 = vadd.xlane.f32.xlu0 %v827
      %v829 = vpop.xlane.xlu0 %828
      %v830 = vsel %vm799, %v821, 0.0
      %831 = vadd.xlane.f32.xlu0 %v830
      %v832 = vpop.xlane.xlu0 %831
      %v833 = vsel %vm799, %v823, 0.0
      %834 = vadd.xlane.f32.xlu0 %v833
      %v835 = vpop.xlane.xlu0 %834
      %v836 = vrcp.pop %v826
      %v837 = vrcp.pop %v829
      %v838 = vrcp.pop %v832
      %v839 = vrcp.pop %v835
      %v840 = vmul.f32 %v817, %v836
      %v841 = vmul.f32 %v819, %v837
      %v842 = vmul.f32 %v821, %v838
      %v843 = vmul.f32 %v823, %v839
      %v844 = vpack.c.bf16 %v841, %v840
      %v845 = vpack.c.bf16 %v843, %v842
      %v847 = vsel %vm799, %v844, 0
      %v850 = vsel %vm799, %v845, 0
      %852 = vmatprep.subr.bf16.mxu0 0
      %853 = vmatpush1.bf16.msra.mxu0 %v727
      %854 = vmatprep.subr.bf16.mxu0 0
      %855 = vmatpush1.bf16.msra.mxu0 %v728
      %856 = vmatprep.subr.bf16.mxu0 0
      %857 = vmatpush1.bf16.msra.mxu0 0
      %858 = vmatprep.subr.bf16.mxu0 0
      %859 = vmatpush1.bf16.msra.mxu0 0
      %860 = vmatprep.subr.bf16.mxu0 0
      %861 = vmatpush1.bf16.msra.mxu0 0
      %862 = vmatprep.subr.bf16.mxu0 0
      %863 = vmatpush1.bf16.msra.mxu0 0
      %864 = vmatprep.subr.bf16.mxu0 0
      %865 = vmatpush1.bf16.msra.mxu0 0
      %866 = vmatprep.subr.bf16.mxu0 0
      %867 = vmatpush1.bf16.msra.mxu0 0
      %868 = vmatprep.subr.bf16.mxu0 0
      %869 = vmatpush1.bf16.msra.mxu0 0
      %870 = vmatprep.subr.bf16.mxu0 0
      %871 = vmatpush1.bf16.msra.mxu0 0
      %872 = vmatprep.subr.bf16.mxu0 0
      %873 = vmatpush1.bf16.msra.mxu0 0
      %874 = vmatprep.subr.bf16.mxu0 0
      %875 = vmatpush1.bf16.msra.mxu0 0
      %876 = vmatprep.subr.bf16.mxu0 0
      %877 = vmatpush1.bf16.msra.mxu0 0
      %878 = vmatprep.subr.bf16.mxu0 0
      %879 = vmatpush1.bf16.msra.mxu0 0
      %880 = vmatprep.subr.bf16.mxu0 0
      %881 = vmatpush1.bf16.msra.mxu0 0
      %882 = vmatprep.subr.bf16.mxu0 0
      %883 = vmatpush1.bf16.msra.mxu0 0
      %884 = vmatprep.mubr.bf16.mxu0 0
      %885 = vmatmul.mubr.bf16.gmra.mrb[0].mxu0 %v847
      %v886 = vpop.f32.mrb[0].mxu0
      %v887 = vadd.f32 0.0, %v886
      %v888 = vpop.f32.mrb[0].mxu0
      %v889 = vpop.f32.mrb[0].mxu0
      %v890 = vadd.f32 0.0, %v889
      %v891 = vpop.f32.mrb[0].mxu0
      %892 = vmatprep.mubr.bf16.mxu0 0
      %893 = vmatmul.mubr.bf16.gmra.mrb[0].mxu0 %v850
      %v894 = vpop.f32.mrb[0].mxu0
      %v895 = vadd.f32 0.0, %v894
      %v896 = vpop.f32.mrb[0].mxu0
      %v897 = vpop.f32.mrb[0].mxu0
      %v898 = vadd.f32 0.0, %v897
      %v899 = vpop.f32.mrb[0].mxu0
      %900 = vdwg.mxu0
      %v901 = vpack.c.bf16 %v890, %v887
      %v902 = vpack.c.bf16 %v898, %v895
      %905 = vrot.lane.b32.xlu0 %v723, 64
      %v906 = vpop.permute.xlu0 %905
      %907 = vrot.lane.b32.xlu0 %v724, 64
      %v908 = vpop.permute.xlu0 %907
      %911 = vrot.lane.b32.xlu0 %v725, 64
      %v912 = vpop.permute.xlu0 %911
      %913 = vrot.lane.b32.xlu0 %v726, 64
      %v914 = vpop.permute.xlu0 %913
      %v916 = vsel %vm729, %v906, 0
      %v919 = vsel %vm729, %v908, 0
      %v922 = vsel %vm729, %v912, 0
      %v925 = vsel %vm729, %v914, 0
      %927 = vmatprep.subr.bf16.mxu0 0
      %928 = vmatpush1.bf16.xpose.msra.mxu0 %v922
      %929 = vmatprep.subr.bf16.mxu0 0
      %930 = vmatpush1.bf16.xpose.msra.mxu0 %v925
      %931 = vmatprep.subr.bf16.mxu0 0
      %932 = vmatpush1.bf16.xpose.msra.mxu0 0
      %933 = vmatprep.subr.bf16.mxu0 0
      %934 = vmatpush1.bf16.xpose.msra.mxu0 0
      %935 = vmatprep.subr.bf16.mxu0 0
      %936 = vmatpush1.bf16.xpose.msra.mxu0 0
      %937 = vmatprep.subr.bf16.mxu0 0
      %938 = vmatpush1.bf16.xpose.msra.mxu0 0
      %939 = vmatprep.subr.bf16.mxu0 0
      %940 = vmatpush1.bf16.xpose.msra.mxu0 0
      %941 = vmatprep.subr.bf16.mxu0 0
      %942 = vmatpush1.bf16.xpose.msra.mxu0 0
      %943 = vmatprep.subr.bf16.mxu0 0
      %944 = vmatpush1.bf16.xpose.msra.mxu0 0
      %945 = vmatprep.subr.bf16.mxu0 0
      %946 = vmatpush1.bf16.xpose.msra.mxu0 0
      %947 = vmatprep.subr.bf16.mxu0 0
      %948 = vmatpush1.bf16.xpose.msra.mxu0 0
      %949 = vmatprep.subr.bf16.mxu0 0
      %950 = vmatpush1.bf16.xpose.msra.mxu0 0
      %951 = vmatprep.subr.bf16.mxu0 0
      %952 = vmatpush1.bf16.xpose.msra.mxu0 0
      %953 = vmatprep.subr.bf16.mxu0 0
      %954 = vmatpush1.bf16.xpose.msra.mxu0 0
      %955 = vmatprep.subr.bf16.mxu0 0
      %956 = vmatpush1.bf16.xpose.msra.mxu0 0
      %957 = vmatprep.subr.bf16.mxu0 0
      %958 = vmatpush1.bf16.xpose.msra.mxu0 0
      %959 = vmatprep.mubr.bf16.mxu0 0
      %960 = vmatmul.mubr.bf16.gmra.mrb[0].mxu0 %v916
      %v961 = vpop.f32.mrb[0].mxu0
      %v962 = vadd.f32 0.0, %v961
      %v963 = vpop.f32.mrb[0].mxu0
      %v964 = vpop.f32.mrb[0].mxu0
      %v965 = vadd.f32 0.0, %v964
      %v966 = vpop.f32.mrb[0].mxu0
      %967 = vmatprep.mubr.bf16.mxu0 0
      %968 = vmatmul.mubr.bf16.gmra.mrb[0].mxu0 %v919
      %v969 = vpop.f32.mrb[0].mxu0
      %v970 = vadd.f32 0.0, %v969
      %v971 = vpop.f32.mrb[0].mxu0
      %v972 = vpop.f32.mrb[0].mxu0
      %v973 = vadd.f32 0.0, %v972
      %v974 = vpop.f32.mrb[0].mxu0
      %975 = vdwg.mxu0
      %v976 = vmul.f32 %v962, 0.125
      %v977 = vmul.f32 %v965, 0.125
      %v978 = vmul.f32 %v970, 0.125
      %v979 = vmul.f32 %v973, 0.125
      %v980 = vadd.f32 %v976, %v722
      %v981 = vadd.f32 %v977, %v722
      %v982 = vadd.f32 %v978, %v722
      %v983 = vadd.f32 %v979, %v722
      %v984 = vsel %vm799, %v980, -inf
      %985 = vmax.xlane.f32.xlu0 %v984
      %v986 = vpop.xlane.xlu0 %985
      %v987 = vsel %vm799, %v981, -inf
      %988 = vmax.xlane.f32.xlu0 %v987
      %v989 = vpop.xlane.xlu0 %988
      %v990 = vsel %vm799, %v982, -inf
      %991 = vmax.xlane.f32.xlu0 %v990
      %v992 = vpop.xlane.xlu0 %991
      %v993 = vsel %vm799, %v983, -inf
      %994 = vmax.xlane.f32.xlu0 %v993
      %v995 = vpop.xlane.xlu0 %994
      %v996 = vsub.f32 %v980, %v986
      %v997 = vsub.f32 %v981, %v989
      %v998 = vsub.f32 %v982, %v992
      %v999 = vsub.f32 %v983, %v995
      %v1000 = vmul.f32 %v996, 1.442695
      %v1001 = vpow.pop %v1000
      %v1002 = vmul.f32 %v997, 1.442695
      %v1003 = vpow.pop %v1002
      %v1004 = vmul.f32 %v998, 1.442695
      %v1005 = vpow.pop %v1004
      %v1006 = vmul.f32 %v999, 1.442695
      %v1007 = vpow.pop %v1006
      %v1008 = vsel %vm799, %v1001, 0.0
      %1009 = vadd.xlane.f32.xlu0 %v1008
      %v1010 = vpop.xlane.xlu0 %1009
      %v1011 = vsel %vm799, %v1003, 0.0
      %1012 = vadd.xlane.f32.xlu0 %v1011
      %v1013 = vpop.xlane.xlu0 %1012
      %v1014 = vsel %vm799, %v1005, 0.0
      %1015 = vadd.xlane.f32.xlu0 %v1014
      %v1016 = vpop.xlane.xlu0 %1015
      %v1017 = vsel %vm799, %v1007, 0.0
      %1018 = vadd.xlane.f32.xlu0 %v1017
      %v1019 = vpop.xlane.xlu0 %1018
      %v1020 = vrcp.pop %v1010
      %v1021 = vrcp.pop %v1013
      %v1022 = vrcp.pop %v1016
      %v1023 = vrcp.pop %v1019
      %v1024 = vmul.f32 %v1001, %v1020
      %v1025 = vmul.f32 %v1003, %v1021
      %v1026 = vmul.f32 %v1005, %v1022
      %v1027 = vmul.f32 %v1007, %v1023
      %v1028 = vpack.c.bf16 %v1025, %v1024
      %v1029 = vpack.c.bf16 %v1027, %v1026
      %1032 = vrot.lane.b32.xlu0 %v727, 64
      %v1033 = vpop.permute.xlu0 %1032
      %1034 = vrot.lane.b32.xlu0 %v728, 64
      %v1035 = vpop.permute.xlu0 %1034
      %v1039 = vsel %vm799, %v1028, 0
      %v1042 = vsel %vm799, %v1029, 0
      %1044 = vmatprep.subr.bf16.mxu0 0
      %1045 = vmatpush1.bf16.msra.mxu0 %v1033
      %1046 = vmatprep.subr.bf16.mxu0 0
      %1047 = vmatpush1.bf16.msra.mxu0 %v1035
      %1048 = vmatprep.subr.bf16.mxu0 0
      %1049 = vmatpush1.bf16.msra.mxu0 0
      %1050 = vmatprep.subr.bf16.mxu0 0
      %1051 = vmatpush1.bf16.msra.mxu0 0
      %1052 = vmatprep.subr.bf16.mxu0 0
      %1053 = vmatpush1.bf16.msra.mxu0 0
      %1054 = vmatprep.subr.bf16.mxu0 0
      %1055 = vmatpush1.bf16.msra.mxu0 0
      %1056 = vmatprep.subr.bf16.mxu0 0
      %1057 = vmatpush1.bf16.msra.mxu0 0
      %1058 = vmatprep.subr.bf16.mxu0 0
      %1059 = vmatpush1.bf16.msra.mxu0 0
      %1060 = vmatprep.subr.bf16.mxu0 0
      %1061 = vmatpush1.bf16.msra.mxu0 0
      %1062 = vmatprep.subr.bf16.mxu0 0
      %1063 = vmatpush1.bf16.msra.mxu0 0
      %1064 = vmatprep.subr.bf16.mxu0 0
      %1065 = vmatpush1.bf16.msra.mxu0 0
      %1066 = vmatprep.subr.bf16.mxu0 0
      %1067 = vmatpush1.bf16.msra.mxu0 0
      %1068 = vmatprep.subr.bf16.mxu0 0
      %1069 = vmatpush1.bf16.msra.mxu0 0
      %1070 = vmatprep.subr.bf16.mxu0 0
      %1071 = vmatpush1.bf16.msra.mxu0 0
      %1072 = vmatprep.subr.bf16.mxu0 0
      %1073 = vmatpush1.bf16.msra.mxu0 0
      %1074 = vmatprep.subr.bf16.mxu0 0
      %1075 = vmatpush1.bf16.msra.mxu0 0
      %1076 = vmatprep.mubr.bf16.mxu0 0
      %1077 = vmatmul.mubr.bf16.gmra.mrb[0].mxu0 %v1039
      %v1078 = vpop.f32.mrb[0].mxu0
      %v1079 = vadd.f32 0.0, %v1078
      %v1080 = vpop.f32.mrb[0].mxu0
      %v1081 = vpop.f32.mrb[0].mxu0
      %v1082 = vadd.f32 0.0, %v1081
      %v1083 = vpop.f32.mrb[0].mxu0
      %1084 = vmatprep.mubr.bf16.mxu0 0
      %1085 = vmatmul.mubr.bf16.gmra.mrb[0].mxu0 %v1042
      %v1086 = vpop.f32.mrb[0].mxu0
      %v1087 = vadd.f32 0.0, %v1086
      %v1088 = vpop.f32.mrb[0].mxu0
      %v1089 = vpop.f32.mrb[0].mxu0
      %v1090 = vadd.f32 0.0, %v1089
      %v1091 = vpop.f32.mrb[0].mxu0
      %1092 = vdwg.mxu0
      %v1093 = vpack.c.bf16 %v1082, %v1079
      %v1094 = vpack.c.bf16 %v1090, %v1087
      %v1103 = vunpack.c.l.b16 %v710
      %v1104 = vunpack.c.l.b16 %v711
      %v1105 = vunpack.c.l.b16 %v712
      %v1106 = vunpack.c.l.b16 %v713
      %v1107 = vunpack.c.l.b16 %v714
      %v1108 = vunpack.c.l.b16 %v715
      %v1109 = vunpack.c.l.b16 %v716
      %v1110 = vunpack.c.l.b16 %v717
      %v1111 = vpack.c.b16 %v1104, %v1103
      %v1112 = vpack.c.b16 %v1106, %v1105
      %v1113 = vpack.c.b16 %v1108, %v1107
      %v1114 = vpack.c.b16 %v1110, %v1109
      %v1120 = vsel %vm729, %v1093, 0
      %v1123 = vsel %vm729, %v1094, 0
      %1125 = vmatprep.subr.bf16.mxu0 0
      %1126 = vmatpush1.bf16.msra.mxu0 %v1111
      %1127 = vmatprep.subr.bf16.mxu0 0
      %1128 = vmatpush1.bf16.msra.mxu0 %v1112
      %1129 = vmatprep.subr.bf16.mxu0 0
      %1130 = vmatpush1.bf16.msra.mxu0 %v1113
      %1131 = vmatprep.subr.bf16.mxu0 0
      %1132 = vmatpush1.bf16.msra.mxu0 %v1114
      %1133 = vmatprep.subr.bf16.mxu0 0
      %1134 = vmatpush1.bf16.msra.mxu0 0
      %1135 = vmatprep.subr.bf16.mxu0 0
      %1136 = vmatpush1.bf16.msra.mxu0 0
      %1137 = vmatprep.subr.bf16.mxu0 0
      %1138 = vmatpush1.bf16.msra.mxu0 0
      %1139 = vmatprep.subr.bf16.mxu0 0
      %1140 = vmatpush1.bf16.msra.mxu0 0
      %1141 = vmatprep.subr.bf16.mxu0 0
      %1142 = vmatpush1.bf16.msra.mxu0 0
      %1143 = vmatprep.subr.bf16.mxu0 0
      %1144 = vmatpush1.bf16.msra.mxu0 0
      %1145 = vmatprep.subr.bf16.mxu0 0
      %1146 = vmatpush1.bf16.msra.mxu0 0
      %1147 = vmatprep.subr.bf16.mxu0 0
      %1148 = vmatpush1.bf16.msra.mxu0 0
      %1149 = vmatprep.subr.bf16.mxu0 0
      %1150 = vmatpush1.bf16.msra.mxu0 0
      %1151 = vmatprep.subr.bf16.mxu0 0
      %1152 = vmatpush1.bf16.msra.mxu0 0
      %1153 = vmatprep.subr.bf16.mxu0 0
      %1154 = vmatpush1.bf16.msra.mxu0 0
      %1155 = vmatprep.subr.bf16.mxu0 0
      %1156 = vmatpush1.bf16.msra.mxu0 0
      %1157 = vmatprep.mubr.bf16.mxu0 0
      %1158 = vmatmul.mubr.bf16.gmra.mrb[0].mxu0 %v1120
      %v1159 = vpop.f32.mrb[0].mxu0
      %v1160 = vadd.f32 0.0, %v1159
      %v1161 = vpop.f32.mrb[0].mxu0
      %v1162 = vpop.f32.mrb[0].mxu0
      %v1163 = vadd.f32 0.0, %v1162
      %v1164 = vpop.f32.mrb[0].mxu0
      %1165 = vmatprep.mubr.bf16.mxu0 0
      %1166 = vmatmul.mubr.bf16.gmra.mrb[0].mxu0 %v1123
      %v1167 = vpop.f32.mrb[0].mxu0
      %v1168 = vadd.f32 0.0, %v1167
      %v1169 = vpop.f32.mrb[0].mxu0
      %v1170 = vpop.f32.mrb[0].mxu0
      %v1171 = vadd.f32 0.0, %v1170
      %v1172 = vpop.f32.mrb[0].mxu0
      %1173 = vdwg.mxu0
      %v1182 = vunpack.c.l.b16 %v702
      %v1183 = vunpack.c.l.b16 %v703
      %v1184 = vunpack.c.l.b16 %v704
      %v1185 = vunpack.c.l.b16 %v705
      %v1186 = vunpack.c.l.b16 %v706
      %v1187 = vunpack.c.l.b16 %v707
      %v1188 = vunpack.c.l.b16 %v708
      %v1189 = vunpack.c.l.b16 %v709
      %v1190 = vpack.c.b16 %v1183, %v1182
      %v1191 = vpack.c.b16 %v1185, %v1184
      %v1192 = vpack.c.b16 %v1187, %v1186
      %v1193 = vpack.c.b16 %v1189, %v1188
      %v1199 = vsel %vm729, %v901, 0
      %v1202 = vsel %vm729, %v902, 0
      %1204 = vmatprep.subr.bf16.mxu0 0
      %1205 = vmatpush1.bf16.msra.mxu0 %v1190
      %1206 = vmatprep.subr.bf16.mxu0 0
      %1207 = vmatpush1.bf16.msra.mxu0 %v1191
      %1208 = vmatprep.subr.bf16.mxu0 0
      %1209 = vmatpush1.bf16.msra.mxu0 %v1192
      %1210 = vmatprep.subr.bf16.mxu0 0
      %1211 = vmatpush1.bf16.msra.mxu0 %v1193
      %1212 = vmatprep.subr.bf16.mxu0 0
      %1213 = vmatpush1.bf16.msra.mxu0 0
      %1214 = vmatprep.subr.bf16.mxu0 0
      %1215 = vmatpush1.bf16.msra.mxu0 0
      %1216 = vmatprep.subr.bf16.mxu0 0
      %1217 = vmatpush1.bf16.msra.mxu0 0
      %1218 = vmatprep.subr.bf16.mxu0 0
      %1219 = vmatpush1.bf16.msra.mxu0 0
      %1220 = vmatprep.subr.bf16.mxu0 0
      %1221 = vmatpush1.bf16.msra.mxu0 0
      %1222 = vmatprep.subr.bf16.mxu0 0
      %1223 = vmatpush1.bf16.msra.mxu0 0
      %1224 = vmatprep.subr.bf16.mxu0 0
      %1225 = vmatpush1.bf16.msra.mxu0 0
      %1226 = vmatprep.subr.bf16.mxu0 0
      %1227 = vmatpush1.bf16.msra.mxu0 0
      %1228 = vmatprep.subr.bf16.mxu0 0
      %1229 = vmatpush1.bf16.msra.mxu0 0
      %1230 = vmatprep.subr.bf16.mxu0 0
      %1231 = vmatpush1.bf16.msra.mxu0 0
      %1232 = vmatprep.subr.bf16.mxu0 0
      %1233 = vmatpush1.bf16.msra.mxu0 0
      %1234 = vmatprep.subr.bf16.mxu0 0
      %1235 = vmatpush1.bf16.msra.mxu0 0
      %1236 = vmatprep.mubr.bf16.mxu0 0
      %1237 = vmatmul.mubr.bf16.gmra.mrb[0].mxu0 %v1199
      %v1238 = vpop.f32.mrb[0].mxu0
      %v1239 = vadd.f32 %v1160, %v1238
      %v1240 = vpop.f32.mrb[0].mxu0
      %v1241 = vpop.f32.mrb[0].mxu0
      %v1242 = vadd.f32 %v1163, %v1241
      %v1243 = vpop.f32.mrb[0].mxu0
      %1244 = vmatprep.mubr.bf16.mxu0 0
      %1245 = vmatmul.mubr.bf16.gmra.mrb[0].mxu0 %v1202
      %v1246 = vpop.f32.mrb[0].mxu0
      %v1247 = vadd.f32 %v1168, %v1246
      %v1248 = vpop.f32.mrb[0].mxu0
      %v1249 = vpop.f32.mrb[0].mxu0
      %v1250 = vadd.f32 %v1171, %v1249
      %v1251 = vpop.f32.mrb[0].mxu0
      %1252 = vdwg.mxu0
      %v1253 = vld [vmem:[%s8] sm:$0x1]
      %v1255 = vlaneseq
      %v1256 = vshrl.u32 %v1255, 7
      %v1257 = vsub.s32 0, %v1256
      %v1258 = vrot.slane %v1253, %v1257
      %v1260 = vadd.f32 %v1239, %v1258
      %v1261 = vadd.f32 %v1242, %v1258
      %v1262 = vadd.f32 %v1247, %v1258
      %v1263 = vadd.f32 %v1250, %v1258
      %v1264 = vunpack.c.l.bf16 %v389
      %v1265 = vunpack.c.l.bf16 %v390
      %v1266 = vunpack.c.l.bf16 %v391
      %v1267 = vunpack.c.l.bf16 %v392
      %v1268 = vadd.f32 %v1260, %v1264
      %v1269 = vadd.f32 %v1261, %v1265
      %v1270 = vadd.f32 %v1262, %v1266
      %v1271 = vadd.f32 %v1263, %v1267
      %v1272 = vld [vmem:[%s9] sm:$0x1]
      %v1273 = vld [vmem:[%s10] sm:$0x1]
      %1274 = vadd.xlane.f32.xlu0 %v1268
      %v1275 = vpop.xlane.xlu0 %1274
      %1276 = vadd.xlane.f32.xlu0 %v1269
      %v1277 = vpop.xlane.xlu0 %1276
      %1278 = vadd.xlane.f32.xlu0 %v1270
      %v1279 = vpop.xlane.xlu0 %1278
      %1280 = vadd.xlane.f32.xlu0 %v1271
      %v1281 = vpop.xlane.xlu0 %1280
      %v1282 = vrcp.pop 128.0
      %v1283 = vmul.f32 %v1275, %v1282
      %v1284 = vmul.f32 %v1277, %v1282
      %v1285 = vmul.f32 %v1279, %v1282
      %v1286 = vmul.f32 %v1281, %v1282
      %v1287 = vsub.f32 %v1268, %v1283
      %v1288 = vsub.f32 %v1269, %v1284
      %v1289 = vsub.f32 %v1270, %v1285
      %v1290 = vsub.f32 %v1271, %v1286
      %v1291 = vmul.f32 %v1287, %v1287
      %v1292 = vmul.f32 %v1288, %v1288
      %v1293 = vmul.f32 %v1289, %v1289
      %v1294 = vmul.f32 %v1290, %v1290
      %1295 = vadd.xlane.f32.xlu0 %v1291
      %v1296 = vpop.xlane.xlu0 %1295
      %1297 = vadd.xlane.f32.xlu0 %v1292
      %v1298 = vpop.xlane.xlu0 %1297
      %1299 = vadd.xlane.f32.xlu0 %v1293
      %v1300 = vpop.xlane.xlu0 %1299
      %1301 = vadd.xlane.f32.xlu0 %v1294
      %v1302 = vpop.xlane.xlu0 %1301
      %v1303 = vmul.f32 %v1296, %v1282
      %v1304 = vmul.f32 %v1298, %v1282
      %v1305 = vmul.f32 %v1300, %v1282
      %v1306 = vmul.f32 %v1302, %v1282
      %v1307 = vadd.f32 %v1303, 1e-05
      %v1308 = vadd.f32 %v1304, 1e-05
      %v1309 = vadd.f32 %v1305, 1e-05
      %v1310 = vadd.f32 %v1306, 1e-05
      %v1311 = vrsqrt.pop %v1307
      %v1312 = vrsqrt.pop %v1308
      %v1313 = vrsqrt.pop %v1309
      %v1314 = vrsqrt.pop %v1310
      %v1315 = vmul.f32 %v1287, %v1311
      %v1316 = vmul.f32 %v1288, %v1312
      %v1317 = vmul.f32 %v1289, %v1313
      %v1318 = vmul.f32 %v1290, %v1314
      %v1320 = vlaneseq
      %v1321 = vshrl.u32 %v1320, 7
      %v1322 = vsub.s32 0, %v1321
      %v1323 = vrot.slane %v1272, %v1322
      %v1325 = vmul.f32 %v1315, %v1323
      %v1326 = vmul.f32 %v1316, %v1323
      %v1327 = vmul.f32 %v1317, %v1323
      %v1328 = vmul.f32 %v1318, %v1323
      %v1330 = vlaneseq
      %v1331 = vshrl.u32 %v1330, 7
      %v1332 = vsub.s32 0, %v1331
      %v1333 = vrot.slane %v1273, %v1332
      %v1335 = vadd.f32 %v1325, %v1333
      %v1336 = vadd.f32 %v1326, %v1333
      %v1337 = vadd.f32 %v1327, %v1333
      %v1338 = vadd.f32 %v1328, %v1333
      %v1339 = vpack.c.bf16 %v1336, %v1335
      %v1340 = vpack.c.bf16 %v1338, %v1337
      %v1343 = vunpack.c.l.b16 %v1339
      %v1344 = vunpack.c.h.b16 %v1339
      %v1345 = vunpack.c.l.b16 %v1340
      %v1346 = vunpack.c.h.b16 %v1340
      %v1347 = vpack.c.b16 %v1343, %v1343
      %v1348 = vpack.c.b16 %v1344, %v1344
      %v1349 = vpack.c.b16 %v1345, %v1345
      %v1350 = vpack.c.b16 %v1346, %v1346
      %1355 = vst [vmem:[%s386] sm:$0xf] %v1347
      %1356 = vst [vmem:[%s386 + $0x4] sm:$0xf] %v1348
      %1357 = vst [vmem:[%s386 + $0x8] sm:$0xf] %v1349
      %1358 = vst [vmem:[%s386 + $0xc] sm:$0xf] %v1350
      %p1359 = scmp.lt.s32.totalorder %s28, 1
      %s1360 = scalar_select %p1359, %s28, 1
      %s1361 = smul.addr %s1360, 4
      %s1362 = smul.addr %s1361, 4
      %s1363 = scalar_lea.vmem %s11, %s1362
      // Predicated region
      $region61: #{transformer_forward.16} parent=59 // pred_check
        %p1364 = pneg %p266
      $region62: #{transformer_forward.16} parent=59 // pred_check_branch
        %1366 = sbr.rel (%p1364) target = $region64
      $region63: #{transformer_forward.16} parent=59 // pred_region
        _
      $region64: #{transformer_forward.16} parent=59 // pred_fallthru
        _
    $region60: #{transformer_forward.16} parent=5 // pred_fallthru
      _
    %p1367 = scmp.le.s32.totalorder 2, %s23
    // Predicated region
    $region65: #{transformer_forward.16} parent=5 // pred_check
      %p1368 = pneg %p1367
    $region66: #{transformer_forward.16} parent=5 // pred_check_branch
      %1370 = sbr.rel (%p1368) target = $region68
    $region67: #{transformer_forward.16} parent=5 // pred_region
      %s1371 = ssub.s32 %s23, 2
      // Predicated region
      $region69: #{transformer_forward.16} parent=67 // pred_check
        %p1372 = pneg %p272
      $region70: #{transformer_forward.16} parent=67 // pred_check_branch
        %1374 = sbr.rel (%p1372) target = $region72
      $region71: #{transformer_forward.16} parent=67 // pred_region
        %p1375 = scmp.lt.s32.totalorder %s29, 1
        %s1376 = scalar_select %p1375, %s29, 1
        %s1377 = smul.addr %s1376, 4
        %s1378 = smul.addr %s1377, 4
        %s1379 = scalar_lea.vmem %s11, %s1378
      $region72: #{transformer_forward.16} parent=67 // pred_fallthru
        _
    $region68: #{transformer_forward.16} parent=5 // pred_fallthru
      _
  $region6: #{transformer_forward.16} parent=0 // loop_footer
    %s27 = sadd.s32 1, %s23
  $region7: #{transformer_forward.16} parent=0 // loop_footer_branch
    %22 = sbr.rel target = $region3
  $region8: #{transformer_forward.16} parent=0 // loop_exit
    _

// kernel: transformer_forward.11
$region0: #{transformer_forward.11}
  #allocation0 [shape = 'u32[]', space=smem, size = 0x4, offset = 0x4, fixed_abs, tag = 'smem constant byte address 0x4 - core index']
  #allocation1 [shape = 'u32[144,128]{1,0:T(1,128)}', space=vmem, size = 0x12000, scoped, tag = 'internal scratch']
  #allocation2 [shape = 's32[1]{0}', space=sflag, size = 0x4, scoped, tag = 'scoped memory for transformer_forward.11']
  #allocation3 [shape = 'u8[512]{0}', space=smem, size = 0x200, scoped, tag = 'prefetched SMEM operand 0']
  %s0 = inlined_call_operand.vmem [shape: s32[2], index: 0, kind: input, shape index: {}]
  %s1 = inlined_call_operand.vmem [shape: bf16[2,32,128], index: 1, kind: input, shape index: {}]
  %s2 = inlined_call_operand.vmem [shape: bf16[128,384], index: 2, kind: input, shape index: {}]
  %s3 = inlined_call_operand.vmem [shape: f32[1,384], index: 3, kind: input, shape index: {}]
  %s4 = inlined_call_operand.vmem [shape: bf16[128,128], index: 4, kind: input, shape index: {}]
  %s5 = inlined_call_operand.vmem [shape: f32[1,128], index: 5, kind: input, shape index: {}]
  %s6 = inlined_call_operand.vmem [shape: f32[1,128], index: 6, kind: input, shape index: {}]
  %s7 = inlined_call_operand.vmem [shape: f32[1,128], index: 7, kind: input, shape index: {}]
  %s8 = inlined_call_operand.vmem [shape: bf16[2,32,128], index: 8, kind: output, shape index: {}]
  %s9 = sld [smem:[#allocation0]]
  $region61: #{transformer_forward.11} parent=0
    _
  %s11 = ssub.s32 1, %s9
  %s12 = scalar_select 0, %s11, %s9
  %s13 = sshll.u32 %s0, 4
  %s14 = int_to_ptr.vmem [resolvable:$true] %s13
  %16 = dma.vmem_to_smem %s14, 16, [#allocation3], [#allocation2]
  %17 = dma.done [#allocation2], 16
  %18 = sfence
  loop: start=0, step=1, limit=4
  $region2: #{transformer_forward.11} parent=0 // loop_pre_header
    _
  $region3: #{transformer_forward.11} parent=0 // loop_header
    %s20 = sphi 0, %s24
    %p21 = scmp.ge.s32.totalorder %s20, 4
    %s30 = sphi 0, %s32
    %s33 = sphi 0, %s30
    %s34 = sphi 0, %s33
    %s50 = sphi 0, %s34
    %s54 = sphi 0, %s54
    %s56 = sphi 0, %s54
    %s57 = sphi 0, %s56
    %s71 = sphi 0, %s57
    %s75 = sphi 0, %s75
    %s77 = sphi 0, %s75
    %s78 = sphi 0, %s77
    %s92 = sphi 0, %s78
    %s96 = sphi 0, %s96
    %s98 = sphi 0, %s96
    %s99 = sphi 0, %s98
    %s113 = sphi 0, %s99
    %s117 = sphi 0, %s117
    %s119 = sphi 0, %s117
    %s120 = sphi 0, %s119
    %s134 = sphi 0, %s120
    %s138 = sphi 0, %s138
    %s140 = sphi 0, %s138
    %s141 = sphi 0, %s140
    %s155 = sphi 0, %s141
    %s159 = sphi 0, %s159
    %s161 = sphi 0, %s159
    %s162 = sphi 0, %s161
    %s176 = sphi 0, %s162
    %s182 = sphi 0, %s184
    %s185 = sphi 0, %s182
    %s186 = sphi 0, %s185
    %s202 = sphi 0, %s186
  $region4: #{transformer_forward.11} parent=0 // loop_header_branch
    %23 = sbr.rel (%p21) target = $region8
  $region5: #{transformer_forward.11} parent=0 // loop_body
    %s25 = ssub.s32 %s20, 1
    %s26 = ssub.s32 %s20, 2
    %s27 = sadd.s32 %s20, 1
    %s28 = ssub.s32 %s20, %s27
    %p29 = scmp.eq.s32.totalorder %s28, 0
    %s31 = sadd.s32 %s30, 1
    %s32 = scalar_select %p29, %s30, %s31
    %p35 = pneg %p29
    %p36 = scmp.eq.s32.totalorder %s20, 1
    %p37 = por %p35, %p36
    %p38 = scmp.ne.s32.totalorder %s30, %s33
    %p39 = scmp.eq.s32.totalorder %s20, 0
    %p40 = por %p38, %p39
    %p41 = scmp.ne.s32.totalorder %s30, %s33
    %p42 = scmp.eq.s32.totalorder %s25, 1
    %p43 = por %p41, %p42
    %p44 = scmp.ne.s32.totalorder %s33, %s34
    %p45 = scmp.eq.s32.totalorder %s25, 0
    %p46 = por %p44, %p45
    %p47 = scmp.ne.s32.totalorder %s33, %s34
    %p48 = scmp.eq.s32.totalorder %s26, 1
    %p49 = por %p47, %p48
    %p51 = scmp.ne.s32.totalorder %s34, %s50
    %p52 = scmp.eq.s32.totalorder %s26, 0
    %p53 = por %p51, %p52
    %s55 = sadd.s32 %s54, 1
    %p58 = scmp.eq.s32.totalorder %s20, 1
    %p59 = scmp.ne.s32.totalorder %s54, %s56
    %p60 = scmp.eq.s32.totalorder %s20, 0
    %p61 = por %p59, %p60
    %p62 = scmp.ne.s32.totalorder %s54, %s56
    %p63 = scmp.eq.s32.totalorder %s25, 1
    %p64 = por %p62, %p63
    %p65 = scmp.ne.s32.totalorder %s56, %s57
    %p66 = scmp.eq.s32.totalorder %s25, 0
    %p67 = por %p65, %p66
    %p68 = scmp.ne.s32.totalorder %s56, %s57
    %p69 = scmp.eq.s32.totalorder %s26, 1
    %p70 = por %p68, %p69
    %p72 = scmp.ne.s32.totalorder %s57, %s71
    %p73 = scmp.eq.s32.totalorder %s26, 0
    %p74 = por %p72, %p73
    %s76 = sadd.s32 %s75, 1
    %p79 = scmp.eq.s32.totalorder %s20, 1
    %p80 = scmp.ne.s32.totalorder %s75, %s77
    %p81 = scmp.eq.s32.totalorder %s20, 0
    %p82 = por %p80, %p81
    %p83 = scmp.ne.s32.totalorder %s75, %s77
    %p84 = scmp.eq.s32.totalorder %s25, 1
    %p85 = por %p83, %p84
    %p86 = scmp.ne.s32.totalorder %s77, %s78
    %p87 = scmp.eq.s32.totalorder %s25, 0
    %p88 = por %p86, %p87
    %p89 = scmp.ne.s32.totalorder %s77, %s78
    %p90 = scmp.eq.s32.totalorder %s26, 1
    %p91 = por %p89, %p90
    %p93 = scmp.ne.s32.totalorder %s78, %s92
    %p94 = scmp.eq.s32.totalorder %s26, 0
    %p95 = por %p93, %p94
    %s97 = sadd.s32 %s96, 1
    %p100 = scmp.eq.s32.totalorder %s20, 1
    %p101 = scmp.ne.s32.totalorder %s96, %s98
    %p102 = scmp.eq.s32.totalorder %s20, 0
    %p103 = por %p101, %p102
    %p104 = scmp.ne.s32.totalorder %s96, %s98
    %p105 = scmp.eq.s32.totalorder %s25, 1
    %p106 = por %p104, %p105
    %p107 = scmp.ne.s32.totalorder %s98, %s99
    %p108 = scmp.eq.s32.totalorder %s25, 0
    %p109 = por %p107, %p108
    %p110 = scmp.ne.s32.totalorder %s98, %s99
    %p111 = scmp.eq.s32.totalorder %s26, 1
    %p112 = por %p110, %p111
    %p114 = scmp.ne.s32.totalorder %s99, %s113
    %p115 = scmp.eq.s32.totalorder %s26, 0
    %p116 = por %p114, %p115
    %s118 = sadd.s32 %s117, 1
    %p121 = scmp.eq.s32.totalorder %s20, 1
    %p122 = scmp.ne.s32.totalorder %s117, %s119
    %p123 = scmp.eq.s32.totalorder %s20, 0
    %p124 = por %p122, %p123
    %p125 = scmp.ne.s32.totalorder %s117, %s119
    %p126 = scmp.eq.s32.totalorder %s25, 1
    %p127 = por %p125, %p126
    %p128 = scmp.ne.s32.totalorder %s119, %s120
    %p129 = scmp.eq.s32.totalorder %s25, 0
    %p130 = por %p128, %p129
    %p131 = scmp.ne.s32.totalorder %s119, %s120
    %p132 = scmp.eq.s32.totalorder %s26, 1
    %p133 = por %p131, %p132
    %p135 = scmp.ne.s32.totalorder %s120, %s134
    %p136 = scmp.eq.s32.totalorder %s26, 0
    %p137 = por %p135, %p136
    %s139 = sadd.s32 %s138, 1
    %p142 = scmp.eq.s32.totalorder %s20, 1
    %p143 = scmp.ne.s32.totalorder %s138, %s140
    %p144 = scmp.eq.s32.totalorder %s20, 0
    %p145 = por %p143, %p144
    %p146 = scmp.ne.s32.totalorder %s138, %s140
    %p147 = scmp.eq.s32.totalorder %s25, 1
    %p148 = por %p146, %p147
    %p149 = scmp.ne.s32.totalorder %s140, %s141
    %p150 = scmp.eq.s32.totalorder %s25, 0
    %p151 = por %p149, %p150
    %p152 = scmp.ne.s32.totalorder %s140, %s141
    %p153 = scmp.eq.s32.totalorder %s26, 1
    %p154 = por %p152, %p153
    %p156 = scmp.ne.s32.totalorder %s141, %s155
    %p157 = scmp.eq.s32.totalorder %s26, 0
    %p158 = por %p156, %p157
    %s160 = sadd.s32 %s159, 1
    %p163 = scmp.eq.s32.totalorder %s20, 1
    %p164 = scmp.ne.s32.totalorder %s159, %s161
    %p165 = scmp.eq.s32.totalorder %s20, 0
    %p166 = por %p164, %p165
    %p167 = scmp.ne.s32.totalorder %s159, %s161
    %p168 = scmp.eq.s32.totalorder %s25, 1
    %p169 = por %p167, %p168
    %p170 = scmp.ne.s32.totalorder %s161, %s162
    %p171 = scmp.eq.s32.totalorder %s25, 0
    %p172 = por %p170, %p171
    %p173 = scmp.ne.s32.totalorder %s161, %s162
    %p174 = scmp.eq.s32.totalorder %s26, 1
    %p175 = por %p173, %p174
    %p177 = scmp.ne.s32.totalorder %s162, %s176
    %p178 = scmp.eq.s32.totalorder %s26, 0
    %p179 = por %p177, %p178
    %s180 = ssub.s32 %s20, %s27
    %p181 = scmp.eq.s32.totalorder %s180, 0
    %s183 = sadd.s32 %s182, 1
    %s184 = scalar_select %p181, %s182, %s183
    %p187 = pneg %p181
    %p188 = scmp.eq.s32.totalorder %s20, 1
    %p189 = por %p187, %p188
    %p190 = scmp.ne.s32.totalorder %s182, %s185
    %p191 = scmp.eq.s32.totalorder %s20, 0
    %p192 = por %p190, %p191
    %p193 = scmp.ne.s32.totalorder %s182, %s185
    %p194 = scmp.eq.s32.totalorder %s25, 1
    %p195 = por %p193, %p194
    %p196 = scmp.ne.s32.totalorder %s185, %s186
    %p197 = scmp.eq.s32.totalorder %s25, 0
    %p198 = por %p196, %p197
    %p199 = scmp.ne.s32.totalorder %s185, %s186
    %p200 = scmp.eq.s32.totalorder %s26, 1
    %p201 = por %p199, %p200
    %p203 = scmp.ne.s32.totalorder %s186, %s202
    %p204 = scmp.eq.s32.totalorder %s26, 0
    %p205 = por %p203, %p204
    %p206 = scmp.le.s32.totalorder 1, %s20
    %p207 = scmp.lt.s32.totalorder %s20, 3
    %p208 = pnand %p206, %p207
    %p209 = pneg %p208
    // Predicated region
    $region9: #{transformer_forward.11} parent=5 // pred_check
      _
    $region10: #{transformer_forward.11} parent=5 // pred_check_branch
      %211 = sbr.rel (%p208) target = $region12
    $region11: #{transformer_forward.11} parent=5 // pred_region
      %s212 = ssub.s32 %s20, 1
      // Predicated region
      $region13: #{transformer_forward.11} parent=11 // pred_check
        %p213 = pneg %p67
      $region14: #{transformer_forward.11} parent=11 // pred_check_branch
        %215 = sbr.rel (%p213) target = $region16
      $region15: #{transformer_forward.11} parent=11 // pred_region
        _
      $region16: #{transformer_forward.11} parent=11 // pred_fallthru
        _
      // Predicated region
      $region17: #{transformer_forward.11} parent=11 // pred_check
        %p216 = pneg %p88
      $region18: #{transformer_forward.11} parent=11 // pred_check_branch
        %218 = sbr.rel (%p216) target = $region20
      $region19: #{transformer_forward.11} parent=11 // pred_region
        _
      $region20: #{transformer_forward.11} parent=11 // pred_fallthru
        _
      // Predicated region
      $region21: #{transformer_forward.11} parent=11 // pred_check
        %p219 = pneg %p109
      $region22: #{transformer_forward.11} parent=11 // pred_check_branch
        %221 = sbr.rel (%p219) target = $region24
      $region23: #{transformer_forward.11} parent=11 // pred_region
        _
      $region24: #{transformer_forward.11} parent=11 // pred_fallthru
        _
      // Predicated region
      $region25: #{transformer_forward.11} parent=11 // pred_check
        %p222 = pneg %p130
      $region26: #{transformer_forward.11} parent=11 // pred_check_branch
        %224 = sbr.rel (%p222) target = $region28
      $region27: #{transformer_forward.11} parent=11 // pred_region
        _
      $region28: #{transformer_forward.11} parent=11 // pred_fallthru
        _
      // Predicated region
      $region29: #{transformer_forward.11} parent=11 // pred_check
        %p225 = pneg %p151
      $region30: #{transformer_forward.11} parent=11 // pred_check_branch
        %227 = sbr.rel (%p225) target = $region32
      $region31: #{transformer_forward.11} parent=11 // pred_region
        _
      $region32: #{transformer_forward.11} parent=11 // pred_fallthru
        _
      // Predicated region
      $region33: #{transformer_forward.11} parent=11 // pred_check
        %p228 = pneg %p172
      $region34: #{transformer_forward.11} parent=11 // pred_check_branch
        %230 = sbr.rel (%p228) target = $region36
      $region35: #{transformer_forward.11} parent=11 // pred_region
        _
      $region36: #{transformer_forward.11} parent=11 // pred_fallthru
        _
    $region12: #{transformer_forward.11} parent=5 // pred_fallthru
      _
    %p231 = scmp.lt.s32.totalorder %s20, 2
    // Predicated region
    $region37: #{transformer_forward.11} parent=5 // pred_check
      %p232 = pneg %p231
    $region38: #{transformer_forward.11} parent=5 // pred_check_branch
      %234 = sbr.rel (%p232) target = $region40
    $region39: #{transformer_forward.11} parent=5 // pred_region
      // Predicated region
      $region41: #{transformer_forward.11} parent=39 // pred_check
        %p235 = pneg %p40
      $region42: #{transformer_forward.11} parent=39 // pred_check_branch
        %237 = sbr.rel (%p235) target = $region44
      $region43: #{transformer_forward.11} parent=39 // pred_region
        %p238 = scmp.lt.s32.totalorder %s20, 1
        %s239 = scalar_select %p238, %s20, 1
        %s240 = smul.addr %s239, 4
        %s241 = smul.addr %s240, 4
        %s242 = scalar_lea.vmem %s1, %s241
      $region44: #{transformer_forward.11} parent=39 // pred_fallthru
        _
    $region40: #{transformer_forward.11} parent=5 // pred_fallthru
      _
    %p243 = scmp.le.s32.totalorder 1, %s20
    %p244 = scmp.lt.s32.totalorder %s20, 3
    %p245 = pnand %p243, %p244
    %p246 = pneg %p245
    // Predicated region
    $region45: #{transformer_forward.11} parent=5 // pred_check
      _
    $region46: #{transformer_forward.11} parent=5 // pred_check_branch
      %248 = sbr.rel (%p245) target = $region48
    $region47: #{transformer_forward.11} parent=5 // pred_region
      %s249 = ssub.s32 %s20, 1
      %p250 = scmp.lt.s32.totalorder %s25, 1
      %s251 = scalar_select %p250, %s25, 1
      %s252 = smul.addr %s251, 4
      %s253 = smul.addr %s252, 4
      %s254 = scalar_lea.vmem %s1, %s253
      %p255 = pneg %p46
      %p256 = pneg %p43
      %p257 = pneg %p67
      %p258 = pneg %p64
      %p259 = pneg %p88
      %p260 = pneg %p85
      %p261 = pneg %p109
      %p262 = pneg %p106
      %p263 = pneg %p130
      %p264 = pneg %p127
      %p265 = pneg %p151
      %p266 = pneg %p148
      %p267 = pneg %p172
      %p268 = pneg %p169
      %p269 = pneg %p198
      %p270 = pneg %p195
      %p271 = scmp.lt.s32.totalorder %s25, 1
      %s272 = scalar_select %p271, %s25, 1
      %s273 = smul.addr %s272, 4
      %s274 = smul.addr %s273, 4
      %s275 = scalar_lea.vmem %s8, %s274
      %p276 = scmp.lt.s32.totalorder %s25, 1
      %s277 = scalar_select %p276, %s25, 1
      %s278 = smul.addr %s277, 4
      %s279 = smul.addr %s278, 4
      %s280 = scalar_lea.vmem %s1, %s279
      %p281 = scmp.lt.s32.totalorder %s25, 1
      %s282 = scalar_select %p281, %s25, 1
      %s283 = smul.addr %s282, 4
      %s284 = smul.addr %s283, 4
      %s285 = scalar_lea.vmem %s8, %s284
      %s287 = sld [smem:[#allocation3 + %s25]]
      %v288 = vld [vmem:[%s280] sm:$0xf]
      %v289 = vld [vmem:[%s280 + $0x4] sm:$0xf]
      %v290 = vld [vmem:[%s280 + $0x8] sm:$0xf]
      %v291 = vld [vmem:[%s280 + $0xc] sm:$0xf]
      %v292 = vld [vmem:[%s2] sm:$0xff]
      %v293 = vld [vmem:[%s2 + $0x8] sm:$0xf]
      %v294 = vld [vmem:[%s2 + $0xc] sm:$0xff]
      %v295 = vld [vmem:[%s2 + $0x14] sm:$0xf]
      %v296 = vld [vmem:[%s2 + $0x18] sm:$0xff]
      %v297 = vld [vmem:[%s2 + $0x20] sm:$0xf]
      %v298 = vld [vmem:[%s2 + $0x24] sm:$0xff]
      %v299 = vld [vmem:[%s2 + $0x2c] sm:$0xf]
      %v300 = vld [vmem:[%s2 + $0x30] sm:$0xff]
      %v301 = vld [vmem:[%s2 + $0x38] sm:$0xf]
      %v302 = vld [vmem:[%s2 + $0x3c] sm:$0xff]
      %v303 = vld [vmem:[%s2 + $0x44] sm:$0xf]
      %v304 = vld [vmem:[%s2 + $0x48] sm:$0xff]
      %v305 = vld [vmem:[%s2 + $0x50] sm:$0xf]
      %v306 = vld [vmem:[%s2 + $0x54] sm:$0xff]
      %v307 = vld [vmem:[%s2 + $0x5c] sm:$0xf]
      %v308 = vld [vmem:[%s2 + $0x60] sm:$0xff]
      %v309 = vld [vmem:[%s2 + $0x68] sm:$0xf]
      %v310 = vld [vmem:[%s2 + $0x6c] sm:$0xff]
      %v311 = vld [vmem:[%s2 + $0x74] sm:$0xf]
      %v312 = vld [vmem:[%s2 + $0x78] sm:$0xff]
      %v313 = vld [vmem:[%s2 + $0x80] sm:$0xf]
      %v314 = vld [vmem:[%s2 + $0x84] sm:$0xff]
      %v315 = vld [vmem:[%s2 + $0x8c] sm:$0xf]
      %v316 = vld [vmem:[%s2 + $0x90] sm:$0xff]
      %v317 = vld [vmem:[%s2 + $0x98] sm:$0xf]
      %v318 = vld [vmem:[%s2 + $0x9c] sm:$0xff]
      %v319 = vld [vmem:[%s2 + $0xa4] sm:$0xf]
      %v320 = vld [vmem:[%s2 + $0xa8] sm:$0xff]
      %v321 = vld [vmem:[%s2 + $0xb0] sm:$0xf]
      %v322 = vld [vmem:[%s2 + $0xb4] sm:$0xff]
      %v323 = vld [vmem:[%s2 + $0xbc] sm:$0xf]
      %v324 = vld [vmem:[%s3] sm:$0x7]
      %v326 = vlaneseq
      %v327 = vshrl.u32 %v326, 7
      %v328 = vsub.s32 0, %v327
      %v329 = vrot.slane %v324, %v328
      %v330 = vlaneseq
      %v331 = vshrl.u32 %v330, 7
      %v332 = vsub.s32 1, %v331
      %v333 = vrot.slane %v324, %v332
      %v334 = vlaneseq
      %v335 = vshrl.u32 %v334, 7
      %v336 = vsub.s32 2, %v335
      %v337 = vrot.slane %v324, %v336
      %v345 = vunpack.c.l.b16 %v288
      %v346 = vunpack.c.l.b16 %v289
      %v347 = vunpack.c.l.b16 %v290
      %v348 = vunpack.c.l.b16 %v291
      %v349 = vpack.c.b16 %v346, %v345
      %v350 = vpack.c.b16 %v348, %v347
      %v385 = vunpack.c.l.b16 %v292
      %v386 = vunpack.c.h.b16 %v292
      %v387 = vunpack.c.l.b16 %v293
      %v388 = vunpack.c.l.b16 %v294
      %v389 = vunpack.c.h.b16 %v294
      %v390 = vunpack.c.l.b16 %v295
      %v391 = vunpack.c.l.b16 %v296
      %v392 = vunpack.c.h.b16 %v296
      %v393 = vunpack.c.l.b16 %v297
      %v394 = vunpack.c.l.b16 %v298
      %v395 = vunpack.c.h.b16 %v298
      %v396 = vunpack.c.l.b16 %v299
      %v397 = vunpack.c.l.b16 %v300
      %v398 = vunpack.c.h.b16 %v300
      %v399 = vunpack.c.l.b16 %v301
      %v400 = vunpack.c.l.b16 %v302
      %v401 = vunpack.c.h.b16 %v302
      %v402 = vunpack.c.l.b16 %v303
      %v403 = vunpack.c.l.b16 %v304
      %v404 = vunpack.c.h.b16 %v304
      %v405 = vunpack.c.l.b16 %v305
      %v406 = vunpack.c.l.b16 %v306
      %v407 = vunpack.c.h.b16 %v306
      %v408 = vunpack.c.l.b16 %v307
      %v409 = vunpack.c.l.b16 %v308
      %v410 = vunpack.c.h.b16 %v308
      %v411 = vunpack.c.l.b16 %v309
      %v412 = vunpack.c.l.b16 %v310
      %v413 = vunpack.c.h.b16 %v310
      %v414 = vunpack.c.l.b16 %v311
      %v415 = vunpack.c.l.b16 %v312
      %v416 = vunpack.c.h.b16 %v312
      %v417 = vunpack.c.l.b16 %v313
      %v418 = vunpack.c.l.b16 %v314
      %v419 = vunpack.c.h.b16 %v314
      %v420 = vunpack.c.l.b16 %v315
      %v421 = vunpack.c.l.b16 %v316
      %v422 = vunpack.c.h.b16 %v316
      %v423 = vunpack.c.l.b16 %v317
      %v424 = vunpack.c.l.b16 %v318
      %v425 = vunpack.c.h.b16 %v318
      %v426 = vunpack.c.l.b16 %v319
      %v427 = vunpack.c.l.b16 %v320
      %v428 = vunpack.c.h.b16 %v320
      %v429 = vunpack.c.l.b16 %v321
      %v430 = vunpack.c.l.b16 %v322
      %v431 = vunpack.c.h.b16 %v322
      %v432 = vunpack.c.l.b16 %v323
      %v433 = vpack.c.b16 %v388, %v385
      %v434 = vpack.c.b16 %v389, %v386
      %v435 = vpack.c.b16 %v390, %v387
      %v436 = vpack.c.b16 %v394, %v391
      %v437 = vpack.c.b16 %v395, %v392
      %v438 = vpack.c.b16 %v396, %v393
      %v439 = vpack.c.b16 %v400, %v397
      %v440 = vpack.c.b16 %v401, %v398
      %v441 = vpack.c.b16 %v402, %v399
      %v442 = vpack.c.b16 %v406, %v403
      %v443 = vpack.c.b16 %v407, %v404
      %v444 = vpack.c.b16 %v408, %v405
      %v445 = vpack.c.b16 %v412, %v409
      %v446 = vpack.c.b16 %v413, %v410
      %v447 = vpack.c.b16 %v414, %v411
      %v448 = vpack.c.b16 %v418, %v415
      %v449 = vpack.c.b16 %v419, %v416
      %v450 = vpack.c.b16 %v420, %v417
      %v451 = vpack.c.b16 %v424, %v421
      %v452 = vpack.c.b16 %v425, %v422
      %v453 = vpack.c.b16 %v426, %v423
      %v454 = vpack.c.b16 %v430, %v427
      %v455 = vpack.c.b16 %v431, %v428
      %v456 = vpack.c.b16 %v432, %v429
      %481 = vmatprep.subr.bf16.mxu0 %v434
      %482 = vmatpush1.bf16.msra.mxu0 %v433
      %483 = vmatprep.subr.bf16.mxu0 %v437
      %484 = vmatpush1.bf16.msra.mxu0 %v436
      %485 = vmatprep.subr.bf16.mxu0 %v440
      %486 = vmatpush1.bf16.msra.mxu0 %v439
      %487 = vmatprep.subr.bf16.mxu0 %v443
      %488 = vmatpush1.bf16.msra.mxu0 %v442
      %489 = vmatprep.subr.bf16.mxu0 %v446
      %490 = vmatpush1.bf16.msra.mxu0 %v445
      %491 = vmatprep.subr.bf16.mxu0 %v449
      %492 = vmatpush1.bf16.msra.mxu0 %v448
      %493 = vmatprep.subr.bf16.mxu0 %v452
      %494 = vmatpush1.bf16.msra.mxu0 %v451
      %495 = vmatprep.subr.bf16.mxu0 %v455
      %496 = vmatpush1.bf16.msra.mxu0 %v454
      %497 = vmatprep.subr.bf16.mxu0 0
      %498 = vmatpush1.bf16.msra.mxu0 0
      %499 = vmatprep.subr.bf16.mxu0 0
      %500 = vmatpush1.bf16.msra.mxu0 0
      %501 = vmatprep.subr.bf16.mxu0 0
      %502 = vmatpush1.bf16.msra.mxu0 0
      %503 = vmatprep.subr.bf16.mxu0 0
      %504 = vmatpush1.bf16.msra.mxu0 0
      %505 = vmatprep.subr.bf16.mxu0 0
      %506 = vmatpush1.bf16.msra.mxu0 0
      %507 = vmatprep.subr.bf16.mxu0 0
      %508 = vmatpush1.bf16.msra.mxu0 0
      %509 = vmatprep.subr.bf16.mxu0 0
      %510 = vmatpush1.bf16.msra.mxu0 0
      %511 = vmatprep.subr.bf16.mxu0 0
      %512 = vmatpush1.bf16.msra.mxu0 0
      %513 = vmatprep.mubr.bf16.mxu0 0
      %514 = vmatmul.mubr.bf16.gmra.mrb[0].mxu0 %v349
      %v515 = vpop.f32.mrb[0].mxu0
      %v516 = vadd.f32 %v329, %v515
      %v517 = vpop.f32.mrb[0].mxu0
      %v518 = vadd.f32 %v333, %v517
      %v519 = vpop.f32.mrb[0].mxu0
      %v520 = vadd.f32 %v329, %v519
      %v521 = vpop.f32.mrb[0].mxu0
      %v522 = vadd.f32 %v333, %v521
      %523 = vmatprep.mubr.bf16.mxu0 0
      %524 = vmatmul.mubr.bf16.gmra.mrb[0].mxu0 %v350
      %v525 = vpop.f32.mrb[0].mxu0
      %v526 = vadd.f32 %v329, %v525
      %v527 = vpop.f32.mrb[0].mxu0
      %v528 = vadd.f32 %v333, %v527
      %v529 = vpop.f32.mrb[0].mxu0
      %v530 = vadd.f32 %v329, %v529
      %v531 = vpop.f32.mrb[0].mxu0
      %v532 = vadd.f32 %v333, %v531
      %533 = vdwg.mxu0
      %534 = vmatprep.subr.bf16.mxu0 0
      %535 = vmatpush1.bf16.msra.mxu0 %v435
      %536 = vmatprep.subr.bf16.mxu0 0
      %537 = vmatpush1.bf16.msra.mxu0 %v438
      %538 = vmatprep.subr.bf16.mxu0 0
      %539 = vmatpush1.bf16.msra.mxu0 %v441
      %540 = vmatprep.subr.bf16.mxu0 0
      %541 = vmatpush1.bf16.msra.mxu0 %v444
      %542 = vmatprep.subr.bf16.mxu0 0
      %543 = vmatpush1.bf16.msra.mxu0 %v447
      %544 = vmatprep.subr.bf16.mxu0 0
      %545 = vmatpush1.bf16.msra.mxu0 %v450
      %546 = vmatprep.subr.bf16.mxu0 0
      %547 = vmatpush1.bf16.msra.mxu0 %v453
      %548 = vmatprep.subr.bf16.mxu0 0
      %549 = vmatpush1.bf16.msra.mxu0 %v456
      %550 = vmatprep.subr.bf16.mxu0 0
      %551 = vmatpush1.bf16.msra.mxu0 0
      %552 = vmatprep.subr.bf16.mxu0 0
      %553 = vmatpush1.bf16.msra.mxu0 0
      %554 = vmatprep.subr.bf16.mxu0 0
      %555 = vmatpush1.bf16.msra.mxu0 0
      %556 = vmatprep.subr.bf16.mxu0 0
      %557 = vmatpush1.bf16.msra.mxu0 0
      %558 = vmatprep.subr.bf16.mxu0 0
      %559 = vmatpush1.bf16.msra.mxu0 0
      %560 = vmatprep.subr.bf16.mxu0 0
      %561 = vmatpush1.bf16.msra.mxu0 0
      %562 = vmatprep.subr.bf16.mxu0 0
      %563 = vmatpush1.bf16.msra.mxu0 0
      %564 = vmatprep.subr.bf16.mxu0 0
      %565 = vmatpush1.bf16.msra.mxu0 0
      %566 = vmatprep.mubr.bf16.mxu0 0
      %567 = vmatmul.mubr.bf16.gmra.mrb[0].mxu0 %v349
      %v568 = vpop.f32.mrb[0].mxu0
      %v569 = vadd.f32 %v337, %v568
      %v570 = vpop.f32.mrb[0].mxu0
      %v571 = vpop.f32.mrb[0].mxu0
      %v572 = vadd.f32 %v337, %v571
      %v573 = vpop.f32.mrb[0].mxu0
      %574 = vmatprep.mubr.bf16.mxu0 0
      %575 = vmatmul.mubr.bf16.gmra.mrb[0].mxu0 %v350
      %v576 = vpop.f32.mrb[0].mxu0
      %v577 = vadd.f32 %v337, %v576
      %v578 = vpop.f32.mrb[0].mxu0
      %v579 = vpop.f32.mrb[0].mxu0
      %v580 = vadd.f32 %v337, %v579
      %v581 = vpop.f32.mrb[0].mxu0
      %582 = vdwg.mxu0
      %v583 = vld [vmem:[%s4] sm:$0xf]
      %v584 = vld [vmem:[%s4 + $0x4] sm:$0xf]
      %v585 = vld [vmem:[%s4 + $0x8] sm:$0xf]
      %v586 = vld [vmem:[%s4 + $0xc] sm:$0xf]
      %v587 = vld [vmem:[%s4 + $0x10] sm:$0xf]
      %v588 = vld [vmem:[%s4 + $0x14] sm:$0xf]
      %v589 = vld [vmem:[%s4 + $0x18] sm:$0xf]
      %v590 = vld [vmem:[%s4 + $0x1c] sm:$0xf]
      %v591 = vld [vmem:[%s4 + $0x20] sm:$0xf]
      %v592 = vld [vmem:[%s4 + $0x24] sm:$0xf]
      %v593 = vld [vmem:[%s4 + $0x28] sm:$0xf]
      %v594 = vld [vmem:[%s4 + $0x2c] sm:$0xf]
      %v595 = vld [vmem:[%s4 + $0x30] sm:$0xf]
      %v596 = vld [vmem:[%s4 + $0x34] sm:$0xf]
      %v597 = vld [vmem:[%s4 + $0x38] sm:$0xf]
      %v598 = vld [vmem:[%s4 + $0x3c] sm:$0xf]
      %v599 = vlaneseq
      %v600 = vand.u32 %v599, 127
      %v601 = vstv %s287
      %vm602 = vcmp.lt.s32.totalorder %v600, %v601
      %v603 = vsel %vm602, 0.0, -1e+09
      %v604 = vpack.c.bf16 %v520, %v516
      %v605 = vpack.c.bf16 %v530, %v526
      %v606 = vpack.c.bf16 %v522, %v518
      %v607 = vpack.c.bf16 %v532, %v528
      %v608 = vpack.c.bf16 %v572, %v569
      %v609 = vpack.c.bf16 %v580, %v577
      %vm610 = vcmask 523264
      %v612 = vsel %vm610, %v604, 0
      %v615 = vsel %vm610, %v605, 0
      %v618 = vsel %vm610, %v606, 0
      %v621 = vsel %vm610, %v607, 0
      %623 = vmatprep.subr.bf16.mxu0 0
      %624 = vmatpush1.bf16.xpose.msra.mxu0 %v618
      %625 = vmatprep.subr.bf16.mxu0 0
      %626 = vmatpush1.bf16.xpose.msra.mxu0 %v621
      %627 = vmatprep.subr.bf16.mxu0 0
      %628 = vmatpush1.bf16.xpose.msra.mxu0 0
      %629 = vmatprep.subr.bf16.mxu0 0
      %630 = vmatpush1.bf16.xpose.msra.mxu0 0
      %631 = vmatprep.subr.bf16.mxu0 0
      %632 = vmatpush1.bf16.xpose.msra.mxu0 0
      %633 = vmatprep.subr.bf16.mxu0 0
      %634 = vmatpush1.bf16.xpose.msra.mxu0 0
      %635 = vmatprep.subr.bf16.mxu0 0
      %636 = vmatpush1.bf16.xpose.msra.mxu0 0
      %637 = vmatprep.subr.bf16.mxu0 0
      %638 = vmatpush1.bf16.xpose.msra.mxu0 0
      %639 = vmatprep.subr.bf16.mxu0 0
      %640 = vmatpush1.bf16.xpose.msra.mxu0 0
      %641 = vmatprep.subr.bf16.mxu0 0
      %642 = vmatpush1.bf16.xpose.msra.mxu0 0
      %643 = vmatprep.subr.bf16.mxu0 0
      %644 = vmatpush1.bf16.xpose.msra.mxu0 0
      %645 = vmatprep.subr.bf16.mxu0 0
      %646 = vmatpush1.bf16.xpose.msra.mxu0 0
      %647 = vmatprep.subr.bf16.mxu0 0
      %648 = vmatpush1.bf16.xpose.msra.mxu0 0
      %649 = vmatprep.subr.bf16.mxu0 0
      %650 = vmatpush1.bf16.xpose.msra.mxu0 0
      %651 = vmatprep.subr.bf16.mxu0 0
      %652 = vmatpush1.bf16.xpose.msra.mxu0 0
      %653 = vmatprep.subr.bf16.mxu0 0
      %654 = vmatpush1.bf16.xpose.msra.mxu0 0
      %655 = vmatprep.mubr.bf16.mxu0 0
      %656 = vmatmul.mubr.bf16.gmra.mrb[0].mxu0 %v612
      %v657 = vpop.f32.mrb[0].mxu0
      %v658 = vadd.f32 0.0, %v657
      %v659 = vpop.f32.mrb[0].mxu0
      %v660 = vpop.f32.mrb[0].mxu0
      %v661 = vadd.f32 0.0, %v660
      %v662 = vpop.f32.mrb[0].mxu0
      %663 = vmatprep.mubr.bf16.mxu0 0
      %664 = vmatmul.mubr.bf16.gmra.mrb[0].mxu0 %v615
      %v665 = vpop.f32.mrb[0].mxu0
      %v666 = vadd.f32 0.0, %v665
      %v667 = vpop.f32.mrb[0].mxu0
      %v668 = vpop.f32.mrb[0].mxu0
      %v669 = vadd.f32 0.0, %v668
      %v670 = vpop.f32.mrb[0].mxu0
      %671 = vdwg.mxu0
      %v672 = vmul.f32 %v658, 0.125
      %v673 = vmul.f32 %v661, 0.125
      %v674 = vmul.f32 %v666, 0.125
      %v675 = vmul.f32 %v669, 0.125
      %v676 = vadd.f32 %v672, %v603
      %v677 = vadd.f32 %v673, %v603
      %v678 = vadd.f32 %v674, %v603
      %v679 = vadd.f32 %v675, %v603
      %vm680 = vcmask 261120
      %v681 = vsel %vm680, %v676, -inf
      %682 = vmax.xlane.f32.xlu0 %v681
      %v683 = vpop.xlane.xlu0 %682
      %v684 = vsel %vm680, %v677, -inf
      %685 = vmax.xlane.f32.xlu0 %v684
      %v686 = vpop.xlane.xlu0 %685
      %v687 = vsel %vm680, %v678, -inf
      %688 = vmax.xlane.f32.xlu0 %v687
      %v689 = vpop.xlane.xlu0 %688
      %v690 = vsel %vm680, %v679, -inf
      %691 = vmax.xlane.f32.xlu0 %v690
      %v692 = vpop.xlane.xlu0 %691
      %v693 = vsub.f32 %v676, %v683
      %v694 = vsub.f32 %v677, %v686
      %v695 = vsub.f32 %v678, %v689
      %v696 = vsub.f32 %v679, %v692
      %v697 = vmul.f32 %v693, 1.442695
      %v698 = vpow.pop %v697
      %v699 = vmul.f32 %v694, 1.442695
      %v700 = vpow.pop %v699
      %v701 = vmul.f32 %v695, 1.442695
      %v702 = vpow.pop %v701
      %v703 = vmul.f32 %v696, 1.442695
      %v704 = vpow.pop %v703
      %v705 = vsel %vm680, %v698, 0.0
      %706 = vadd.xlane.f32.xlu0 %v705
      %v707 = vpop.xlane.xlu0 %706
      %v708 = vsel %vm680, %v700, 0.0
      %709 = vadd.xlane.f32.xlu0 %v708
      %v710 = vpop.xlane.xlu0 %709
      %v711 = vsel %vm680, %v702, 0.0
      %712 = vadd.xlane.f32.xlu0 %v711
      %v713 = vpop.xlane.xlu0 %712
      %v714 = vsel %vm680, %v704, 0.0
      %715 = vadd.xlane.f32.xlu0 %v714
      %v716 = vpop.xlane.xlu0 %715
      %v717 = vrcp.pop %v707
      %v718 = vrcp.pop %v710
      %v719 = vrcp.pop %v713
      %v720 = vrcp.pop %v716
      %v721 = vmul.f32 %v698, %v717
      %v722 = vmul.f32 %v700, %v718
      %v723 = vmul.f32 %v702, %v719
      %v724 = vmul.f32 %v704, %v720
      %v725 = vpack.c.bf16 %v722, %v721
      %v726 = vpack.c.bf16 %v724, %v723
      %v728 = vsel %vm680, %v725, 0
      %v731 = vsel %vm680, %v726, 0
      %733 = vmatprep.subr.bf16.mxu0 0
      %734 = vmatpush1.bf16.msra.mxu0 %v608
      %735 = vmatprep.subr.bf16.mxu0 0
      %736 = vmatpush1.bf16.msra.mxu0 %v609
      %737 = vmatprep.subr.bf16.mxu0 0
      %738 = vmatpush1.bf16.msra.mxu0 0
      %739 = vmatprep.subr.bf16.mxu0 0
      %740 = vmatpush1.bf16.msra.mxu0 0
      %741 = vmatprep.subr.bf16.mxu0 0
      %742 = vmatpush1.bf16.msra.mxu0 0
      %743 = vmatprep.subr.bf16.mxu0 0
      %744 = vmatpush1.bf16.msra.mxu0 0
      %745 = vmatprep.subr.bf16.mxu0 0
      %746 = vmatpush1.bf16.msra.mxu0 0
      %747 = vmatprep.subr.bf16.mxu0 0
      %748 = vmatpush1.bf16.msra.mxu0 0
      %749 = vmatprep.subr.bf16.mxu0 0
      %750 = vmatpush1.bf16.msra.mxu0 0
      %751 = vmatprep.subr.bf16.mxu0 0
      %752 = vmatpush1.bf16.msra.mxu0 0
      %753 = vmatprep.subr.bf16.mxu0 0
      %754 = vmatpush1.bf16.msra.mxu0 0
      %755 = vmatprep.subr.bf16.mxu0 0
      %756 = vmatpush1.bf16.msra.mxu0 0
      %757 = vmatprep.subr.bf16.mxu0 0
      %758 = vmatpush1.bf16.msra.mxu0 0
      %759 = vmatprep.subr.bf16.mxu0 0
      %760 = vmatpush1.bf16.msra.mxu0 0
      %761 = vmatprep.subr.bf16.mxu0 0
      %762 = vmatpush1.bf16.msra.mxu0 0
      %763 = vmatprep.subr.bf16.mxu0 0
      %764 = vmatpush1.bf16.msra.mxu0 0
      %765 = vmatprep.mubr.bf16.mxu0 0
      %766 = vmatmul.mubr.bf16.gmra.mrb[0].mxu0 %v728
      %v767 = vpop.f32.mrb[0].mxu0
      %v768 = vadd.f32 0.0, %v767
      %v769 = vpop.f32.mrb[0].mxu0
      %v770 = vpop.f32.mrb[0].mxu0
      %v771 = vadd.f32 0.0, %v770
      %v772 = vpop.f32.mrb[0].mxu0
      %773 = vmatprep.mubr.bf16.mxu0 0
      %774 = vmatmul.mubr.bf16.gmra.mrb[0].mxu0 %v731
      %v775 = vpop.f32.mrb[0].mxu0
      %v776 = vadd.f32 0.0, %v775
      %v777 = vpop.f32.mrb[0].mxu0
      %v778 = vpop.f32.mrb[0].mxu0
      %v779 = vadd.f32 0.0, %v778
      %v780 = vpop.f32.mrb[0].mxu0
      %781 = vdwg.mxu0
      %v782 = vpack.c.bf16 %v771, %v768
      %v783 = vpack.c.bf16 %v779, %v776
      %786 = vrot.lane.b32.xlu0 %v604, 64
      %v787 = vpop.permute.xlu0 %786
      %788 = vrot.lane.b32.xlu0 %v605, 64
      %v789 = vpop.permute.xlu0 %788
      %792 = vrot.lane.b32.xlu0 %v606, 64
      %v793 = vpop.permute.xlu0 %792
      %794 = vrot.lane.b32.xlu0 %v607, 64
      %v795 = vpop.permute.xlu0 %794
      %v797 = vsel %vm610, %v787, 0
      %v800 = vsel %vm610, %v789, 0
      %v803 = vsel %vm610, %v793, 0
      %v806 = vsel %vm610, %v795, 0
      %808 = vmatprep.subr.bf16.mxu0 0
      %809 = vmatpush1.bf16.xpose.msra.mxu0 %v803
      %810 = vmatprep.subr.bf16.mxu0 0
      %811 = vmatpush1.bf16.xpose.msra.mxu0 %v806
      %812 = vmatprep.subr.bf16.mxu0 0
      %813 = vmatpush1.bf16.xpose.msra.mxu0 0
      %814 = vmatprep.subr.bf16.mxu0 0
      %815 = vmatpush1.bf16.xpose.msra.mxu0 0
      %816 = vmatprep.subr.bf16.mxu0 0
      %817 = vmatpush1.bf16.xpose.msra.mxu0 0
      %818 = vmatprep.subr.bf16.mxu0 0
      %819 = vmatpush1.bf16.xpose.msra.mxu0 0
      %820 = vmatprep.subr.bf16.mxu0 0
      %821 = vmatpush1.bf16.xpose.msra.mxu0 0
      %822 = vmatprep.subr.bf16.mxu0 0
      %823 = vmatpush1.bf16.xpose.msra.mxu0 0
      %824 = vmatprep.subr.bf16.mxu0 0
      %825 = vmatpush1.bf16.xpose.msra.mxu0 0
      %826 = vmatprep.subr.bf16.mxu0 0
      %827 = vmatpush1.bf16.xpose.msra.mxu0 0
      %828 = vmatprep.subr.bf16.mxu0 0
      %829 = vmatpush1.bf16.xpose.msra.mxu0 0
      %830 = vmatprep.subr.bf16.mxu0 0
      %831 = vmatpush1.bf16.xpose.msra.mxu0 0
      %832 = vmatprep.subr.bf16.mxu0 0
      %833 = vmatpush1.bf16.xpose.msra.mxu0 0
      %834 = vmatprep.subr.bf16.mxu0 0
      %835 = vmatpush1.bf16.xpose.msra.mxu0 0
      %836 = vmatprep.subr.bf16.mxu0 0
      %837 = vmatpush1.bf16.xpose.msra.mxu0 0
      %838 = vmatprep.subr.bf16.mxu0 0
      %839 = vmatpush1.bf16.xpose.msra.mxu0 0
      %840 = vmatprep.mubr.bf16.mxu0 0
      %841 = vmatmul.mubr.bf16.gmra.mrb[0].mxu0 %v797
      %v842 = vpop.f32.mrb[0].mxu0
      %v843 = vadd.f32 0.0, %v842
      %v844 = vpop.f32.mrb[0].mxu0
      %v845 = vpop.f32.mrb[0].mxu0
      %v846 = vadd.f32 0.0, %v845
      %v847 = vpop.f32.mrb[0].mxu0
      %848 = vmatprep.mubr.bf16.mxu0 0
      %849 = vmatmul.mubr.bf16.gmra.mrb[0].mxu0 %v800
      %v850 = vpop.f32.mrb[0].mxu0
      %v851 = vadd.f32 0.0, %v850
      %v852 = vpop.f32.mrb[0].mxu0
      %v853 = vpop.f32.mrb[0].mxu0
      %v854 = vadd.f32 0.0, %v853
      %v855 = vpop.f32.mrb[0].mxu0
      %856 = vdwg.mxu0
      %v857 = vmul.f32 %v843, 0.125
      %v858 = vmul.f32 %v846, 0.125
      %v859 = vmul.f32 %v851, 0.125
      %v860 = vmul.f32 %v854, 0.125
      %v861 = vadd.f32 %v857, %v603
      %v862 = vadd.f32 %v858, %v603
      %v863 = vadd.f32 %v859, %v603
      %v864 = vadd.f32 %v860, %v603
      %v865 = vsel %vm680, %v861, -inf
      %866 = vmax.xlane.f32.xlu0 %v865
      %v867 = vpop.xlane.xlu0 %866
      %v868 = vsel %vm680, %v862, -inf
      %869 = vmax.xlane.f32.xlu0 %v868
      %v870 = vpop.xlane.xlu0 %869
      %v871 = vsel %vm680, %v863, -inf
      %872 = vmax.xlane.f32.xlu0 %v871
      %v873 = vpop.xlane.xlu0 %872
      %v874 = vsel %vm680, %v864, -inf
      %875 = vmax.xlane.f32.xlu0 %v874
      %v876 = vpop.xlane.xlu0 %875
      %v877 = vsub.f32 %v861, %v867
      %v878 = vsub.f32 %v862, %v870
      %v879 = vsub.f32 %v863, %v873
      %v880 = vsub.f32 %v864, %v876
      %v881 = vmul.f32 %v877, 1.442695
      %v882 = vpow.pop %v881
      %v883 = vmul.f32 %v878, 1.442695
      %v884 = vpow.pop %v883
      %v885 = vmul.f32 %v879, 1.442695
      %v886 = vpow.pop %v885
      %v887 = vmul.f32 %v880, 1.442695
      %v888 = vpow.pop %v887
      %v889 = vsel %vm680, %v882, 0.0
      %890 = vadd.xlane.f32.xlu0 %v889
      %v891 = vpop.xlane.xlu0 %890
      %v892 = vsel %vm680, %v884, 0.0
      %893 = vadd.xlane.f32.xlu0 %v892
      %v894 = vpop.xlane.xlu0 %893
      %v895 = vsel %vm680, %v886, 0.0
      %896 = vadd.xlane.f32.xlu0 %v895
      %v897 = vpop.xlane.xlu0 %896
      %v898 = vsel %vm680, %v888, 0.0
      %899 = vadd.xlane.f32.xlu0 %v898
      %v900 = vpop.xlane.xlu0 %899
      %v901 = vrcp.pop %v891
      %v902 = vrcp.pop %v894
      %v903 = vrcp.pop %v897
      %v904 = vrcp.pop %v900
      %v905 = vmul.f32 %v882, %v901
      %v906 = vmul.f32 %v884, %v902
      %v907 = vmul.f32 %v886, %v903
      %v908 = vmul.f32 %v888, %v904
      %v909 = vpack.c.bf16 %v906, %v905
      %v910 = vpack.c.bf16 %v908, %v907
      %913 = vrot.lane.b32.xlu0 %v608, 64
      %v914 = vpop.permute.xlu0 %913
      %915 = vrot.lane.b32.xlu0 %v609, 64
      %v916 = vpop.permute.xlu0 %915
      %v920 = vsel %vm680, %v909, 0
      %v923 = vsel %vm680, %v910, 0
      %925 = vmatprep.subr.bf16.mxu0 0
      %926 = vmatpush1.bf16.msra.mxu0 %v914
      %927 = vmatprep.subr.bf16.mxu0 0
      %928 = vmatpush1.bf16.msra.mxu0 %v916
      %929 = vmatprep.subr.bf16.mxu0 0
      %930 = vmatpush1.bf16.msra.mxu0 0
      %931 = vmatprep.subr.bf16.mxu0 0
      %932 = vmatpush1.bf16.msra.mxu0 0
      %933 = vmatprep.subr.bf16.mxu0 0
      %934 = vmatpush1.bf16.msra.mxu0 0
      %935 = vmatprep.subr.bf16.mxu0 0
      %936 = vmatpush1.bf16.msra.mxu0 0
      %937 = vmatprep.subr.bf16.mxu0 0
      %938 = vmatpush1.bf16.msra.mxu0 0
      %939 = vmatprep.subr.bf16.mxu0 0
      %940 = vmatpush1.bf16.msra.mxu0 0
      %941 = vmatprep.subr.bf16.mxu0 0
      %942 = vmatpush1.bf16.msra.mxu0 0
      %943 = vmatprep.subr.bf16.mxu0 0
      %944 = vmatpush1.bf16.msra.mxu0 0
      %945 = vmatprep.subr.bf16.mxu0 0
      %946 = vmatpush1.bf16.msra.mxu0 0
      %947 = vmatprep.subr.bf16.mxu0 0
      %948 = vmatpush1.bf16.msra.mxu0 0
      %949 = vmatprep.subr.bf16.mxu0 0
      %950 = vmatpush1.bf16.msra.mxu0 0
      %951 = vmatprep.subr.bf16.mxu0 0
      %952 = vmatpush1.bf16.msra.mxu0 0
      %953 = vmatprep.subr.bf16.mxu0 0
      %954 = vmatpush1.bf16.msra.mxu0 0
      %955 = vmatprep.subr.bf16.mxu0 0
      %956 = vmatpush1.bf16.msra.mxu0 0
      %957 = vmatprep.mubr.bf16.mxu0 0
      %958 = vmatmul.mubr.bf16.gmra.mrb[0].mxu0 %v920
      %v959 = vpop.f32.mrb[0].mxu0
      %v960 = vadd.f32 0.0, %v959
      %v961 = vpop.f32.mrb[0].mxu0
      %v962 = vpop.f32.mrb[0].mxu0
      %v963 = vadd.f32 0.0, %v962
      %v964 = vpop.f32.mrb[0].mxu0
      %965 = vmatprep.mubr.bf16.mxu0 0
      %966 = vmatmul.mubr.bf16.gmra.mrb[0].mxu0 %v923
      %v967 = vpop.f32.mrb[0].mxu0
      %v968 = vadd.f32 0.0, %v967
      %v969 = vpop.f32.mrb[0].mxu0
      %v970 = vpop.f32.mrb[0].mxu0
      %v971 = vadd.f32 0.0, %v970
      %v972 = vpop.f32.mrb[0].mxu0
      %973 = vdwg.mxu0
      %v974 = vpack.c.bf16 %v963, %v960
      %v975 = vpack.c.bf16 %v971, %v968
      %v984 = vunpack.c.l.b16 %v591
      %v985 = vunpack.c.l.b16 %v592
      %v986 = vunpack.c.l.b16 %v593
      %v987 = vunpack.c.l.b16 %v594
      %v988 = vunpack.c.l.b16 %v595
      %v989 = vunpack.c.l.b16 %v596
      %v990 = vunpack.c.l.b16 %v597
      %v991 = vunpack.c.l.b16 %v598
      %v992 = vpack.c.b16 %v985, %v984
      %v993 = vpack.c.b16 %v987, %v986
      %v994 = vpack.c.b16 %v989, %v988
      %v995 = vpack.c.b16 %v991, %v990
      %v1001 = vsel %vm610, %v974, 0
      %v1004 = vsel %vm610, %v975, 0
      %1006 = vmatprep.subr.bf16.mxu0 0
      %1007 = vmatpush1.bf16.msra.mxu0 %v992
      %1008 = vmatprep.subr.bf16.mxu0 0
      %1009 = vmatpush1.bf16.msra.mxu0 %v993
      %1010 = vmatprep.subr.bf16.mxu0 0
      %1011 = vmatpush1.bf16.msra.mxu0 %v994
      %1012 = vmatprep.subr.bf16.mxu0 0
      %1013 = vmatpush1.bf16.msra.mxu0 %v995
      %1014 = vmatprep.subr.bf16.mxu0 0
      %1015 = vmatpush1.bf16.msra.mxu0 0
      %1016 = vmatprep.subr.bf16.mxu0 0
      %1017 = vmatpush1.bf16.msra.mxu0 0
      %1018 = vmatprep.subr.bf16.mxu0 0
      %1019 = vmatpush1.bf16.msra.mxu0 0
      %1020 = vmatprep.subr.bf16.mxu0 0
      %1021 = vmatpush1.bf16.msra.mxu0 0
      %1022 = vmatprep.subr.bf16.mxu0 0
      %1023 = vmatpush1.bf16.msra.mxu0 0
      %1024 = vmatprep.subr.bf16.mxu0 0
      %1025 = vmatpush1.bf16.msra.mxu0 0
      %1026 = vmatprep.subr.bf16.mxu0 0
      %1027 = vmatpush1.bf16.msra.mxu0 0
      %1028 = vmatprep.subr.bf16.mxu0 0
      %1029 = vmatpush1.bf16.msra.mxu0 0
      %1030 = vmatprep.subr.bf16.mxu0 0
      %1031 = vmatpush1.bf16.msra.mxu0 0
      %1032 = vmatprep.subr.bf16.mxu0 0
      %1033 = vmatpush1.bf16.msra.mxu0 0
      %1034 = vmatprep.subr.bf16.mxu0 0
      %1035 = vmatpush1.bf16.msra.mxu0 0
      %1036 = vmatprep.subr.bf16.mxu0 0
      %1037 = vmatpush1.bf16.msra.mxu0 0
      %1038 = vmatprep.mubr.bf16.mxu0 0
      %1039 = vmatmul.mubr.bf16.gmra.mrb[0].mxu0 %v1001
      %v1040 = vpop.f32.mrb[0].mxu0
      %v1041 = vadd.f32 0.0, %v1040
      %v1042 = vpop.f32.mrb[0].mxu0
      %v1043 = vpop.f32.mrb[0].mxu0
      %v1044 = vadd.f32 0.0, %v1043
      %v1045 = vpop.f32.mrb[0].mxu0
      %1046 = vmatprep.mubr.bf16.mxu0 0
      %1047 = vmatmul.mubr.bf16.gmra.mrb[0].mxu0 %v1004
      %v1048 = vpop.f32.mrb[0].mxu0
      %v1049 = vadd.f32 0.0, %v1048
      %v1050 = vpop.f32.mrb[0].mxu0
      %v1051 = vpop.f32.mrb[0].mxu0
      %v1052 = vadd.f32 0.0, %v1051
      %v1053 = vpop.f32.mrb[0].mxu0
      %1054 = vdwg.mxu0
      %v1063 = vunpack.c.l.b16 %v583
      %v1064 = vunpack.c.l.b16 %v584
      %v1065 = vunpack.c.l.b16 %v585
      %v1066 = vunpack.c.l.b16 %v586
      %v1067 = vunpack.c.l.b16 %v587
      %v1068 = vunpack.c.l.b16 %v588
      %v1069 = vunpack.c.l.b16 %v589
      %v1070 = vunpack.c.l.b16 %v590
      %v1071 = vpack.c.b16 %v1064, %v1063
      %v1072 = vpack.c.b16 %v1066, %v1065
      %v1073 = vpack.c.b16 %v1068, %v1067
      %v1074 = vpack.c.b16 %v1070, %v1069
      %v1080 = vsel %vm610, %v782, 0
      %v1083 = vsel %vm610, %v783, 0
      %1085 = vmatprep.subr.bf16.mxu0 0
      %1086 = vmatpush1.bf16.msra.mxu0 %v1071
      %1087 = vmatprep.subr.bf16.mxu0 0
      %1088 = vmatpush1.bf16.msra.mxu0 %v1072
      %1089 = vmatprep.subr.bf16.mxu0 0
      %1090 = vmatpush1.bf16.msra.mxu0 %v1073
      %1091 = vmatprep.subr.bf16.mxu0 0
      %1092 = vmatpush1.bf16.msra.mxu0 %v1074
      %1093 = vmatprep.subr.bf16.mxu0 0
      %1094 = vmatpush1.bf16.msra.mxu0 0
      %1095 = vmatprep.subr.bf16.mxu0 0
      %1096 = vmatpush1.bf16.msra.mxu0 0
      %1097 = vmatprep.subr.bf16.mxu0 0
      %1098 = vmatpush1.bf16.msra.mxu0 0
      %1099 = vmatprep.subr.bf16.mxu0 0
      %1100 = vmatpush1.bf16.msra.mxu0 0
      %1101 = vmatprep.subr.bf16.mxu0 0
      %1102 = vmatpush1.bf16.msra.mxu0 0
      %1103 = vmatprep.subr.bf16.mxu0 0
      %1104 = vmatpush1.bf16.msra.mxu0 0
      %1105 = vmatprep.subr.bf16.mxu0 0
      %1106 = vmatpush1.bf16.msra.mxu0 0
      %1107 = vmatprep.subr.bf16.mxu0 0
      %1108 = vmatpush1.bf16.msra.mxu0 0
      %1109 = vmatprep.subr.bf16.mxu0 0
      %1110 = vmatpush1.bf16.msra.mxu0 0
      %1111 = vmatprep.subr.bf16.mxu0 0
      %1112 = vmatpush1.bf16.msra.mxu0 0
      %1113 = vmatprep.subr.bf16.mxu0 0
      %1114 = vmatpush1.bf16.msra.mxu0 0
      %1115 = vmatprep.subr.bf16.mxu0 0
      %1116 = vmatpush1.bf16.msra.mxu0 0
      %1117 = vmatprep.mubr.bf16.mxu0 0
      %1118 = vmatmul.mubr.bf16.gmra.mrb[0].mxu0 %v1080
      %v1119 = vpop.f32.mrb[0].mxu0
      %v1120 = vadd.f32 %v1041, %v1119
      %v1121 = vpop.f32.mrb[0].mxu0
      %v1122 = vpop.f32.mrb[0].mxu0
      %v1123 = vadd.f32 %v1044, %v1122
      %v1124 = vpop.f32.mrb[0].mxu0
      %1125 = vmatprep.mubr.bf16.mxu0 0
      %1126 = vmatmul.mubr.bf16.gmra.mrb[0].mxu0 %v1083
      %v1127 = vpop.f32.mrb[0].mxu0
      %v1128 = vadd.f32 %v1049, %v1127
      %v1129 = vpop.f32.mrb[0].mxu0
      %v1130 = vpop.f32.mrb[0].mxu0
      %v1131 = vadd.f32 %v1052, %v1130
      %v1132 = vpop.f32.mrb[0].mxu0
      %1133 = vdwg.mxu0
      %v1134 = vld [vmem:[%s5] sm:$0x1]
      %v1136 = vlaneseq
      %v1137 = vshrl.u32 %v1136, 7
      %v1138 = vsub.s32 0, %v1137
      %v1139 = vrot.slane %v1134, %v1138
      %v1141 = vadd.f32 %v1120, %v1139
      %v1142 = vadd.f32 %v1123, %v1139
      %v1143 = vadd.f32 %v1128, %v1139
      %v1144 = vadd.f32 %v1131, %v1139
      %v1145 = vunpack.c.l.bf16 %v288
      %v1146 = vunpack.c.l.bf16 %v289
      %v1147 = vunpack.c.l.bf16 %v290
      %v1148 = vunpack.c.l.bf16 %v291
      %v1149 = vadd.f32 %v1141, %v1145
      %v1150 = vadd.f32 %v1142, %v1146
      %v1151 = vadd.f32 %v1143, %v1147
      %v1152 = vadd.f32 %v1144, %v1148
      %v1153 = vld [vmem:[%s6] sm:$0x1]
      %v1154 = vld [vmem:[%s7] sm:$0x1]
      %1155 = vadd.xlane.f32.xlu0 %v1149
      %v1156 = vpop.xlane.xlu0 %1155
      %1157 = vadd.xlane.f32.xlu0 %v1150
      %v1158 = vpop.xlane.xlu0 %1157
      %1159 = vadd.xlane.f32.xlu0 %v1151
      %v1160 = vpop.xlane.xlu0 %1159
      %1161 = vadd.xlane.f32.xlu0 %v1152
      %v1162 = vpop.xlane.xlu0 %1161
      %v1163 = vrcp.pop 128.0
      %v1164 = vmul.f32 %v1156, %v1163
      %v1165 = vmul.f32 %v1158, %v1163
      %v1166 = vmul.f32 %v1160, %v1163
      %v1167 = vmul.f32 %v1162, %v1163
      %v1168 = vsub.f32 %v1149, %v1164
      %v1169 = vsub.f32 %v1150, %v1165
      %v1170 = vsub.f32 %v1151, %v1166
      %v1171 = vsub.f32 %v1152, %v1167
      %v1172 = vmul.f32 %v1168, %v1168
      %v1173 = vmul.f32 %v1169, %v1169
      %v1174 = vmul.f32 %v1170, %v1170
      %v1175 = vmul.f32 %v1171, %v1171
      %1176 = vadd.xlane.f32.xlu0 %v1172
      %v1177 = vpop.xlane.xlu0 %1176
      %1178 = vadd.xlane.f32.xlu0 %v1173
      %v1179 = vpop.xlane.xlu0 %1178
      %1180 = vadd.xlane.f32.xlu0 %v1174
      %v1181 = vpop.xlane.xlu0 %1180
      %1182 = vadd.xlane.f32.xlu0 %v1175
      %v1183 = vpop.xlane.xlu0 %1182
      %v1184 = vmul.f32 %v1177, %v1163
      %v1185 = vmul.f32 %v1179, %v1163
      %v1186 = vmul.f32 %v1181, %v1163
      %v1187 = vmul.f32 %v1183, %v1163
      %v1188 = vadd.f32 %v1184, 1e-05
      %v1189 = vadd.f32 %v1185, 1e-05
      %v1190 = vadd.f32 %v1186, 1e-05
      %v1191 = vadd.f32 %v1187, 1e-05
      %v1192 = vrsqrt.pop %v1188
      %v1193 = vrsqrt.pop %v1189
      %v1194 = vrsqrt.pop %v1190
      %v1195 = vrsqrt.pop %v1191
      %v1196 = vmul.f32 %v1168, %v1192
      %v1197 = vmul.f32 %v1169, %v1193
      %v1198 = vmul.f32 %v1170, %v1194
      %v1199 = vmul.f32 %v1171, %v1195
      %v1201 = vlaneseq
      %v1202 = vshrl.u32 %v1201, 7
      %v1203 = vsub.s32 0, %v1202
      %v1204 = vrot.slane %v1153, %v1203
      %v1206 = vmul.f32 %v1196, %v1204
      %v1207 = vmul.f32 %v1197, %v1204
      %v1208 = vmul.f32 %v1198, %v1204
      %v1209 = vmul.f32 %v1199, %v1204
      %v1211 = vlaneseq
      %v1212 = vshrl.u32 %v1211, 7
      %v1213 = vsub.s32 0, %v1212
      %v1214 = vrot.slane %v1154, %v1213
      %v1216 = vadd.f32 %v1206, %v1214
      %v1217 = vadd.f32 %v1207, %v1214
      %v1218 = vadd.f32 %v1208, %v1214
      %v1219 = vadd.f32 %v1209, %v1214
      %v1220 = vpack.c.bf16 %v1217, %v1216
      %v1221 = vpack.c.bf16 %v1219, %v1218
      %v1224 = vunpack.c.l.b16 %v1220
      %v1225 = vunpack.c.h.b16 %v1220
      %v1226 = vunpack.c.l.b16 %v1221
      %v1227 = vunpack.c.h.b16 %v1221
      %v1228 = vpack.c.b16 %v1224, %v1224
      %v1229 = vpack.c.b16 %v1225, %v1225
      %v1230 = vpack.c.b16 %v1226, %v1226
      %v1231 = vpack.c.b16 %v1227, %v1227
      %1236 = vst [vmem:[%s285] sm:$0xf] %v1228
      %1237 = vst [vmem:[%s285 + $0x4] sm:$0xf] %v1229
      %1238 = vst [vmem:[%s285 + $0x8] sm:$0xf] %v1230
      %1239 = vst [vmem:[%s285 + $0xc] sm:$0xf] %v1231
      %p1240 = scmp.lt.s32.totalorder %s25, 1
      %s1241 = scalar_select %p1240, %s25, 1
      %s1242 = smul.addr %s1241, 4
      %s1243 = smul.addr %s1242, 4
      %s1244 = scalar_lea.vmem %s8, %s1243
      // Predicated region
      $region49: #{transformer_forward.11} parent=47 // pred_check
        %p1245 = pneg %p195
      $region50: #{transformer_forward.11} parent=47 // pred_check_branch
        %1247 = sbr.rel (%p1245) target = $region52
      $region51: #{transformer_forward.11} parent=47 // pred_region
        _
      $region52: #{transformer_forward.11} parent=47 // pred_fallthru
        _
    $region48: #{transformer_forward.11} parent=5 // pred_fallthru
      _
    %p1248 = scmp.le.s32.totalorder 2, %s20
    // Predicated region
    $region53: #{transformer_forward.11} parent=5 // pred_check
      %p1249 = pneg %p1248
    $region54: #{transformer_forward.11} parent=5 // pred_check_branch
      %1251 = sbr.rel (%p1249) target = $region56
    $region55: #{transformer_forward.11} parent=5 // pred_region
      %s1252 = ssub.s32 %s20, 2
      // Predicated region
      $region57: #{transformer_forward.11} parent=55 // pred_check
        %p1253 = pneg %p201
      $region58: #{transformer_forward.11} parent=55 // pred_check_branch
        %1255 = sbr.rel (%p1253) target = $region60
      $region59: #{transformer_forward.11} parent=55 // pred_region
        %p1256 = scmp.lt.s32.totalorder %s26, 1
        %s1257 = scalar_select %p1256, %s26, 1
        %s1258 = smul.addr %s1257, 4
        %s1259 = smul.addr %s1258, 4
        %s1260 = scalar_lea.vmem %s8, %s1259
      $region60: #{transformer_forward.11} parent=55 // pred_fallthru
        _
    $region56: #{transformer_forward.11} parent=5 // pred_fallthru
      _
  $region6: #{transformer_forward.11} parent=0 // loop_footer
    %s24 = sadd.s32 1, %s20
  $region7: #{transformer_forward.11} parent=0 // loop_footer_branch
    %19 = sbr.rel target = $region3
  $region8: #{transformer_forward.11} parent=0 // loop_exit
    _

// kernel: transformer_forward.21
$region0: #{transformer_forward.21}
  #allocation0 [shape = 'u32[]', space=smem, size = 0x4, offset = 0x4, fixed_abs, tag = 'smem constant byte address 0x4 - core index']
  #allocation1 [shape = 'u32[144,128]{1,0:T(1,128)}', space=vmem, size = 0x12000, scoped, tag = 'internal scratch']
  %s0 = inlined_call_operand.vmem [shape: bf16[64,128], index: 0, kind: input, shape index: {}]
  %s1 = inlined_call_operand.vmem [shape: bf16[128,128], index: 1, kind: input, shape index: {}]
  %s2 = inlined_call_operand.vmem [shape: f32[1,128], index: 2, kind: input, shape index: {}]
  %s3 = inlined_call_operand.hbm [shape: f32[64,128], index: 3, kind: output, shape index: {}]
  %s4 = sld [smem:[#allocation0]]
  $region22: #{transformer_forward.21} parent=0
    _
  %s6 = ssub.s32 1, %s4
  %s7 = scalar_select 0, %s6, %s4
  $region1: #{transformer_forward.21} parent=0
    #allocation2 [shape = 'u8[32768]{0}', space=vmem, size = 0x8000, scoped, tag = 'output window, operand 0, single buffered']
    #allocation3 [shape = 's32[1]{0}', space=sflag, size = 0x4, scoped, tag = 'scoped memory for transformer_forward.21']
    %8 = vsyncpa [#allocation3], 0
    // Predicated region
    $region2: #{transformer_forward.21} parent=1 // pred_check
      _
    $region3: #{transformer_forward.21} parent=1 // pred_check_branch
      %10 = sbr.rel (0) target = $region5
    $region4: #{transformer_forward.21} parent=1 // pred_region
      _
    $region5: #{transformer_forward.21} parent=1 // pred_fallthru
      _
    // Predicated region
    $region6: #{transformer_forward.21} parent=1 // pred_check
      _
    $region7: #{transformer_forward.21} parent=1 // pred_check_branch
      %12 = sbr.rel (0) target = $region9
    $region8: #{transformer_forward.21} parent=1 // pred_region
      _
    $region9: #{transformer_forward.21} parent=1 // pred_fallthru
      _
    // Predicated region
    $region10: #{transformer_forward.21} parent=1 // pred_check
      _
    $region11: #{transformer_forward.21} parent=1 // pred_check_branch
      %14 = sbr.rel (0) target = $region13
    $region12: #{transformer_forward.21} parent=1 // pred_region
      _
    $region13: #{transformer_forward.21} parent=1 // pred_fallthru
      _
    %v16 = vld [vmem:[%s0] sm:$0xf]
    %v17 = vld [vmem:[%s0 + $0x4] sm:$0xf]
    %v18 = vld [vmem:[%s0 + $0x8] sm:$0xf]
    %v19 = vld [vmem:[%s0 + $0xc] sm:$0xf]
    %v20 = vld [vmem:[%s0 + $0x10] sm:$0xf]
    %v21 = vld [vmem:[%s0 + $0x14] sm:$0xf]
    %v22 = vld [vmem:[%s0 + $0x18] sm:$0xf]
    %v23 = vld [vmem:[%s0 + $0x1c] sm:$0xf]
    %v24 = vld [vmem:[%s1] sm:$0xf]
    %v25 = vld [vmem:[%s1 + $0x4] sm:$0xf]
    %v26 = vld [vmem:[%s1 + $0x8] sm:$0xf]
    %v27 = vld [vmem:[%s1 + $0xc] sm:$0xf]
    %v28 = vld [vmem:[%s1 + $0x10] sm:$0xf]
    %v29 = vld [vmem:[%s1 + $0x14] sm:$0xf]
    %v30 = vld [vmem:[%s1 + $0x18] sm:$0xf]
    %v31 = vld [vmem:[%s1 + $0x1c] sm:$0xf]
    %v32 = vld [vmem:[%s1 + $0x20] sm:$0xf]
    %v33 = vld [vmem:[%s1 + $0x24] sm:$0xf]
    %v34 = vld [vmem:[%s1 + $0x28] sm:$0xf]
    %v35 = vld [vmem:[%s1 + $0x2c] sm:$0xf]
    %v36 = vld [vmem:[%s1 + $0x30] sm:$0xf]
    %v37 = vld [vmem:[%s1 + $0x34] sm:$0xf]
    %v38 = vld [vmem:[%s1 + $0x38] sm:$0xf]
    %v39 = vld [vmem:[%s1 + $0x3c] sm:$0xf]
    %v40 = vld [vmem:[%s2] sm:$0x1]
    %v42 = vlaneseq
    %v43 = vshrl.u32 %v42, 7
    %v44 = vsub.s32 0, %v43
    %v45 = vrot.slane %v40, %v44
    %v55 = vunpack.c.l.b16 %v16
    %v56 = vunpack.c.l.b16 %v17
    %v57 = vunpack.c.l.b16 %v18
    %v58 = vunpack.c.l.b16 %v19
    %v59 = vunpack.c.l.b16 %v20
    %v60 = vunpack.c.l.b16 %v21
    %v61 = vunpack.c.l.b16 %v22
    %v62 = vunpack.c.l.b16 %v23
    %v63 = vpack.c.b16 %v56, %v55
    %v64 = vpack.c.b16 %v58, %v57
    %v65 = vpack.c.b16 %v60, %v59
    %v66 = vpack.c.b16 %v62, %v61
    %v87 = vunpack.c.l.b16 %v24
    %v88 = vunpack.c.l.b16 %v25
    %v89 = vunpack.c.l.b16 %v26
    %v90 = vunpack.c.l.b16 %v27
    %v91 = vunpack.c.l.b16 %v28
    %v92 = vunpack.c.l.b16 %v29
    %v93 = vunpack.c.l.b16 %v30
    %v94 = vunpack.c.l.b16 %v31
    %v95 = vunpack.c.l.b16 %v32
    %v96 = vunpack.c.l.b16 %v33
    %v97 = vunpack.c.l.b16 %v34
    %v98 = vunpack.c.l.b16 %v35
    %v99 = vunpack.c.l.b16 %v36
    %v100 = vunpack.c.l.b16 %v37
    %v101 = vunpack.c.l.b16 %v38
    %v102 = vunpack.c.l.b16 %v39
    %v103 = vpack.c.b16 %v88, %v87
    %v104 = vpack.c.b16 %v90, %v89
    %v105 = vpack.c.b16 %v92, %v91
    %v106 = vpack.c.b16 %v94, %v93
    %v107 = vpack.c.b16 %v96, %v95
    %v108 = vpack.c.b16 %v98, %v97
    %v109 = vpack.c.b16 %v100, %v99
    %v110 = vpack.c.b16 %v102, %v101
    %119 = vmatprep.subr.bf16.mxu0 0
    %120 = vmatpush1.bf16.msra.mxu0 %v103
    %121 = vmatprep.subr.bf16.mxu0 0
    %122 = vmatpush1.bf16.msra.mxu0 %v104
    %123 = vmatprep.subr.bf16.mxu0 0
    %124 = vmatpush1.bf16.msra.mxu0 %v105
    %125 = vmatprep.subr.bf16.mxu0 0
    %126 = vmatpush1.bf16.msra.mxu0 %v106
    %127 = vmatprep.subr.bf16.mxu0 0
    %128 = vmatpush1.bf16.msra.mxu0 %v107
    %129 = vmatprep.subr.bf16.mxu0 0
    %130 = vmatpush1.bf16.msra.mxu0 %v108
    %131 = vmatprep.subr.bf16.mxu0 0
    %132 = vmatpush1.bf16.msra.mxu0 %v109
    %133 = vmatprep.subr.bf16.mxu0 0
    %134 = vmatpush1.bf16.msra.mxu0 %v110
    %135 = vmatprep.subr.bf16.mxu0 0
    %136 = vmatpush1.bf16.msra.mxu0 0
    %137 = vmatprep.subr.bf16.mxu0 0
    %138 = vmatpush1.bf16.msra.mxu0 0
    %139 = vmatprep.subr.bf16.mxu0 0
    %140 = vmatpush1.bf16.msra.mxu0 0
    %141 = vmatprep.subr.bf16.mxu0 0
    %142 = vmatpush1.bf16.msra.mxu0 0
    %143 = vmatprep.subr.bf16.mxu0 0
    %144 = vmatpush1.bf16.msra.mxu0 0
    %145 = vmatprep.subr.bf16.mxu0 0
    %146 = vmatpush1.bf16.msra.mxu0 0
    %147 = vmatprep.subr.bf16.mxu0 0
    %148 = vmatpush1.bf16.msra.mxu0 0
    %149 = vmatprep.subr.bf16.mxu0 0
    %150 = vmatpush1.bf16.msra.mxu0 0
    %151 = vmatprep.mubr.bf16.mxu0 0
    %152 = vmatmul.mubr.bf16.gmra.mrb[0].mxu0 %v63
    %v153 = vpop.f32.mrb[0].mxu0
    %v154 = vadd.f32 %v45, %v153
    %v155 = vpop.f32.mrb[0].mxu0
    %v156 = vpop.f32.mrb[0].mxu0
    %v157 = vadd.f32 %v45, %v156
    %v158 = vpop.f32.mrb[0].mxu0
    %159 = vmatprep.mubr.bf16.mxu0 0
    %160 = vmatmul.mubr.bf16.gmra.mrb[0].mxu0 %v64
    %v161 = vpop.f32.mrb[0].mxu0
    %v162 = vadd.f32 %v45, %v161
    %v163 = vpop.f32.mrb[0].mxu0
    %v164 = vpop.f32.mrb[0].mxu0
    %v165 = vadd.f32 %v45, %v164
    %v166 = vpop.f32.mrb[0].mxu0
    %167 = vmatprep.mubr.bf16.mxu0 0
    %168 = vmatmul.mubr.bf16.gmra.mrb[0].mxu0 %v65
    %v169 = vpop.f32.mrb[0].mxu0
    %v170 = vadd.f32 %v45, %v169
    %v171 = vpop.f32.mrb[0].mxu0
    %v172 = vpop.f32.mrb[0].mxu0
    %v173 = vadd.f32 %v45, %v172
    %v174 = vpop.f32.mrb[0].mxu0
    %175 = vmatprep.mubr.bf16.mxu0 0
    %176 = vmatmul.mubr.bf16.gmra.mrb[0].mxu0 %v66
    %v177 = vpop.f32.mrb[0].mxu0
    %v178 = vadd.f32 %v45, %v177
    %v179 = vpop.f32.mrb[0].mxu0
    %v180 = vpop.f32.mrb[0].mxu0
    %v181 = vadd.f32 %v45, %v180
    %v182 = vpop.f32.mrb[0].mxu0
    %183 = vdwg.mxu0
    %184 = vst [vmem:[#allocation2] sm:$0xff] %v154
    %185 = vst [vmem:[#allocation2 + $0x8] sm:$0xff] %v157
    %186 = vst [vmem:[#allocation2 + $0x10] sm:$0xff] %v162
    %187 = vst [vmem:[#allocation2 + $0x18] sm:$0xff] %v165
    %188 = vst [vmem:[#allocation2 + $0x20] sm:$0xff] %v170
    %189 = vst [vmem:[#allocation2 + $0x28] sm:$0xff] %v173
    %190 = vst [vmem:[#allocation2 + $0x30] sm:$0xff] %v178
    %191 = vst [vmem:[#allocation2 + $0x38] sm:$0xff] %v181
    // Predicated region
    $region14: #{transformer_forward.21} parent=1 // pred_check
      _
    $region15: #{transformer_forward.21} parent=1 // pred_check_branch
      %193 = sbr.rel (0) target = $region17
    $region16: #{transformer_forward.21} parent=1 // pred_region
      %s195 = ssub.s32 1024, 1024
      %196 = vsyncadd [#allocation3], %s195
      %s197 = sshll.u32 [#allocation2], 4
      %s198 = int_to_ptr.vmem [resolvable:$true] %s197
      %203 = dma.vmem_to_hbm [thread:$0]  %s198, 1024, %s3, [#allocation3], 128, 128, 8
    $region17: #{transformer_forward.21} parent=1 // pred_fallthru
      _
    // Predicated region
    $region18: #{transformer_forward.21} parent=1 // pred_check
      _
    $region19: #{transformer_forward.21} parent=1 // pred_check_branch
      %205 = sbr.rel (0) target = $region21
    $region20: #{transformer_forward.21} parent=1 // pred_region
      %206 = dma.done [#allocation3], 1024
    $region21: #{transformer_forward.21} parent=1 // pred_fallthru
      _
    %207 = vsyncpa [#allocation3], 1

</llo_original>
